<compile_context>
chip_gen: v5e
topology: v5e:2x2
jax: 0.10.0
libtpu: 0.0.40
codegen_flags: <defaults>
</compile_context>

<pallas_src>
import jax
import jax.numpy as jnp
from jax.experimental import pallas as pl
from jax.experimental.pallas import tpu as pltpu

F_IN, F_HID, F_OUT = 30, 40, 2
F_IN_PAD = 32                    # X stored [N, 32] (full last dim -> legal block)
F_PAD = 128                      # lane-dense padded hidden/output width
NODES_PER_GRAPH = 8
GRAPHS_PER_TILE = 16             # 16 graphs * 8 nodes = 128-node tile (MXU native)
TILE_NODES = GRAPHS_PER_TILE * NODES_PER_GRAPH      # 128
TILES_PER_STEP = 4               # tiles batched per grid step


def gcn_kernel(a_ref, x_ref, w_ref, b_ref, out_ref, hw_ref, h_ref):
    f32, bf16 = jnp.float32, jnp.bfloat16
    tiles = a_ref.shape[0]                       # static (block shape)

    # Packed parameter views (static slices of the resident VMEM refs).
    w1 = w_ref[0:F_IN_PAD, :]                    # [32, 128] (rows 30..31 are zero)
    w2 = w_ref[1 * F_PAD:2 * F_PAD, :]
    w3 = w_ref[2 * F_PAD:3 * F_PAD, :]
    wl = w_ref[3 * F_PAD:4 * F_PAD, :]
    b1 = b_ref[0:1, :]
    b2 = b_ref[1:2, :]
    b3 = b_ref[2:3, :]
    bl = b_ref[3:4, :]

    def aggregate_relu(bias):
        # h[t] = relu(A[t] @ (H W)[t] + bias), per 128-node block-diagonal tile.
        # `tiles` is a small compile-time constant -> fully unrolled; per-tile
        # stores into h_ref keep live ranges bounded.
        for t in range(tiles):
            r0 = t * TILE_NODES
            agg = jnp.dot(a_ref[t], hw_ref[r0:r0 + TILE_NODES, :],
                          preferred_element_type=f32)
            h_ref[r0:r0 + TILE_NODES, :] = jnp.maximum(agg + bias, 0.0).astype(bf16)

    # conv1: big stacked (X @ W1) with K=32, then per-tile A aggregation.
    # (dropout after conv1 is eval-mode identity)
    hw_ref[...] = jnp.dot(x_ref[...], w1, preferred_element_type=f32).astype(bf16)
    aggregate_relu(b1)

    # conv2: stacked H @ W2, then per-tile A aggregation.
    hw_ref[...] = jnp.dot(h_ref[...], w2, preferred_element_type=f32).astype(bf16)
    aggregate_relu(b2)

    # conv3: stacked H @ W3, then per-tile A aggregation.
    hw_ref[...] = jnp.dot(h_ref[...], w3, preferred_element_type=f32).astype(bf16)
    aggregate_relu(b3)

    # Head: global_mean_pool via reshape + sublane sum (8 nodes/graph fixed),
    # then the cheap [G,128]x[128,128] Linear.  No P matmul / P DMA.
    h3 = h_ref[...].astype(f32).reshape(
        tiles * GRAPHS_PER_TILE, NODES_PER_GRAPH, F_PAD)
    pooled = (jnp.sum(h3, axis=1) * (1.0 / NODES_PER_GRAPH)).astype(bf16)
    y = jnp.dot(pooled, wl, preferred_element_type=f32) + bl
    out_ref[...] = y.astype(out_ref.dtype)


def gcn_forward(a_blocks, x32, w_packed, b_packed, num_graphs,
                tiles_per_step=TILES_PER_STEP):
    num_tiles = a_blocks.shape[0]
    assert num_tiles % tiles_per_step == 0
    num_steps = num_tiles // tiles_per_step
    nt = tiles_per_step * TILE_NODES             # nodes per grid step
    gpt_step = tiles_per_step * GRAPHS_PER_TILE  # graphs per grid step

    out = pl.pallas_call(
        gcn_kernel,
        out_shape=jax.ShapeDtypeStruct((num_steps * gpt_step, F_PAD), jnp.bfloat16),
        grid=(num_steps,),
        in_specs=[
            pl.BlockSpec((tiles_per_step, TILE_NODES, TILE_NODES),
                         lambda s: (s, 0, 0)),                 # A tiles (T per step)
            pl.BlockSpec((nt, F_IN_PAD), lambda s: (s, 0)),    # X rows, K=32 unpadded
            pl.BlockSpec((4 * F_PAD, F_PAD), lambda s: (0, 0)),  # packed weights (resident)
            pl.BlockSpec((8, F_PAD), lambda s: (0, 0)),          # packed biases (resident)
        ],
        out_specs=pl.BlockSpec((gpt_step, F_PAD), lambda s: (s, 0)),
        scratch_shapes=[
            pltpu.VMEM((nt, F_PAD), jnp.bfloat16),   # H @ W slab
            pltpu.VMEM((nt, F_PAD), jnp.bfloat16),   # aggregated activations
        ],
        compiler_params=pltpu.CompilerParams(
            dimension_semantics=("parallel",),       # shard steps across TCs (v7x)
        ),
    )(a_blocks, x32, w_packed, b_packed)
    return out[:num_graphs, :F_OUT].astype(jnp.float32)


# -------------------- plain-JAX setup helpers --------------------

def build_normalized_adjacency(edge_index, num_nodes):
    """Dense A_hat = D^-1/2 (A + I) D^-1/2 (GCNConv default normalization)."""
    src, dst = edge_index
    a = jnp.zeros((num_nodes, num_nodes), jnp.float32)
    a = a.at[dst, src].add(1.0)                       # sum duplicate edges like PyG
    a = a + jnp.eye(num_nodes, dtype=jnp.float32)     # self loops
    deg = jnp.sum(a, axis=1)
    dinv = jnp.where(deg > 0, 1.0 / jnp.sqrt(deg), 0.0)
    return dinv[:, None] * a * dinv[None, :]


def build_pool_matrix(batch, num_graphs):
    """P[g, n] = 1/count(g) if batch[n] == g else 0 (reference only)."""
    onehot = (batch[None, :] == jnp.arange(num_graphs)[:, None]).astype(jnp.float32)
    counts = jnp.sum(onehot, axis=1, keepdims=True)
    return onehot / jnp.maximum(counts, 1.0)


def pad_to(x, rows, cols):
    r, c = x.shape
    return jnp.pad(x, ((0, rows - r), (0, cols - c)))


def pack_params(params):
    w1, b1, w2, b2, w3, b3, wl, bl = params
    w_packed = jnp.concatenate([
        pad_to(w1, F_PAD, F_PAD),
        pad_to(w2, F_PAD, F_PAD),
        pad_to(w3, F_PAD, F_PAD),
        pad_to(wl, F_PAD, F_PAD),
    ], axis=0).astype(jnp.bfloat16)                   # [4*F_PAD, F_PAD]
    b_packed = jnp.concatenate([
        pad_to(b1, 1, F_PAD), pad_to(b2, 1, F_PAD),
        pad_to(b3, 1, F_PAD), pad_to(bl, 1, F_PAD),
        jnp.zeros((4, F_PAD), jnp.float32),           # pad to 8 sublanes
    ], axis=0)                                        # [8, F_PAD] f32
    return w_packed, b_packed


def extract_diag_blocks(mat, rows_per_block, cols_per_block):
    """[T*r, T*c] -> diagonal blocks [T, r, c]."""
    nr, nc = mat.shape
    t = nr // rows_per_block
    assert nc // cols_per_block == t
    blocks = mat.reshape(t, rows_per_block, t, cols_per_block)
    idx = jnp.arange(t)
    return blocks[idx, :, idx, :]


def init_params(key):
    ks = jax.random.split(key, 8)
    # GCNConv / Linear weights stored as [in, out] (pre-transposed).
    w1 = jax.random.normal(ks[0], (F_IN, F_HID), jnp.float32) * 0.1
    b1 = jax.random.normal(ks[1], (1, F_HID), jnp.float32) * 0.01
    w2 = jax.random.normal(ks[2], (F_HID, F_HID), jnp.float32) * 0.1
    b2 = jax.random.normal(ks[3], (1, F_HID), jnp.float32) * 0.01
    w3 = jax.random.normal(ks[4], (F_HID, F_HID), jnp.float32) * 0.1
    b3 = jax.random.normal(ks[5], (1, F_HID), jnp.float32) * 0.01
    wl = jax.random.normal(ks[6], (F_HID, F_OUT), jnp.float32) * 0.1
    bl = jax.random.normal(ks[7], (1, F_OUT), jnp.float32) * 0.01
    return (w1, b1, w2, b2, w3, b3, wl, bl)


def reference_forward(a_hat, x, params, pool_mat):
    w1, b1, w2, b2, w3, b3, wl, bl = params
    h = jnp.maximum(a_hat @ (x @ w1) + b1, 0.0)
    h = jnp.maximum(a_hat @ (h @ w2) + b2, 0.0)
    h = jnp.maximum(a_hat @ (h @ w3) + b3, 0.0)
    return (pool_mat @ h) @ wl + bl


if __name__ == "__main__":
    key = jax.random.PRNGKey(0)
    k_x, k_p = jax.random.split(key)

    # 128 ring graphs of 8 nodes each -> N = 1024 nodes = 8 tiles of 128 nodes,
    # batched as 2 grid steps of 4 tiles (even grid length for v7x's 2 TCs).
    num_steps = 2
    num_tiles = num_steps * TILES_PER_STEP
    num_graphs = num_tiles * GRAPHS_PER_TILE
    num_nodes = num_graphs * NODES_PER_GRAPH

    edges = []
    for g in range(num_graphs):
        base = g * NODES_PER_GRAPH
        for i in range(NODES_PER_GRAPH):
            a, b = base + i, base + (i + 1) % NODES_PER_GRAPH
            edges.append((a, b))
            edges.append((b, a))
    edge_index = jnp.array(edges, dtype=jnp.int32).T
    batch = jnp.repeat(jnp.arange(num_graphs, dtype=jnp.int32), NODES_PER_GRAPH)

    x = jax.random.normal(k_x, (num_nodes, F_IN), jnp.float32)
    params = init_params(k_p)

    a_hat = build_normalized_adjacency(edge_index, num_nodes)
    pool_mat = build_pool_matrix(batch, num_graphs)

    # A_hat is block-diagonal w.r.t. the 128-node tile boundaries, so the
    # diagonal blocks carry all the structure (sanity-checked below).
    a_blocks_f32 = extract_diag_blocks(a_hat, TILE_NODES, TILE_NODES)
    assert bool(jnp.allclose(jnp.abs(a_hat).sum(), jnp.abs(a_blocks_f32).sum()))

    a_blocks = a_blocks_f32.astype(jnp.bfloat16)
    x32 = pad_to(x, num_nodes, F_IN_PAD).astype(jnp.bfloat16)
    w_packed, b_packed = pack_params(params)

    out = gcn_forward(a_blocks, x32, w_packed, b_packed, num_graphs)
    out = jax.block_until_ready(out)

    ref = reference_forward(a_hat, x, params, pool_mat)
    assert out.shape == (num_graphs, F_OUT)
    assert bool(jnp.all(jnp.isfinite(out)))
    assert bool(jnp.allclose(out, ref, rtol=5e-2, atol=5e-2)), \
        float(jnp.max(jnp.abs(out - ref)))
    print("KERNEL_OK")
</pallas_src>

<mosaic_0001>
module attributes {stable_mosaic.version = 11 : i64} {
  func.func @gcn_kernel(%arg0: i32, %arg1: memref<4x128x128xbf16, #tpu.memory_space<vmem>>, %arg2: memref<512x32xbf16, #tpu.memory_space<vmem>>, %arg3: memref<512x128xbf16, #tpu.memory_space<vmem>>, %arg4: memref<8x128xf32, #tpu.memory_space<vmem>>, %arg5: memref<64x128xbf16, #tpu.memory_space<vmem>>, %arg6: memref<512x128xbf16, #tpu.memory_space<vmem>>, %arg7: memref<512x128xbf16, #tpu.memory_space<vmem>>) attributes {dimension_semantics = [#tpu.dimension_semantics<parallel>], iteration_bounds = array<i64: 2>, scalar_prefetch = 0 : i64, scratch_operands = 2 : i64, tpu.core_type = #tpu.core_type<tc>, window_params = [{transform_indices = @transform_0, window_bounds = array<i64: 4, 128, 128>}, {transform_indices = @transform_1, window_bounds = array<i64: 512, 32>}, {pipeline_mode = #tpu.pipeline_mode<synchronous>, transform_indices = @transform_2, window_bounds = array<i64: 512, 128>}, {pipeline_mode = #tpu.pipeline_mode<synchronous>, transform_indices = @transform_3, window_bounds = array<i64: 8, 128>}, {transform_indices = @transform_4, window_bounds = array<i64: 64, 128>}]} {
    %c0 = arith.constant 0 : index
    %c0_0 = arith.constant 0 : index
    %0 = vector.load %arg3[%c0, %c0_0] : memref<512x128xbf16, #tpu.memory_space<vmem>>, vector<32x128xbf16>
    %c128 = arith.constant 128 : index
    %c0_1 = arith.constant 0 : index
    %1 = vector.load %arg3[%c128, %c0_1] : memref<512x128xbf16, #tpu.memory_space<vmem>>, vector<128x128xbf16>
    %c256 = arith.constant 256 : index
    %c0_2 = arith.constant 0 : index
    %2 = vector.load %arg3[%c256, %c0_2] : memref<512x128xbf16, #tpu.memory_space<vmem>>, vector<128x128xbf16>
    %c384 = arith.constant 384 : index
    %c0_3 = arith.constant 0 : index
    %3 = vector.load %arg3[%c384, %c0_3] : memref<512x128xbf16, #tpu.memory_space<vmem>>, vector<128x128xbf16>
    %c0_4 = arith.constant 0 : index
    %c0_5 = arith.constant 0 : index
    %4 = vector.load %arg4[%c0_4, %c0_5] : memref<8x128xf32, #tpu.memory_space<vmem>>, vector<1x128xf32>
    %c1 = arith.constant 1 : index
    %c0_6 = arith.constant 0 : index
    %5 = vector.load %arg4[%c1, %c0_6] : memref<8x128xf32, #tpu.memory_space<vmem>>, vector<1x128xf32>
    %c2 = arith.constant 2 : index
    %c0_7 = arith.constant 0 : index
    %6 = vector.load %arg4[%c2, %c0_7] : memref<8x128xf32, #tpu.memory_space<vmem>>, vector<1x128xf32>
    %c3 = arith.constant 3 : index
    %c0_8 = arith.constant 0 : index
    %7 = vector.load %arg4[%c3, %c0_8] : memref<8x128xf32, #tpu.memory_space<vmem>>, vector<1x128xf32>
    %c0_9 = arith.constant 0 : index
    %c0_10 = arith.constant 0 : index
    %8 = vector.load %arg2[%c0_9, %c0_10] : memref<512x32xbf16, #tpu.memory_space<vmem>>, vector<512x32xbf16>
    %cst = arith.constant dense<0.000000e+00> : vector<512x128xf32>
    %9 = tpu.matmul %8, %0, %cst {dimension_numbers = #tpu.dot_dimension_numbers<[1], [0], [0], [1], [0, 0, 1, 1], [], []>} : vector<512x32xbf16>, vector<32x128xbf16>, vector<512x128xf32> -> vector<512x128xf32>
    %10 = arith.truncf %9 : vector<512x128xf32> to vector<512x128xbf16>
    %c0_11 = arith.constant 0 : index
    %c0_12 = arith.constant 0 : index
    %11 = vector.load %arg6[%c0_11, %c0_12] : memref<512x128xbf16, #tpu.memory_space<vmem>>, vector<512x128xbf16>
    tpu.vector_store %arg6[%c0_11, %c0_12], %10 {strides = array<i32>} : memref<512x128xbf16, #tpu.memory_space<vmem>>, vector<512x128xbf16>,
    %c0_13 = arith.constant 0 : index
    %c0_14 = arith.constant 0 : index
    %c0_15 = arith.constant 0 : index
    %12 = vector.load %arg1[%c0_13, %c0_14, %c0_15] : memref<4x128x128xbf16, #tpu.memory_space<vmem>>, vector<1x128x128xbf16>
    %13 = vector.shape_cast %12 : vector<1x128x128xbf16> to vector<128x128xbf16>
    %c0_16 = arith.constant 0 : index
    %c0_17 = arith.constant 0 : index
    %14 = vector.load %arg6[%c0_16, %c0_17] : memref<512x128xbf16, #tpu.memory_space<vmem>>, vector<128x128xbf16>
    %cst_18 = arith.constant dense<0.000000e+00> : vector<128x128xf32>
    %15 = tpu.matmul %13, %14, %cst_18 {dimension_numbers = #tpu.dot_dimension_numbers<[1], [0], [0], [1], [0, 0, 1, 1], [], []>} : vector<128x128xbf16>, vector<128x128xbf16>, vector<128x128xf32> -> vector<128x128xf32>
    %16 = vector.broadcast %4 : vector<1x128xf32> to vector<128x128xf32>
    %17 = arith.addf %15, %16 : vector<128x128xf32>
    %cst_19 = arith.constant 0.000000e+00 : f32
    %18 = vector.broadcast %cst_19 : f32 to vector<128x128xf32>
    %19 = arith.maximumf %17, %18 : vector<128x128xf32>
    %20 = arith.truncf %19 : vector<128x128xf32> to vector<128x128xbf16>
    %c0_20 = arith.constant 0 : index
    %c0_21 = arith.constant 0 : index
    %21 = vector.load %arg7[%c0_20, %c0_21] : memref<512x128xbf16, #tpu.memory_space<vmem>>, vector<128x128xbf16>
    tpu.vector_store %arg7[%c0_20, %c0_21], %20 {strides = array<i32>} : memref<512x128xbf16, #tpu.memory_space<vmem>>, vector<128x128xbf16>,
    %c1_22 = arith.constant 1 : index
    %c0_23 = arith.constant 0 : index
    %c0_24 = arith.constant 0 : index
    %22 = vector.load %arg1[%c1_22, %c0_23, %c0_24] : memref<4x128x128xbf16, #tpu.memory_space<vmem>>, vector<1x128x128xbf16>
    %23 = vector.shape_cast %22 : vector<1x128x128xbf16> to vector<128x128xbf16>
    %c128_25 = arith.constant 128 : index
    %c0_26 = arith.constant 0 : index
    %24 = vector.load %arg6[%c128_25, %c0_26] : memref<512x128xbf16, #tpu.memory_space<vmem>>, vector<128x128xbf16>
    %cst_27 = arith.constant dense<0.000000e+00> : vector<128x128xf32>
    %25 = tpu.matmul %23, %24, %cst_27 {dimension_numbers = #tpu.dot_dimension_numbers<[1], [0], [0], [1], [0, 0, 1, 1], [], []>} : vector<128x128xbf16>, vector<128x128xbf16>, vector<128x128xf32> -> vector<128x128xf32>
    %26 = vector.broadcast %4 : vector<1x128xf32> to vector<128x128xf32>
    %27 = arith.addf %25, %26 : vector<128x128xf32>
    %cst_28 = arith.constant 0.000000e+00 : f32
    %28 = vector.broadcast %cst_28 : f32 to vector<128x128xf32>
    %29 = arith.maximumf %27, %28 : vector<128x128xf32>
    %30 = arith.truncf %29 : vector<128x128xf32> to vector<128x128xbf16>
    %c128_29 = arith.constant 128 : index
    %c0_30 = arith.constant 0 : index
    %31 = vector.load %arg7[%c128_29, %c0_30] : memref<512x128xbf16, #tpu.memory_space<vmem>>, vector<128x128xbf16>
    tpu.vector_store %arg7[%c128_29, %c0_30], %30 {strides = array<i32>} : memref<512x128xbf16, #tpu.memory_space<vmem>>, vector<128x128xbf16>,
    %c2_31 = arith.constant 2 : index
    %c0_32 = arith.constant 0 : index
    %c0_33 = arith.constant 0 : index
    %32 = vector.load %arg1[%c2_31, %c0_32, %c0_33] : memref<4x128x128xbf16, #tpu.memory_space<vmem>>, vector<1x128x128xbf16>
    %33 = vector.shape_cast %32 : vector<1x128x128xbf16> to vector<128x128xbf16>
    %c256_34 = arith.constant 256 : index
    %c0_35 = arith.constant 0 : index
    %34 = vector.load %arg6[%c256_34, %c0_35] : memref<512x128xbf16, #tpu.memory_space<vmem>>, vector<128x128xbf16>
    %cst_36 = arith.constant dense<0.000000e+00> : vector<128x128xf32>
    %35 = tpu.matmul %33, %34, %cst_36 {dimension_numbers = #tpu.dot_dimension_numbers<[1], [0], [0], [1], [0, 0, 1, 1], [], []>} : vector<128x128xbf16>, vector<128x128xbf16>, vector<128x128xf32> -> vector<128x128xf32>
    %36 = vector.broadcast %4 : vector<1x128xf32> to vector<128x128xf32>
    %37 = arith.addf %35, %36 : vector<128x128xf32>
    %cst_37 = arith.constant 0.000000e+00 : f32
    %38 = vector.broadcast %cst_37 : f32 to vector<128x128xf32>
    %39 = arith.maximumf %37, %38 : vector<128x128xf32>
    %40 = arith.truncf %39 : vector<128x128xf32> to vector<128x128xbf16>
    %c256_38 = arith.constant 256 : index
    %c0_39 = arith.constant 0 : index
    %41 = vector.load %arg7[%c256_38, %c0_39] : memref<512x128xbf16, #tpu.memory_space<vmem>>, vector<128x128xbf16>
    tpu.vector_store %arg7[%c256_38, %c0_39], %40 {strides = array<i32>} : memref<512x128xbf16, #tpu.memory_space<vmem>>, vector<128x128xbf16>,
    %c3_40 = arith.constant 3 : index
    %c0_41 = arith.constant 0 : index
    %c0_42 = arith.constant 0 : index
    %42 = vector.load %arg1[%c3_40, %c0_41, %c0_42] : memref<4x128x128xbf16, #tpu.memory_space<vmem>>, vector<1x128x128xbf16>
    %43 = vector.shape_cast %42 : vector<1x128x128xbf16> to vector<128x128xbf16>
    %c384_43 = arith.constant 384 : index
    %c0_44 = arith.constant 0 : index
    %44 = vector.load %arg6[%c384_43, %c0_44] : memref<512x128xbf16, #tpu.memory_space<vmem>>, vector<128x128xbf16>
    %cst_45 = arith.constant dense<0.000000e+00> : vector<128x128xf32>
    %45 = tpu.matmul %43, %44, %cst_45 {dimension_numbers = #tpu.dot_dimension_numbers<[1], [0], [0], [1], [0, 0, 1, 1], [], []>} : vector<128x128xbf16>, vector<128x128xbf16>, vector<128x128xf32> -> vector<128x128xf32>
    %46 = vector.broadcast %4 : vector<1x128xf32> to vector<128x128xf32>
    %47 = arith.addf %45, %46 : vector<128x128xf32>
    %cst_46 = arith.constant 0.000000e+00 : f32
    %48 = vector.broadcast %cst_46 : f32 to vector<128x128xf32>
    %49 = arith.maximumf %47, %48 : vector<128x128xf32>
    %50 = arith.truncf %49 : vector<128x128xf32> to vector<128x128xbf16>
    %c384_47 = arith.constant 384 : index
    %c0_48 = arith.constant 0 : index
    %51 = vector.load %arg7[%c384_47, %c0_48] : memref<512x128xbf16, #tpu.memory_space<vmem>>, vector<128x128xbf16>
    tpu.vector_store %arg7[%c384_47, %c0_48], %50 {strides = array<i32>} : memref<512x128xbf16, #tpu.memory_space<vmem>>, vector<128x128xbf16>,
    %c0_49 = arith.constant 0 : index
    %c0_50 = arith.constant 0 : index
    %52 = vector.load %arg7[%c0_49, %c0_50] : memref<512x128xbf16, #tpu.memory_space<vmem>>, vector<512x128xbf16>
    %cst_51 = arith.constant dense<0.000000e+00> : vector<512x128xf32>
    %53 = tpu.matmul %52, %1, %cst_51 {dimension_numbers = #tpu.dot_dimension_numbers<[1], [0], [0], [1], [0, 0, 1, 1], [], []>} : vector<512x128xbf16>, vector<128x128xbf16>, vector<512x128xf32> -> vector<512x128xf32>
    %54 = arith.truncf %53 : vector<512x128xf32> to vector<512x128xbf16>
    %c0_52 = arith.constant 0 : index
    %c0_53 = arith.constant 0 : index
    %55 = vector.load %arg6[%c0_52, %c0_53] : memref<512x128xbf16, #tpu.memory_space<vmem>>, vector<512x128xbf16>
    tpu.vector_store %arg6[%c0_52, %c0_53], %54 {strides = array<i32>} : memref<512x128xbf16, #tpu.memory_space<vmem>>, vector<512x128xbf16>,
    %c0_54 = arith.constant 0 : index
    %c0_55 = arith.constant 0 : index
    %c0_56 = arith.constant 0 : index
    %56 = vector.load %arg1[%c0_54, %c0_55, %c0_56] : memref<4x128x128xbf16, #tpu.memory_space<vmem>>, vector<1x128x128xbf16>
    %57 = vector.shape_cast %56 : vector<1x128x128xbf16> to vector<128x128xbf16>
    %c0_57 = arith.constant 0 : index
    %c0_58 = arith.constant 0 : index
    %58 = vector.load %arg6[%c0_57, %c0_58] : memref<512x128xbf16, #tpu.memory_space<vmem>>, vector<128x128xbf16>
    %cst_59 = arith.constant dense<0.000000e+00> : vector<128x128xf32>
    %59 = tpu.matmul %57, %58, %cst_59 {dimension_numbers = #tpu.dot_dimension_numbers<[1], [0], [0], [1], [0, 0, 1, 1], [], []>} : vector<128x128xbf16>, vector<128x128xbf16>, vector<128x128xf32> -> vector<128x128xf32>
    %60 = vector.broadcast %5 : vector<1x128xf32> to vector<128x128xf32>
    %61 = arith.addf %59, %60 : vector<128x128xf32>
    %cst_60 = arith.constant 0.000000e+00 : f32
    %62 = vector.broadcast %cst_60 : f32 to vector<128x128xf32>
    %63 = arith.maximumf %61, %62 : vector<128x128xf32>
    %64 = arith.truncf %63 : vector<128x128xf32> to vector<128x128xbf16>
    %c0_61 = arith.constant 0 : index
    %c0_62 = arith.constant 0 : index
    %65 = vector.load %arg7[%c0_61, %c0_62] : memref<512x128xbf16, #tpu.memory_space<vmem>>, vector<128x128xbf16>
    tpu.vector_store %arg7[%c0_61, %c0_62], %64 {strides = array<i32>} : memref<512x128xbf16, #tpu.memory_space<vmem>>, vector<128x128xbf16>,
    %c1_63 = arith.constant 1 : index
    %c0_64 = arith.constant 0 : index
    %c0_65 = arith.constant 0 : index
    %66 = vector.load %arg1[%c1_63, %c0_64, %c0_65] : memref<4x128x128xbf16, #tpu.memory_space<vmem>>, vector<1x128x128xbf16>
    %67 = vector.shape_cast %66 : vector<1x128x128xbf16> to vector<128x128xbf16>
    %c128_66 = arith.constant 128 : index
    %c0_67 = arith.constant 0 : index
    %68 = vector.load %arg6[%c128_66, %c0_67] : memref<512x128xbf16, #tpu.memory_space<vmem>>, vector<128x128xbf16>
    %cst_68 = arith.constant dense<0.000000e+00> : vector<128x128xf32>
    %69 = tpu.matmul %67, %68, %cst_68 {dimension_numbers = #tpu.dot_dimension_numbers<[1], [0], [0], [1], [0, 0, 1, 1], [], []>} : vector<128x128xbf16>, vector<128x128xbf16>, vector<128x128xf32> -> vector<128x128xf32>
    %70 = vector.broadcast %5 : vector<1x128xf32> to vector<128x128xf32>
    %71 = arith.addf %69, %70 : vector<128x128xf32>
    %cst_69 = arith.constant 0.000000e+00 : f32
    %72 = vector.broadcast %cst_69 : f32 to vector<128x128xf32>
    %73 = arith.maximumf %71, %72 : vector<128x128xf32>
    %74 = arith.truncf %73 : vector<128x128xf32> to vector<128x128xbf16>
    %c128_70 = arith.constant 128 : index
    %c0_71 = arith.constant 0 : index
    %75 = vector.load %arg7[%c128_70, %c0_71] : memref<512x128xbf16, #tpu.memory_space<vmem>>, vector<128x128xbf16>
    tpu.vector_store %arg7[%c128_70, %c0_71], %74 {strides = array<i32>} : memref<512x128xbf16, #tpu.memory_space<vmem>>, vector<128x128xbf16>,
    %c2_72 = arith.constant 2 : index
    %c0_73 = arith.constant 0 : index
    %c0_74 = arith.constant 0 : index
    %76 = vector.load %arg1[%c2_72, %c0_73, %c0_74] : memref<4x128x128xbf16, #tpu.memory_space<vmem>>, vector<1x128x128xbf16>
    %77 = vector.shape_cast %76 : vector<1x128x128xbf16> to vector<128x128xbf16>
    %c256_75 = arith.constant 256 : index
    %c0_76 = arith.constant 0 : index
    %78 = vector.load %arg6[%c256_75, %c0_76] : memref<512x128xbf16, #tpu.memory_space<vmem>>, vector<128x128xbf16>
    %cst_77 = arith.constant dense<0.000000e+00> : vector<128x128xf32>
    %79 = tpu.matmul %77, %78, %cst_77 {dimension_numbers = #tpu.dot_dimension_numbers<[1], [0], [0], [1], [0, 0, 1, 1], [], []>} : vector<128x128xbf16>, vector<128x128xbf16>, vector<128x128xf32> -> vector<128x128xf32>
    %80 = vector.broadcast %5 : vector<1x128xf32> to vector<128x128xf32>
    %81 = arith.addf %79, %80 : vector<128x128xf32>
    %cst_78 = arith.constant 0.000000e+00 : f32
    %82 = vector.broadcast %cst_78 : f32 to vector<128x128xf32>
    %83 = arith.maximumf %81, %82 : vector<128x128xf32>
    %84 = arith.truncf %83 : vector<128x128xf32> to vector<128x128xbf16>
    %c256_79 = arith.constant 256 : index
    %c0_80 = arith.constant 0 : index
    %85 = vector.load %arg7[%c256_79, %c0_80] : memref<512x128xbf16, #tpu.memory_space<vmem>>, vector<128x128xbf16>
    tpu.vector_store %arg7[%c256_79, %c0_80], %84 {strides = array<i32>} : memref<512x128xbf16, #tpu.memory_space<vmem>>, vector<128x128xbf16>,
    %c3_81 = arith.constant 3 : index
    %c0_82 = arith.constant 0 : index
    %c0_83 = arith.constant 0 : index
    %86 = vector.load %arg1[%c3_81, %c0_82, %c0_83] : memref<4x128x128xbf16, #tpu.memory_space<vmem>>, vector<1x128x128xbf16>
    %87 = vector.shape_cast %86 : vector<1x128x128xbf16> to vector<128x128xbf16>
    %c384_84 = arith.constant 384 : index
    %c0_85 = arith.constant 0 : index
    %88 = vector.load %arg6[%c384_84, %c0_85] : memref<512x128xbf16, #tpu.memory_space<vmem>>, vector<128x128xbf16>
    %cst_86 = arith.constant dense<0.000000e+00> : vector<128x128xf32>
    %89 = tpu.matmul %87, %88, %cst_86 {dimension_numbers = #tpu.dot_dimension_numbers<[1], [0], [0], [1], [0, 0, 1, 1], [], []>} : vector<128x128xbf16>, vector<128x128xbf16>, vector<128x128xf32> -> vector<128x128xf32>
    %90 = vector.broadcast %5 : vector<1x128xf32> to vector<128x128xf32>
    %91 = arith.addf %89, %90 : vector<128x128xf32>
    %cst_87 = arith.constant 0.000000e+00 : f32
    %92 = vector.broadcast %cst_87 : f32 to vector<128x128xf32>
    %93 = arith.maximumf %91, %92 : vector<128x128xf32>
    %94 = arith.truncf %93 : vector<128x128xf32> to vector<128x128xbf16>
    %c384_88 = arith.constant 384 : index
    %c0_89 = arith.constant 0 : index
    %95 = vector.load %arg7[%c384_88, %c0_89] : memref<512x128xbf16, #tpu.memory_space<vmem>>, vector<128x128xbf16>
    tpu.vector_store %arg7[%c384_88, %c0_89], %94 {strides = array<i32>} : memref<512x128xbf16, #tpu.memory_space<vmem>>, vector<128x128xbf16>,
    %c0_90 = arith.constant 0 : index
    %c0_91 = arith.constant 0 : index
    %96 = vector.load %arg7[%c0_90, %c0_91] : memref<512x128xbf16, #tpu.memory_space<vmem>>, vector<512x128xbf16>
    %cst_92 = arith.constant dense<0.000000e+00> : vector<512x128xf32>
    %97 = tpu.matmul %96, %2, %cst_92 {dimension_numbers = #tpu.dot_dimension_numbers<[1], [0], [0], [1], [0, 0, 1, 1], [], []>} : vector<512x128xbf16>, vector<128x128xbf16>, vector<512x128xf32> -> vector<512x128xf32>
    %98 = arith.truncf %97 : vector<512x128xf32> to vector<512x128xbf16>
    %c0_93 = arith.constant 0 : index
    %c0_94 = arith.constant 0 : index
    %99 = vector.load %arg6[%c0_93, %c0_94] : memref<512x128xbf16, #tpu.memory_space<vmem>>, vector<512x128xbf16>
    tpu.vector_store %arg6[%c0_93, %c0_94], %98 {strides = array<i32>} : memref<512x128xbf16, #tpu.memory_space<vmem>>, vector<512x128xbf16>,
    %c0_95 = arith.constant 0 : index
    %c0_96 = arith.constant 0 : index
    %c0_97 = arith.constant 0 : index
    %100 = vector.load %arg1[%c0_95, %c0_96, %c0_97] : memref<4x128x128xbf16, #tpu.memory_space<vmem>>, vector<1x128x128xbf16>
    %101 = vector.shape_cast %100 : vector<1x128x128xbf16> to vector<128x128xbf16>
    %c0_98 = arith.constant 0 : index
    %c0_99 = arith.constant 0 : index
    %102 = vector.load %arg6[%c0_98, %c0_99] : memref<512x128xbf16, #tpu.memory_space<vmem>>, vector<128x128xbf16>
    %cst_100 = arith.constant dense<0.000000e+00> : vector<128x128xf32>
    %103 = tpu.matmul %101, %102, %cst_100 {dimension_numbers = #tpu.dot_dimension_numbers<[1], [0], [0], [1], [0, 0, 1, 1], [], []>} : vector<128x128xbf16>, vector<128x128xbf16>, vector<128x128xf32> -> vector<128x128xf32>
    %104 = vector.broadcast %6 : vector<1x128xf32> to vector<128x128xf32>
    %105 = arith.addf %103, %104 : vector<128x128xf32>
    %cst_101 = arith.constant 0.000000e+00 : f32
    %106 = vector.broadcast %cst_101 : f32 to vector<128x128xf32>
    %107 = arith.maximumf %105, %106 : vector<128x128xf32>
    %108 = arith.truncf %107 : vector<128x128xf32> to vector<128x128xbf16>
    %c0_102 = arith.constant 0 : index
    %c0_103 = arith.constant 0 : index
    %109 = vector.load %arg7[%c0_102, %c0_103] : memref<512x128xbf16, #tpu.memory_space<vmem>>, vector<128x128xbf16>
    tpu.vector_store %arg7[%c0_102, %c0_103], %108 {strides = array<i32>} : memref<512x128xbf16, #tpu.memory_space<vmem>>, vector<128x128xbf16>,
    %c1_104 = arith.constant 1 : index
    %c0_105 = arith.constant 0 : index
    %c0_106 = arith.constant 0 : index
    %110 = vector.load %arg1[%c1_104, %c0_105, %c0_106] : memref<4x128x128xbf16, #tpu.memory_space<vmem>>, vector<1x128x128xbf16>
    %111 = vector.shape_cast %110 : vector<1x128x128xbf16> to vector<128x128xbf16>
    %c128_107 = arith.constant 128 : index
    %c0_108 = arith.constant 0 : index
    %112 = vector.load %arg6[%c128_107, %c0_108] : memref<512x128xbf16, #tpu.memory_space<vmem>>, vector<128x128xbf16>
    %cst_109 = arith.constant dense<0.000000e+00> : vector<128x128xf32>
    %113 = tpu.matmul %111, %112, %cst_109 {dimension_numbers = #tpu.dot_dimension_numbers<[1], [0], [0], [1], [0, 0, 1, 1], [], []>} : vector<128x128xbf16>, vector<128x128xbf16>, vector<128x128xf32> -> vector<128x128xf32>
    %114 = vector.broadcast %6 : vector<1x128xf32> to vector<128x128xf32>
    %115 = arith.addf %113, %114 : vector<128x128xf32>
    %cst_110 = arith.constant 0.000000e+00 : f32
    %116 = vector.broadcast %cst_110 : f32 to vector<128x128xf32>
    %117 = arith.maximumf %115, %116 : vector<128x128xf32>
    %118 = arith.truncf %117 : vector<128x128xf32> to vector<128x128xbf16>
    %c128_111 = arith.constant 128 : index
    %c0_112 = arith.constant 0 : index
    %119 = vector.load %arg7[%c128_111, %c0_112] : memref<512x128xbf16, #tpu.memory_space<vmem>>, vector<128x128xbf16>
    tpu.vector_store %arg7[%c128_111, %c0_112], %118 {strides = array<i32>} : memref<512x128xbf16, #tpu.memory_space<vmem>>, vector<128x128xbf16>,
    %c2_113 = arith.constant 2 : index
    %c0_114 = arith.constant 0 : index
    %c0_115 = arith.constant 0 : index
    %120 = vector.load %arg1[%c2_113, %c0_114, %c0_115] : memref<4x128x128xbf16, #tpu.memory_space<vmem>>, vector<1x128x128xbf16>
    %121 = vector.shape_cast %120 : vector<1x128x128xbf16> to vector<128x128xbf16>
    %c256_116 = arith.constant 256 : index
    %c0_117 = arith.constant 0 : index
    %122 = vector.load %arg6[%c256_116, %c0_117] : memref<512x128xbf16, #tpu.memory_space<vmem>>, vector<128x128xbf16>
    %cst_118 = arith.constant dense<0.000000e+00> : vector<128x128xf32>
    %123 = tpu.matmul %121, %122, %cst_118 {dimension_numbers = #tpu.dot_dimension_numbers<[1], [0], [0], [1], [0, 0, 1, 1], [], []>} : vector<128x128xbf16>, vector<128x128xbf16>, vector<128x128xf32> -> vector<128x128xf32>
    %124 = vector.broadcast %6 : vector<1x128xf32> to vector<128x128xf32>
    %125 = arith.addf %123, %124 : vector<128x128xf32>
    %cst_119 = arith.constant 0.000000e+00 : f32
    %126 = vector.broadcast %cst_119 : f32 to vector<128x128xf32>
    %127 = arith.maximumf %125, %126 : vector<128x128xf32>
    %128 = arith.truncf %127 : vector<128x128xf32> to vector<128x128xbf16>
    %c256_120 = arith.constant 256 : index
    %c0_121 = arith.constant 0 : index
    %129 = vector.load %arg7[%c256_120, %c0_121] : memref<512x128xbf16, #tpu.memory_space<vmem>>, vector<128x128xbf16>
    tpu.vector_store %arg7[%c256_120, %c0_121], %128 {strides = array<i32>} : memref<512x128xbf16, #tpu.memory_space<vmem>>, vector<128x128xbf16>,
    %c3_122 = arith.constant 3 : index
    %c0_123 = arith.constant 0 : index
    %c0_124 = arith.constant 0 : index
    %130 = vector.load %arg1[%c3_122, %c0_123, %c0_124] : memref<4x128x128xbf16, #tpu.memory_space<vmem>>, vector<1x128x128xbf16>
    %131 = vector.shape_cast %130 : vector<1x128x128xbf16> to vector<128x128xbf16>
    %c384_125 = arith.constant 384 : index
    %c0_126 = arith.constant 0 : index
    %132 = vector.load %arg6[%c384_125, %c0_126] : memref<512x128xbf16, #tpu.memory_space<vmem>>, vector<128x128xbf16>
    %cst_127 = arith.constant dense<0.000000e+00> : vector<128x128xf32>
    %133 = tpu.matmul %131, %132, %cst_127 {dimension_numbers = #tpu.dot_dimension_numbers<[1], [0], [0], [1], [0, 0, 1, 1], [], []>} : vector<128x128xbf16>, vector<128x128xbf16>, vector<128x128xf32> -> vector<128x128xf32>
    %134 = vector.broadcast %6 : vector<1x128xf32> to vector<128x128xf32>
    %135 = arith.addf %133, %134 : vector<128x128xf32>
    %cst_128 = arith.constant 0.000000e+00 : f32
    %136 = vector.broadcast %cst_128 : f32 to vector<128x128xf32>
    %137 = arith.maximumf %135, %136 : vector<128x128xf32>
    %138 = arith.truncf %137 : vector<128x128xf32> to vector<128x128xbf16>
    %c384_129 = arith.constant 384 : index
    %c0_130 = arith.constant 0 : index
    %139 = vector.load %arg7[%c384_129, %c0_130] : memref<512x128xbf16, #tpu.memory_space<vmem>>, vector<128x128xbf16>
    tpu.vector_store %arg7[%c384_129, %c0_130], %138 {strides = array<i32>} : memref<512x128xbf16, #tpu.memory_space<vmem>>, vector<128x128xbf16>,
    %c0_131 = arith.constant 0 : index
    %c0_132 = arith.constant 0 : index
    %140 = vector.load %arg7[%c0_131, %c0_132] : memref<512x128xbf16, #tpu.memory_space<vmem>>, vector<512x128xbf16>
    %141 = arith.extf %140 : vector<512x128xbf16> to vector<512x128xf32>
    %142 = vector.shape_cast %141 : vector<512x128xf32> to vector<64x8x128xf32>
    %cst_133 = arith.constant dense<0.000000e+00> : vector<64x128xf32>
    %143 = vector.multi_reduction <add>, %142, %cst_133 [1] : vector<64x8x128xf32> to vector<64x128xf32>
    %cst_134 = arith.constant 1.250000e-01 : f32
    %144 = vector.broadcast %cst_134 : f32 to vector<64x128xf32>
    %145 = arith.mulf %143, %144 : vector<64x128xf32>
    %146 = arith.truncf %145 : vector<64x128xf32> to vector<64x128xbf16>
    %cst_135 = arith.constant dense<0.000000e+00> : vector<64x128xf32>
    %147 = tpu.matmul %146, %3, %cst_135 {dimension_numbers = #tpu.dot_dimension_numbers<[1], [0], [0], [1], [0, 0, 1, 1], [], []>} : vector<64x128xbf16>, vector<128x128xbf16>, vector<64x128xf32> -> vector<64x128xf32>
    %148 = vector.broadcast %7 : vector<1x128xf32> to vector<64x128xf32>
    %149 = arith.addf %147, %148 : vector<64x128xf32>
    %150 = arith.truncf %149 : vector<64x128xf32> to vector<64x128xbf16>
    %c0_136 = arith.constant 0 : index
    %c0_137 = arith.constant 0 : index
    %151 = vector.load %arg5[%c0_136, %c0_137] : memref<64x128xbf16, #tpu.memory_space<vmem>>, vector<64x128xbf16>
    tpu.vector_store %arg5[%c0_136, %c0_137], %150 {strides = array<i32>} : memref<64x128xbf16, #tpu.memory_space<vmem>>, vector<64x128xbf16>,
    return
  }
  func.func @transform_0(%arg0: i32) -> (i32, i32, i32) {
    %c0_i32 = arith.constant 0 : i32
    %c0_i32_0 = arith.constant 0 : i32
    %c0_i32_1 = arith.constant 0 : i32
    return %arg0, %c0_i32, %c0_i32_0 : i32, i32, i32
  }
  func.func @transform_1(%arg0: i32) -> (i32, i32) {
    %c0_i32 = arith.constant 0 : i32
    %c0_i32_0 = arith.constant 0 : i32
    return %arg0, %c0_i32 : i32, i32
  }
  func.func @transform_2(%arg0: i32) -> (i32, i32) {
    %c0_i32 = arith.constant 0 : i32
    %c0_i32_0 = arith.constant 0 : i32
    %c0_i32_1 = arith.constant 0 : i32
    return %c0_i32, %c0_i32_0 : i32, i32
  }
  func.func @transform_3(%arg0: i32) -> (i32, i32) {
    %c0_i32 = arith.constant 0 : i32
    %c0_i32_0 = arith.constant 0 : i32
    %c0_i32_1 = arith.constant 0 : i32
    return %c0_i32, %c0_i32_0 : i32, i32
  }
  func.func @transform_4(%arg0: i32) -> (i32, i32) {
    %c0_i32 = arith.constant 0 : i32
    %c0_i32_0 = arith.constant 0 : i32
    return %arg0, %c0_i32 : i32, i32
  }
}

</mosaic_0001>

<llo_original>
// kernel: tpu_custom_call.1
$region0: #{tpu_custom_call.1}
  #allocation0 [shape = 'u32[]', space=smem, size = 0x4, offset = 0x4, fixed_abs, tag = 'smem constant byte address 0x4 - core index']
  #allocation1 [shape = 'u32[72,128]{1,0:T(1,128)}', space=vmem, size = 0x9000, scoped, tag = 'internal scratch']
  #allocation2 [shape = 'bf16[512,128]{1,0:T(8,128)(2,1)}', space=vmem, size = 0x20000, scoped, tag = 'scratch operand']
  #allocation3 [shape = 'bf16[512,128]{1,0:T(8,128)(2,1)}', space=vmem, size = 0x20000, scoped, tag = 'scratch operand']
  %s0 = inlined_call_operand.vmem [shape: bf16[8,128,128], index: 0, kind: input, shape index: {}]
  %s1 = inlined_call_operand.vmem [shape: bf16[1024,32], index: 1, kind: input, shape index: {}]
  %s2 = inlined_call_operand.hbm [shape: bf16[512,128], index: 2, kind: input, shape index: {}]
  %s3 = inlined_call_operand.vmem [shape: f32[8,128], index: 3, kind: input, shape index: {}]
  %s4 = inlined_call_operand.hbm [shape: bf16[128,128], index: 4, kind: output, shape index: {}]
  %s5 = sld [smem:[#allocation0]]
  $region53: #{tpu_custom_call.1} parent=0
    _
  %s7 = ssub.s32 1, %s5
  %s8 = scalar_select 0, %s7, %s5
  $region1: #{tpu_custom_call.1} parent=0
    #allocation4 [shape = 'u8[131072]{0}', space=vmem, size = 0x20000, scoped, tag = 'input window, operand 2, single buffered']
    #allocation5 [shape = 's32[2]{0}', space=sflag, size = 0x8, scoped, tag = 'scoped memory for tpu_custom_call.1']
    #allocation6 [shape = 's32[2]{0}', space=sflag, size = 0x8, scoped, tag = 'scoped memory for tpu_custom_call.1']
    #allocation7 [shape = 'u8[32768]{0}', space=vmem, size = 0x8000, scoped, tag = 'output window, operand 0']
    %9 = vsyncpa [#allocation5], 0
    %10 = vsyncpa [#allocation6], 0
    %s11 = scalar_lea.sflag [#allocation6], 1
    %12 = vsyncpa %s11, 0
    loop: start=0, step=1, limit=4
    $region2: #{tpu_custom_call.1} parent=1 // loop_pre_header
      _
    $region3: #{tpu_custom_call.1} parent=1 // loop_header
      %s14 = sphi 0, %s18
      %p15 = scmp.ge.s32.totalorder %s14, 4
      %s24 = sphi 0, %s26
      %s27 = sphi 0, %s24
      %s28 = sphi 0, %s27
      %s44 = sphi 0, %s28
      %s50 = sphi 0, %s52
      %s53 = sphi 0, %s50
      %s54 = sphi 0, %s53
      %s70 = sphi 0, %s54
      %s74 = sphi 0, %s74
      %s76 = sphi 0, %s74
      %s77 = sphi 0, %s76
      %s91 = sphi 0, %s77
      %s95 = sphi 0, %s95
      %s97 = sphi 0, %s95
      %s98 = sphi 0, %s97
      %s112 = sphi 0, %s98
      %s118 = sphi 0, %s120
      %s121 = sphi 0, %s118
      %s122 = sphi 0, %s121
      %s138 = sphi 0, %s122
    $region4: #{tpu_custom_call.1} parent=1 // loop_header_branch
      %17 = sbr.rel (%p15) target = $region8
    $region5: #{tpu_custom_call.1} parent=1 // loop_body
      %s19 = ssub.s32 %s14, 1
      %s20 = ssub.s32 %s14, 2
      %s21 = sadd.s32 %s14, 1
      %s22 = ssub.s32 %s14, %s21
      %p23 = scmp.eq.s32.totalorder %s22, 0
      %s25 = sadd.s32 %s24, 1
      %s26 = scalar_select %p23, %s24, %s25
      %p29 = pneg %p23
      %p30 = scmp.eq.s32.totalorder %s14, 1
      %p31 = por %p29, %p30
      %p32 = scmp.ne.s32.totalorder %s24, %s27
      %p33 = scmp.eq.s32.totalorder %s14, 0
      %p34 = por %p32, %p33
      %p35 = scmp.ne.s32.totalorder %s24, %s27
      %p36 = scmp.eq.s32.totalorder %s19, 1
      %p37 = por %p35, %p36
      %p38 = scmp.ne.s32.totalorder %s27, %s28
      %p39 = scmp.eq.s32.totalorder %s19, 0
      %p40 = por %p38, %p39
      %p41 = scmp.ne.s32.totalorder %s27, %s28
      %p42 = scmp.eq.s32.totalorder %s20, 1
      %p43 = por %p41, %p42
      %p45 = scmp.ne.s32.totalorder %s28, %s44
      %p46 = scmp.eq.s32.totalorder %s20, 0
      %p47 = por %p45, %p46
      %s48 = ssub.s32 %s14, %s21
      %p49 = scmp.eq.s32.totalorder %s48, 0
      %s51 = sadd.s32 %s50, 1
      %s52 = scalar_select %p49, %s50, %s51
      %p55 = pneg %p49
      %p56 = scmp.eq.s32.totalorder %s14, 1
      %p57 = por %p55, %p56
      %p58 = scmp.ne.s32.totalorder %s50, %s53
      %p59 = scmp.eq.s32.totalorder %s14, 0
      %p60 = por %p58, %p59
      %p61 = scmp.ne.s32.totalorder %s50, %s53
      %p62 = scmp.eq.s32.totalorder %s19, 1
      %p63 = por %p61, %p62
      %p64 = scmp.ne.s32.totalorder %s53, %s54
      %p65 = scmp.eq.s32.totalorder %s19, 0
      %p66 = por %p64, %p65
      %p67 = scmp.ne.s32.totalorder %s53, %s54
      %p68 = scmp.eq.s32.totalorder %s20, 1
      %p69 = por %p67, %p68
      %p71 = scmp.ne.s32.totalorder %s54, %s70
      %p72 = scmp.eq.s32.totalorder %s20, 0
      %p73 = por %p71, %p72
      %s75 = sadd.s32 %s74, 1
      %p78 = scmp.eq.s32.totalorder %s14, 1
      %p79 = scmp.ne.s32.totalorder %s74, %s76
      %p80 = scmp.eq.s32.totalorder %s14, 0
      %p81 = por %p79, %p80
      %p82 = scmp.ne.s32.totalorder %s74, %s76
      %p83 = scmp.eq.s32.totalorder %s19, 1
      %p84 = por %p82, %p83
      %p85 = scmp.ne.s32.totalorder %s76, %s77
      %p86 = scmp.eq.s32.totalorder %s19, 0
      %p87 = por %p85, %p86
      %p88 = scmp.ne.s32.totalorder %s76, %s77
      %p89 = scmp.eq.s32.totalorder %s20, 1
      %p90 = por %p88, %p89
      %p92 = scmp.ne.s32.totalorder %s77, %s91
      %p93 = scmp.eq.s32.totalorder %s20, 0
      %p94 = por %p92, %p93
      %s96 = sadd.s32 %s95, 1
      %p99 = scmp.eq.s32.totalorder %s14, 1
      %p100 = scmp.ne.s32.totalorder %s95, %s97
      %p101 = scmp.eq.s32.totalorder %s14, 0
      %p102 = por %p100, %p101
      %p103 = scmp.ne.s32.totalorder %s95, %s97
      %p104 = scmp.eq.s32.totalorder %s19, 1
      %p105 = por %p103, %p104
      %p106 = scmp.ne.s32.totalorder %s97, %s98
      %p107 = scmp.eq.s32.totalorder %s19, 0
      %p108 = por %p106, %p107
      %p109 = scmp.ne.s32.totalorder %s97, %s98
      %p110 = scmp.eq.s32.totalorder %s20, 1
      %p111 = por %p109, %p110
      %p113 = scmp.ne.s32.totalorder %s98, %s112
      %p114 = scmp.eq.s32.totalorder %s20, 0
      %p115 = por %p113, %p114
      %s116 = ssub.s32 %s14, %s21
      %p117 = scmp.eq.s32.totalorder %s116, 0
      %s119 = sadd.s32 %s118, 1
      %s120 = scalar_select %p117, %s118, %s119
      %p123 = pneg %p117
      %p124 = scmp.eq.s32.totalorder %s14, 1
      %p125 = por %p123, %p124
      %p126 = scmp.ne.s32.totalorder %s118, %s121
      %p127 = scmp.eq.s32.totalorder %s14, 0
      %p128 = por %p126, %p127
      %p129 = scmp.ne.s32.totalorder %s118, %s121
      %p130 = scmp.eq.s32.totalorder %s19, 1
      %p131 = por %p129, %p130
      %p132 = scmp.ne.s32.totalorder %s121, %s122
      %p133 = scmp.eq.s32.totalorder %s19, 0
      %p134 = por %p132, %p133
      %p135 = scmp.ne.s32.totalorder %s121, %s122
      %p136 = scmp.eq.s32.totalorder %s20, 1
      %p137 = por %p135, %p136
      %p139 = scmp.ne.s32.totalorder %s122, %s138
      %p140 = scmp.eq.s32.totalorder %s20, 0
      %p141 = por %p139, %p140
      %p142 = scmp.le.s32.totalorder 1, %s14
      %p143 = scmp.lt.s32.totalorder %s14, 3
      %p144 = pnand %p142, %p143
      %p145 = pneg %p144
      // Predicated region
      $region9: #{tpu_custom_call.1} parent=5 // pred_check
        _
      $region10: #{tpu_custom_call.1} parent=5 // pred_check_branch
        %147 = sbr.rel (%p144) target = $region12
      $region11: #{tpu_custom_call.1} parent=5 // pred_region
        %s148 = ssub.s32 %s14, 1
        // Predicated region
        $region13: #{tpu_custom_call.1} parent=11 // pred_check
          %p149 = pneg %p87
        $region14: #{tpu_custom_call.1} parent=11 // pred_check_branch
          %151 = sbr.rel (%p149) target = $region16
        $region15: #{tpu_custom_call.1} parent=11 // pred_region
          %153 = vsyncadd [#allocation5], 0
          %s154 = sshll.u32 %s2, 4
          %s155 = int_to_ptr.hbm [resolvable:$true] %s154
          %s156 = sshll.u32 [#allocation4], 4
          %s157 = int_to_ptr.vmem [resolvable:$true] %s156
          %162 = dma.hbm_to_vmem [thread:$0]  %s155, 4096, %s157, [#allocation5], 64, 64, 4
        $region16: #{tpu_custom_call.1} parent=11 // pred_fallthru
          _
        // Predicated region
        $region17: #{tpu_custom_call.1} parent=11 // pred_check
          %p163 = pneg %p108
        $region18: #{tpu_custom_call.1} parent=11 // pred_check_branch
          %165 = sbr.rel (%p163) target = $region20
        $region19: #{tpu_custom_call.1} parent=11 // pred_region
          _
        $region20: #{tpu_custom_call.1} parent=11 // pred_fallthru
          _
      $region12: #{tpu_custom_call.1} parent=5 // pred_fallthru
        _
      %p166 = scmp.lt.s32.totalorder %s14, 2
      // Predicated region
      $region21: #{tpu_custom_call.1} parent=5 // pred_check
        %p167 = pneg %p166
      $region22: #{tpu_custom_call.1} parent=5 // pred_check_branch
        %169 = sbr.rel (%p167) target = $region24
      $region23: #{tpu_custom_call.1} parent=5 // pred_region
        // Predicated region
        $region25: #{tpu_custom_call.1} parent=23 // pred_check
          %p170 = pneg %p34
        $region26: #{tpu_custom_call.1} parent=23 // pred_check_branch
          %172 = sbr.rel (%p170) target = $region28
        $region27: #{tpu_custom_call.1} parent=23 // pred_region
          %s173 = smul.u32 4, %s14
          %p174 = scmp.lt.s32.totalorder %s173, 7
          %s175 = scalar_select %p174, %s173, 7
          %s176 = smul.addr %s175, 16
          %s177 = smul.addr %s176, 4
          %s178 = scalar_lea.vmem %s0, %s177
          %s179 = smul.u32 4, %s14
        $region28: #{tpu_custom_call.1} parent=23 // pred_fallthru
          _
        // Predicated region
        $region29: #{tpu_custom_call.1} parent=23 // pred_check
          %p180 = pneg %p60
        $region30: #{tpu_custom_call.1} parent=23 // pred_check_branch
          %182 = sbr.rel (%p180) target = $region32
        $region31: #{tpu_custom_call.1} parent=23 // pred_region
          %s183 = smul.u32 64, %s14
          %p184 = scmp.lt.s32.totalorder %s183, 127
          %s185 = scalar_select %p184, %s183, 127
          %s186 = smul.addr %s185, 4
          %s187 = scalar_lea.vmem %s1, %s186
          %s188 = smul.u32 64, %s14
        $region32: #{tpu_custom_call.1} parent=23 // pred_fallthru
          _
      $region24: #{tpu_custom_call.1} parent=5 // pred_fallthru
        _
      %p189 = scmp.le.s32.totalorder 1, %s14
      %p190 = scmp.lt.s32.totalorder %s14, 3
      %p191 = pnand %p189, %p190
      %p192 = pneg %p191
      // Predicated region
      $region33: #{tpu_custom_call.1} parent=5 // pred_check
        _
      $region34: #{tpu_custom_call.1} parent=5 // pred_check_branch
        %194 = sbr.rel (%p191) target = $region36
      $region35: #{tpu_custom_call.1} parent=5 // pred_region
        %s195 = ssub.s32 %s14, 1
        // Predicated region
        $region37: #{tpu_custom_call.1} parent=35 // pred_check
          %p196 = pneg %p87
        $region38: #{tpu_custom_call.1} parent=35 // pred_check_branch
          %198 = sbr.rel (%p196) target = $region40
        $region39: #{tpu_custom_call.1} parent=35 // pred_region
          %200 = dma.done [#allocation5], 4096
        $region40: #{tpu_custom_call.1} parent=35 // pred_fallthru
          _
        %s201 = smul.u32 4, %s19
        %p202 = scmp.lt.s32.totalorder %s201, 7
        %s203 = scalar_select %p202, %s201, 7
        %s204 = smul.addr %s203, 16
        %s205 = smul.addr %s204, 4
        %s206 = scalar_lea.vmem %s0, %s205
        %p207 = pneg %p40
        %p208 = pneg %p37
        %s209 = smul.u32 64, %s19
        %p210 = scmp.lt.s32.totalorder %s209, 127
        %s211 = scalar_select %p210, %s209, 127
        %s212 = smul.addr %s211, 4
        %s213 = scalar_lea.vmem %s1, %s212
        %p214 = pneg %p66
        %p215 = pneg %p63
        %p216 = pneg %p87
        %p217 = pneg %p84
        %p218 = pneg %p108
        %p219 = pneg %p105
        %p220 = pneg %p134
        %p221 = pneg %p131
        %s222 = sand.u32 %s121, 1
        %s223 = scalar_lea.sflag [#allocation6], %s222
        %s224 = sand.u32 %s121, 1
        %s225 = smul.addr %s224, 32
        %s226 = scalar_lea.vmem [#allocation7], %s225
        %s227 = smul.u32 4, %s19
        %p228 = scmp.lt.s32.totalorder %s227, 7
        %s229 = scalar_select %p228, %s227, 7
        %s230 = smul.addr %s229, 16
        %s231 = smul.addr %s230, 4
        %s232 = scalar_lea.vmem %s0, %s231
        %s233 = smul.u32 4, %s19
        %s234 = smul.u32 64, %s19
        %p235 = scmp.lt.s32.totalorder %s234, 127
        %s236 = scalar_select %p235, %s234, 127
        %s237 = smul.addr %s236, 4
        %s238 = scalar_lea.vmem %s1, %s237
        %s239 = smul.u32 64, %s19
        %s240 = smul.u32 8, %s19
        %v242 = vld [vmem:[#allocation4] sm:$0xf]
        %v243 = vld [vmem:[#allocation4 + $0x4] sm:$0xf]
        %v244 = vld [vmem:[#allocation4 + $0x8] sm:$0xf]
        %v245 = vld [vmem:[#allocation4 + $0xc] sm:$0xf]
        %v246 = vld [vmem:[#allocation4 + $0x40] sm:$0xf]
        %v247 = vld [vmem:[#allocation4 + $0x44] sm:$0xf]
        %v248 = vld [vmem:[#allocation4 + $0x48] sm:$0xf]
        %v249 = vld [vmem:[#allocation4 + $0x4c] sm:$0xf]
        %v250 = vld [vmem:[#allocation4 + $0x50] sm:$0xf]
        %v251 = vld [vmem:[#allocation4 + $0x54] sm:$0xf]
        %v252 = vld [vmem:[#allocation4 + $0x58] sm:$0xf]
        %v253 = vld [vmem:[#allocation4 + $0x5c] sm:$0xf]
        %v254 = vld [vmem:[#allocation4 + $0x60] sm:$0xf]
        %v255 = vld [vmem:[#allocation4 + $0x64] sm:$0xf]
        %v256 = vld [vmem:[#allocation4 + $0x68] sm:$0xf]
        %v257 = vld [vmem:[#allocation4 + $0x6c] sm:$0xf]
        %v258 = vld [vmem:[#allocation4 + $0x70] sm:$0xf]
        %v259 = vld [vmem:[#allocation4 + $0x74] sm:$0xf]
        %v260 = vld [vmem:[#allocation4 + $0x78] sm:$0xf]
        %v261 = vld [vmem:[#allocation4 + $0x7c] sm:$0xf]
        %v262 = vld [vmem:[#allocation4 + $0x80] sm:$0xf]
        %v263 = vld [vmem:[#allocation4 + $0x84] sm:$0xf]
        %v264 = vld [vmem:[#allocation4 + $0x88] sm:$0xf]
        %v265 = vld [vmem:[#allocation4 + $0x8c] sm:$0xf]
        %v266 = vld [vmem:[#allocation4 + $0x90] sm:$0xf]
        %v267 = vld [vmem:[#allocation4 + $0x94] sm:$0xf]
        %v268 = vld [vmem:[#allocation4 + $0x98] sm:$0xf]
        %v269 = vld [vmem:[#allocation4 + $0x9c] sm:$0xf]
        %v270 = vld [vmem:[#allocation4 + $0xa0] sm:$0xf]
        %v271 = vld [vmem:[#allocation4 + $0xa4] sm:$0xf]
        %v272 = vld [vmem:[#allocation4 + $0xa8] sm:$0xf]
        %v273 = vld [vmem:[#allocation4 + $0xac] sm:$0xf]
        %v274 = vld [vmem:[#allocation4 + $0xb0] sm:$0xf]
        %v275 = vld [vmem:[#allocation4 + $0xb4] sm:$0xf]
        %v276 = vld [vmem:[#allocation4 + $0xb8] sm:$0xf]
        %v277 = vld [vmem:[#allocation4 + $0xbc] sm:$0xf]
        %v278 = vld [vmem:[#allocation4 + $0xc0] sm:$0xf]
        %v279 = vld [vmem:[#allocation4 + $0xc4] sm:$0xf]
        %v280 = vld [vmem:[#allocation4 + $0xc8] sm:$0xf]
        %v281 = vld [vmem:[#allocation4 + $0xcc] sm:$0xf]
        %v282 = vld [vmem:[#allocation4 + $0xd0] sm:$0xf]
        %v283 = vld [vmem:[#allocation4 + $0xd4] sm:$0xf]
        %v284 = vld [vmem:[#allocation4 + $0xd8] sm:$0xf]
        %v285 = vld [vmem:[#allocation4 + $0xdc] sm:$0xf]
        %v286 = vld [vmem:[#allocation4 + $0xe0] sm:$0xf]
        %v287 = vld [vmem:[#allocation4 + $0xe4] sm:$0xf]
        %v288 = vld [vmem:[#allocation4 + $0xe8] sm:$0xf]
        %v289 = vld [vmem:[#allocation4 + $0xec] sm:$0xf]
        %v290 = vld [vmem:[#allocation4 + $0xf0] sm:$0xf]
        %v291 = vld [vmem:[#allocation4 + $0xf4] sm:$0xf]
        %v292 = vld [vmem:[#allocation4 + $0xf8] sm:$0xf]
        %v293 = vld [vmem:[#allocation4 + $0xfc] sm:$0xf]
        %v294 = vld [vmem:[%s3] sm:$0x1]
        %v295 = vld [vmem:[%s3 + $0x1] sm:$0x1]
        %v296 = vld [vmem:[%s3 + $0x2] sm:$0x1]
        %v297 = vld [vmem:[%s3 + $0x3] sm:$0x1]
        %v298 = vld [vmem:[%s238] sm:$0xf]
        %v299 = vld [vmem:[%s238 + $0x4] sm:$0xf]
        %v300 = vld [vmem:[%s238 + $0x8] sm:$0xf]
        %v301 = vld [vmem:[%s238 + $0xc] sm:$0xf]
        %v302 = vld [vmem:[%s238 + $0x10] sm:$0xf]
        %v303 = vld [vmem:[%s238 + $0x14] sm:$0xf]
        %v304 = vld [vmem:[%s238 + $0x18] sm:$0xf]
        %v305 = vld [vmem:[%s238 + $0x1c] sm:$0xf]
        %v306 = vld [vmem:[%s238 + $0x20] sm:$0xf]
        %v307 = vld [vmem:[%s238 + $0x24] sm:$0xf]
        %v308 = vld [vmem:[%s238 + $0x28] sm:$0xf]
        %v309 = vld [vmem:[%s238 + $0x2c] sm:$0xf]
        %v310 = vld [vmem:[%s238 + $0x30] sm:$0xf]
        %v311 = vld [vmem:[%s238 + $0x34] sm:$0xf]
        %v312 = vld [vmem:[%s238 + $0x38] sm:$0xf]
        %v313 = vld [vmem:[%s238 + $0x3c] sm:$0xf]
        %v314 = vld [vmem:[%s238 + $0x40] sm:$0xf]
        %v315 = vld [vmem:[%s238 + $0x44] sm:$0xf]
        %v316 = vld [vmem:[%s238 + $0x48] sm:$0xf]
        %v317 = vld [vmem:[%s238 + $0x4c] sm:$0xf]
        %v318 = vld [vmem:[%s238 + $0x50] sm:$0xf]
        %v319 = vld [vmem:[%s238 + $0x54] sm:$0xf]
        %v320 = vld [vmem:[%s238 + $0x58] sm:$0xf]
        %v321 = vld [vmem:[%s238 + $0x5c] sm:$0xf]
        %v322 = vld [vmem:[%s238 + $0x60] sm:$0xf]
        %v323 = vld [vmem:[%s238 + $0x64] sm:$0xf]
        %v324 = vld [vmem:[%s238 + $0x68] sm:$0xf]
        %v325 = vld [vmem:[%s238 + $0x6c] sm:$0xf]
        %v326 = vld [vmem:[%s238 + $0x70] sm:$0xf]
        %v327 = vld [vmem:[%s238 + $0x74] sm:$0xf]
        %v328 = vld [vmem:[%s238 + $0x78] sm:$0xf]
        %v329 = vld [vmem:[%s238 + $0x7c] sm:$0xf]
        %v330 = vld [vmem:[%s238 + $0x80] sm:$0xf]
        %v331 = vld [vmem:[%s238 + $0x84] sm:$0xf]
        %v332 = vld [vmem:[%s238 + $0x88] sm:$0xf]
        %v333 = vld [vmem:[%s238 + $0x8c] sm:$0xf]
        %v334 = vld [vmem:[%s238 + $0x90] sm:$0xf]
        %v335 = vld [vmem:[%s238 + $0x94] sm:$0xf]
        %v336 = vld [vmem:[%s238 + $0x98] sm:$0xf]
        %v337 = vld [vmem:[%s238 + $0x9c] sm:$0xf]
        %v338 = vld [vmem:[%s238 + $0xa0] sm:$0xf]
        %v339 = vld [vmem:[%s238 + $0xa4] sm:$0xf]
        %v340 = vld [vmem:[%s238 + $0xa8] sm:$0xf]
        %v341 = vld [vmem:[%s238 + $0xac] sm:$0xf]
        %v342 = vld [vmem:[%s238 + $0xb0] sm:$0xf]
        %v343 = vld [vmem:[%s238 + $0xb4] sm:$0xf]
        %v344 = vld [vmem:[%s238 + $0xb8] sm:$0xf]
        %v345 = vld [vmem:[%s238 + $0xbc] sm:$0xf]
        %v346 = vld [vmem:[%s238 + $0xc0] sm:$0xf]
        %v347 = vld [vmem:[%s238 + $0xc4] sm:$0xf]
        %v348 = vld [vmem:[%s238 + $0xc8] sm:$0xf]
        %v349 = vld [vmem:[%s238 + $0xcc] sm:$0xf]
        %v350 = vld [vmem:[%s238 + $0xd0] sm:$0xf]
        %v351 = vld [vmem:[%s238 + $0xd4] sm:$0xf]
        %v352 = vld [vmem:[%s238 + $0xd8] sm:$0xf]
        %v353 = vld [vmem:[%s238 + $0xdc] sm:$0xf]
        %v354 = vld [vmem:[%s238 + $0xe0] sm:$0xf]
        %v355 = vld [vmem:[%s238 + $0xe4] sm:$0xf]
        %v356 = vld [vmem:[%s238 + $0xe8] sm:$0xf]
        %v357 = vld [vmem:[%s238 + $0xec] sm:$0xf]
        %v358 = vld [vmem:[%s238 + $0xf0] sm:$0xf]
        %v359 = vld [vmem:[%s238 + $0xf4] sm:$0xf]
        %v360 = vld [vmem:[%s238 + $0xf8] sm:$0xf]
        %v361 = vld [vmem:[%s238 + $0xfc] sm:$0xf]
        %v426 = vunpack.c.l.b16 %v298
        %v427 = vunpack.c.l.b16 %v299
        %v428 = vunpack.c.l.b16 %v300
        %v429 = vunpack.c.l.b16 %v301
        %v430 = vunpack.c.l.b16 %v302
        %v431 = vunpack.c.l.b16 %v303
        %v432 = vunpack.c.l.b16 %v304
        %v433 = vunpack.c.l.b16 %v305
        %v434 = vunpack.c.l.b16 %v306
        %v435 = vunpack.c.l.b16 %v307
        %v436 = vunpack.c.l.b16 %v308
        %v437 = vunpack.c.l.b16 %v309
        %v438 = vunpack.c.l.b16 %v310
        %v439 = vunpack.c.l.b16 %v311
        %v440 = vunpack.c.l.b16 %v312
        %v441 = vunpack.c.l.b16 %v313
        %v442 = vunpack.c.l.b16 %v314
        %v443 = vunpack.c.l.b16 %v315
        %v444 = vunpack.c.l.b16 %v316
        %v445 = vunpack.c.l.b16 %v317
        %v446 = vunpack.c.l.b16 %v318
        %v447 = vunpack.c.l.b16 %v319
        %v448 = vunpack.c.l.b16 %v320
        %v449 = vunpack.c.l.b16 %v321
        %v450 = vunpack.c.l.b16 %v322
        %v451 = vunpack.c.l.b16 %v323
        %v452 = vunpack.c.l.b16 %v324
        %v453 = vunpack.c.l.b16 %v325
        %v454 = vunpack.c.l.b16 %v326
        %v455 = vunpack.c.l.b16 %v327
        %v456 = vunpack.c.l.b16 %v328
        %v457 = vunpack.c.l.b16 %v329
        %v458 = vunpack.c.l.b16 %v330
        %v459 = vunpack.c.l.b16 %v331
        %v460 = vunpack.c.l.b16 %v332
        %v461 = vunpack.c.l.b16 %v333
        %v462 = vunpack.c.l.b16 %v334
        %v463 = vunpack.c.l.b16 %v335
        %v464 = vunpack.c.l.b16 %v336
        %v465 = vunpack.c.l.b16 %v337
        %v466 = vunpack.c.l.b16 %v338
        %v467 = vunpack.c.l.b16 %v339
        %v468 = vunpack.c.l.b16 %v340
        %v469 = vunpack.c.l.b16 %v341
        %v470 = vunpack.c.l.b16 %v342
        %v471 = vunpack.c.l.b16 %v343
        %v472 = vunpack.c.l.b16 %v344
        %v473 = vunpack.c.l.b16 %v345
        %v474 = vunpack.c.l.b16 %v346
        %v475 = vunpack.c.l.b16 %v347
        %v476 = vunpack.c.l.b16 %v348
        %v477 = vunpack.c.l.b16 %v349
        %v478 = vunpack.c.l.b16 %v350
        %v479 = vunpack.c.l.b16 %v351
        %v480 = vunpack.c.l.b16 %v352
        %v481 = vunpack.c.l.b16 %v353
        %v482 = vunpack.c.l.b16 %v354
        %v483 = vunpack.c.l.b16 %v355
        %v484 = vunpack.c.l.b16 %v356
        %v485 = vunpack.c.l.b16 %v357
        %v486 = vunpack.c.l.b16 %v358
        %v487 = vunpack.c.l.b16 %v359
        %v488 = vunpack.c.l.b16 %v360
        %v489 = vunpack.c.l.b16 %v361
        %v490 = vpack.c.b16 %v427, %v426
        %v491 = vpack.c.b16 %v429, %v428
        %v492 = vpack.c.b16 %v431, %v430
        %v493 = vpack.c.b16 %v433, %v432
        %v494 = vpack.c.b16 %v435, %v434
        %v495 = vpack.c.b16 %v437, %v436
        %v496 = vpack.c.b16 %v439, %v438
        %v497 = vpack.c.b16 %v441, %v440
        %v498 = vpack.c.b16 %v443, %v442
        %v499 = vpack.c.b16 %v445, %v444
        %v500 = vpack.c.b16 %v447, %v446
        %v501 = vpack.c.b16 %v449, %v448
        %v502 = vpack.c.b16 %v451, %v450
        %v503 = vpack.c.b16 %v453, %v452
        %v504 = vpack.c.b16 %v455, %v454
        %v505 = vpack.c.b16 %v457, %v456
        %v506 = vpack.c.b16 %v459, %v458
        %v507 = vpack.c.b16 %v461, %v460
        %v508 = vpack.c.b16 %v463, %v462
        %v509 = vpack.c.b16 %v465, %v464
        %v510 = vpack.c.b16 %v467, %v466
        %v511 = vpack.c.b16 %v469, %v468
        %v512 = vpack.c.b16 %v471, %v470
        %v513 = vpack.c.b16 %v473, %v472
        %v514 = vpack.c.b16 %v475, %v474
        %v515 = vpack.c.b16 %v477, %v476
        %v516 = vpack.c.b16 %v479, %v478
        %v517 = vpack.c.b16 %v481, %v480
        %v518 = vpack.c.b16 %v483, %v482
        %v519 = vpack.c.b16 %v485, %v484
        %v520 = vpack.c.b16 %v487, %v486
        %v521 = vpack.c.b16 %v489, %v488
        %v526 = vunpack.c.l.b16 %v242
        %v527 = vunpack.c.l.b16 %v243
        %v528 = vunpack.c.l.b16 %v244
        %v529 = vunpack.c.l.b16 %v245
        %v530 = vpack.c.b16 %v527, %v526
        %v531 = vpack.c.b16 %v529, %v528
        %vm534 = vcmask 261120
        %v536 = vsel %vm534, %v490, 0
        %v539 = vsel %vm534, %v491, 0
        %v542 = vsel %vm534, %v492, 0
        %v545 = vsel %vm534, %v493, 0
        %v548 = vsel %vm534, %v494, 0
        %v551 = vsel %vm534, %v495, 0
        %v554 = vsel %vm534, %v496, 0
        %v557 = vsel %vm534, %v497, 0
        %v560 = vsel %vm534, %v498, 0
        %v563 = vsel %vm534, %v499, 0
        %v566 = vsel %vm534, %v500, 0
        %v569 = vsel %vm534, %v501, 0
        %v572 = vsel %vm534, %v502, 0
        %v575 = vsel %vm534, %v503, 0
        %v578 = vsel %vm534, %v504, 0
        %v581 = vsel %vm534, %v505, 0
        %v584 = vsel %vm534, %v506, 0
        %v587 = vsel %vm534, %v507, 0
        %v590 = vsel %vm534, %v508, 0
        %v593 = vsel %vm534, %v509, 0
        %v596 = vsel %vm534, %v510, 0
        %v599 = vsel %vm534, %v511, 0
        %v602 = vsel %vm534, %v512, 0
        %v605 = vsel %vm534, %v513, 0
        %v608 = vsel %vm534, %v514, 0
        %v611 = vsel %vm534, %v515, 0
        %v614 = vsel %vm534, %v516, 0
        %v617 = vsel %vm534, %v517, 0
        %v620 = vsel %vm534, %v518, 0
        %v623 = vsel %vm534, %v519, 0
        %v626 = vsel %vm534, %v520, 0
        %v629 = vsel %vm534, %v521, 0
        %631 = vmatpush.bf16.msra.mxu0 0
        %632 = vmatpush.bf16.msra.mxu0 0
        %633 = vmatpush.bf16.msra.mxu0 0
        %634 = vmatpush.bf16.msra.mxu0 0
        %635 = vmatpush.bf16.msra.mxu0 0
        %636 = vmatpush.bf16.msra.mxu0 0
        %637 = vmatpush.bf16.msra.mxu0 %v531
        %638 = vmatpush.bf16.msra.mxu0 %v530
        %639 = vmatmul.bf16.gmra.mxu0 %v536
        %v640 = vpop.f32.mrf.mxu0
        %v641 = vadd.f32 0.0, %v640
        %v642 = vpop.f32.mrf.mxu0
        %v643 = vadd.f32 0.0, %v642
        %644 = vmatmul.bf16.gmra.mxu0 %v539
        %v645 = vpop.f32.mrf.mxu0
        %v646 = vadd.f32 0.0, %v645
        %v647 = vpop.f32.mrf.mxu0
        %v648 = vadd.f32 0.0, %v647
        %649 = vmatmul.bf16.gmra.mxu0 %v542
        %v650 = vpop.f32.mrf.mxu0
        %v651 = vadd.f32 0.0, %v650
        %v652 = vpop.f32.mrf.mxu0
        %v653 = vadd.f32 0.0, %v652
        %654 = vmatmul.bf16.gmra.mxu0 %v545
        %v655 = vpop.f32.mrf.mxu0
        %v656 = vadd.f32 0.0, %v655
        %v657 = vpop.f32.mrf.mxu0
        %v658 = vadd.f32 0.0, %v657
        %659 = vmatmul.bf16.gmra.mxu0 %v548
        %v660 = vpop.f32.mrf.mxu0
        %v661 = vadd.f32 0.0, %v660
        %v662 = vpop.f32.mrf.mxu0
        %v663 = vadd.f32 0.0, %v662
        %664 = vmatmul.bf16.gmra.mxu0 %v551
        %v665 = vpop.f32.mrf.mxu0
        %v666 = vadd.f32 0.0, %v665
        %v667 = vpop.f32.mrf.mxu0
        %v668 = vadd.f32 0.0, %v667
        %669 = vmatmul.bf16.gmra.mxu0 %v554
        %v670 = vpop.f32.mrf.mxu0
        %v671 = vadd.f32 0.0, %v670
        %v672 = vpop.f32.mrf.mxu0
        %v673 = vadd.f32 0.0, %v672
        %674 = vmatmul.bf16.gmra.mxu0 %v557
        %v675 = vpop.f32.mrf.mxu0
        %v676 = vadd.f32 0.0, %v675
        %v677 = vpop.f32.mrf.mxu0
        %v678 = vadd.f32 0.0, %v677
        %679 = vmatmul.bf16.gmra.mxu0 %v560
        %v680 = vpop.f32.mrf.mxu0
        %v681 = vadd.f32 0.0, %v680
        %v682 = vpop.f32.mrf.mxu0
        %v683 = vadd.f32 0.0, %v682
        %684 = vmatmul.bf16.gmra.mxu0 %v563
        %v685 = vpop.f32.mrf.mxu0
        %v686 = vadd.f32 0.0, %v685
        %v687 = vpop.f32.mrf.mxu0
        %v688 = vadd.f32 0.0, %v687
        %689 = vmatmul.bf16.gmra.mxu0 %v566
        %v690 = vpop.f32.mrf.mxu0
        %v691 = vadd.f32 0.0, %v690
        %v692 = vpop.f32.mrf.mxu0
        %v693 = vadd.f32 0.0, %v692
        %694 = vmatmul.bf16.gmra.mxu0 %v569
        %v695 = vpop.f32.mrf.mxu0
        %v696 = vadd.f32 0.0, %v695
        %v697 = vpop.f32.mrf.mxu0
        %v698 = vadd.f32 0.0, %v697
        %699 = vmatmul.bf16.gmra.mxu0 %v572
        %v700 = vpop.f32.mrf.mxu0
        %v701 = vadd.f32 0.0, %v700
        %v702 = vpop.f32.mrf.mxu0
        %v703 = vadd.f32 0.0, %v702
        %704 = vmatmul.bf16.gmra.mxu0 %v575
        %v705 = vpop.f32.mrf.mxu0
        %v706 = vadd.f32 0.0, %v705
        %v707 = vpop.f32.mrf.mxu0
        %v708 = vadd.f32 0.0, %v707
        %709 = vmatmul.bf16.gmra.mxu0 %v578
        %v710 = vpop.f32.mrf.mxu0
        %v711 = vadd.f32 0.0, %v710
        %v712 = vpop.f32.mrf.mxu0
        %v713 = vadd.f32 0.0, %v712
        %714 = vmatmul.bf16.gmra.mxu0 %v581
        %v715 = vpop.f32.mrf.mxu0
        %v716 = vadd.f32 0.0, %v715
        %v717 = vpop.f32.mrf.mxu0
        %v718 = vadd.f32 0.0, %v717
        %719 = vmatmul.bf16.gmra.mxu0 %v584
        %v720 = vpop.f32.mrf.mxu0
        %v721 = vadd.f32 0.0, %v720
        %v722 = vpop.f32.mrf.mxu0
        %v723 = vadd.f32 0.0, %v722
        %724 = vmatmul.bf16.gmra.mxu0 %v587
        %v725 = vpop.f32.mrf.mxu0
        %v726 = vadd.f32 0.0, %v725
        %v727 = vpop.f32.mrf.mxu0
        %v728 = vadd.f32 0.0, %v727
        %729 = vmatmul.bf16.gmra.mxu0 %v590
        %v730 = vpop.f32.mrf.mxu0
        %v731 = vadd.f32 0.0, %v730
        %v732 = vpop.f32.mrf.mxu0
        %v733 = vadd.f32 0.0, %v732
        %734 = vmatmul.bf16.gmra.mxu0 %v593
        %v735 = vpop.f32.mrf.mxu0
        %v736 = vadd.f32 0.0, %v735
        %v737 = vpop.f32.mrf.mxu0
        %v738 = vadd.f32 0.0, %v737
        %739 = vmatmul.bf16.gmra.mxu0 %v596
        %v740 = vpop.f32.mrf.mxu0
        %v741 = vadd.f32 0.0, %v740
        %v742 = vpop.f32.mrf.mxu0
        %v743 = vadd.f32 0.0, %v742
        %744 = vmatmul.bf16.gmra.mxu0 %v599
        %v745 = vpop.f32.mrf.mxu0
        %v746 = vadd.f32 0.0, %v745
        %v747 = vpop.f32.mrf.mxu0
        %v748 = vadd.f32 0.0, %v747
        %749 = vmatmul.bf16.gmra.mxu0 %v602
        %v750 = vpop.f32.mrf.mxu0
        %v751 = vadd.f32 0.0, %v750
        %v752 = vpop.f32.mrf.mxu0
        %v753 = vadd.f32 0.0, %v752
        %754 = vmatmul.bf16.gmra.mxu0 %v605
        %v755 = vpop.f32.mrf.mxu0
        %v756 = vadd.f32 0.0, %v755
        %v757 = vpop.f32.mrf.mxu0
        %v758 = vadd.f32 0.0, %v757
        %759 = vmatmul.bf16.gmra.mxu0 %v608
        %v760 = vpop.f32.mrf.mxu0
        %v761 = vadd.f32 0.0, %v760
        %v762 = vpop.f32.mrf.mxu0
        %v763 = vadd.f32 0.0, %v762
        %764 = vmatmul.bf16.gmra.mxu0 %v611
        %v765 = vpop.f32.mrf.mxu0
        %v766 = vadd.f32 0.0, %v765
        %v767 = vpop.f32.mrf.mxu0
        %v768 = vadd.f32 0.0, %v767
        %769 = vmatmul.bf16.gmra.mxu0 %v614
        %v770 = vpop.f32.mrf.mxu0
        %v771 = vadd.f32 0.0, %v770
        %v772 = vpop.f32.mrf.mxu0
        %v773 = vadd.f32 0.0, %v772
        %774 = vmatmul.bf16.gmra.mxu0 %v617
        %v775 = vpop.f32.mrf.mxu0
        %v776 = vadd.f32 0.0, %v775
        %v777 = vpop.f32.mrf.mxu0
        %v778 = vadd.f32 0.0, %v777
        %779 = vmatmul.bf16.gmra.mxu0 %v620
        %v780 = vpop.f32.mrf.mxu0
        %v781 = vadd.f32 0.0, %v780
        %v782 = vpop.f32.mrf.mxu0
        %v783 = vadd.f32 0.0, %v782
        %784 = vmatmul.bf16.gmra.mxu0 %v623
        %v785 = vpop.f32.mrf.mxu0
        %v786 = vadd.f32 0.0, %v785
        %v787 = vpop.f32.mrf.mxu0
        %v788 = vadd.f32 0.0, %v787
        %789 = vmatmul.bf16.gmra.mxu0 %v626
        %v790 = vpop.f32.mrf.mxu0
        %v791 = vadd.f32 0.0, %v790
        %v792 = vpop.f32.mrf.mxu0
        %v793 = vadd.f32 0.0, %v792
        %794 = vmatmul.bf16.gmra.mxu0 %v629
        %v795 = vpop.f32.mrf.mxu0
        %v796 = vadd.f32 0.0, %v795
        %v797 = vpop.f32.mrf.mxu0
        %v798 = vadd.f32 0.0, %v797
        %799 = vdwg.mxu0
        %v800 = vpack.c.bf16 %v641, %v641
        %v801 = vpack.c.bf16 %v643, %v643
        %v802 = vpack.c.bf16 %v646, %v646
        %v803 = vpack.c.bf16 %v648, %v648
        %v804 = vpack.c.bf16 %v651, %v651
        %v805 = vpack.c.bf16 %v653, %v653
        %v806 = vpack.c.bf16 %v656, %v656
        %v807 = vpack.c.bf16 %v658, %v658
        %v808 = vpack.c.bf16 %v661, %v661
        %v809 = vpack.c.bf16 %v663, %v663
        %v810 = vpack.c.bf16 %v666, %v666
        %v811 = vpack.c.bf16 %v668, %v668
        %v812 = vpack.c.bf16 %v671, %v671
        %v813 = vpack.c.bf16 %v673, %v673
        %v814 = vpack.c.bf16 %v676, %v676
        %v815 = vpack.c.bf16 %v678, %v678
        %v816 = vpack.c.bf16 %v681, %v681
        %v817 = vpack.c.bf16 %v683, %v683
        %v818 = vpack.c.bf16 %v686, %v686
        %v819 = vpack.c.bf16 %v688, %v688
        %v820 = vpack.c.bf16 %v691, %v691
        %v821 = vpack.c.bf16 %v693, %v693
        %v822 = vpack.c.bf16 %v696, %v696
        %v823 = vpack.c.bf16 %v698, %v698
        %v824 = vpack.c.bf16 %v701, %v701
        %v825 = vpack.c.bf16 %v703, %v703
        %v826 = vpack.c.bf16 %v706, %v706
        %v827 = vpack.c.bf16 %v708, %v708
        %v828 = vpack.c.bf16 %v711, %v711
        %v829 = vpack.c.bf16 %v713, %v713
        %v830 = vpack.c.bf16 %v716, %v716
        %v831 = vpack.c.bf16 %v718, %v718
        %v832 = vpack.c.bf16 %v721, %v721
        %v833 = vpack.c.bf16 %v723, %v723
        %v834 = vpack.c.bf16 %v726, %v726
        %v835 = vpack.c.bf16 %v728, %v728
        %v836 = vpack.c.bf16 %v731, %v731
        %v837 = vpack.c.bf16 %v733, %v733
        %v838 = vpack.c.bf16 %v736, %v736
        %v839 = vpack.c.bf16 %v738, %v738
        %v840 = vpack.c.bf16 %v741, %v741
        %v841 = vpack.c.bf16 %v743, %v743
        %v842 = vpack.c.bf16 %v746, %v746
        %v843 = vpack.c.bf16 %v748, %v748
        %v844 = vpack.c.bf16 %v751, %v751
        %v845 = vpack.c.bf16 %v753, %v753
        %v846 = vpack.c.bf16 %v756, %v756
        %v847 = vpack.c.bf16 %v758, %v758
        %v848 = vpack.c.bf16 %v761, %v761
        %v849 = vpack.c.bf16 %v763, %v763
        %v850 = vpack.c.bf16 %v766, %v766
        %v851 = vpack.c.bf16 %v768, %v768
        %v852 = vpack.c.bf16 %v771, %v771
        %v853 = vpack.c.bf16 %v773, %v773
        %v854 = vpack.c.bf16 %v776, %v776
        %v855 = vpack.c.bf16 %v778, %v778
        %v856 = vpack.c.bf16 %v781, %v781
        %v857 = vpack.c.bf16 %v783, %v783
        %v858 = vpack.c.bf16 %v786, %v786
        %v859 = vpack.c.bf16 %v788, %v788
        %v860 = vpack.c.bf16 %v791, %v791
        %v861 = vpack.c.bf16 %v793, %v793
        %v862 = vpack.c.bf16 %v796, %v796
        %v863 = vpack.c.bf16 %v798, %v798
        %864 = vst [vmem:[#allocation2] sm:$0xf] %v800
        %865 = vst [vmem:[#allocation2 + $0x4] sm:$0xf] %v801
        %866 = vst [vmem:[#allocation2 + $0x8] sm:$0xf] %v802
        %867 = vst [vmem:[#allocation2 + $0xc] sm:$0xf] %v803
        %868 = vst [vmem:[#allocation2 + $0x10] sm:$0xf] %v804
        %869 = vst [vmem:[#allocation2 + $0x14] sm:$0xf] %v805
        %870 = vst [vmem:[#allocation2 + $0x18] sm:$0xf] %v806
        %871 = vst [vmem:[#allocation2 + $0x1c] sm:$0xf] %v807
        %872 = vst [vmem:[#allocation2 + $0x20] sm:$0xf] %v808
        %873 = vst [vmem:[#allocation2 + $0x24] sm:$0xf] %v809
        %874 = vst [vmem:[#allocation2 + $0x28] sm:$0xf] %v810
        %875 = vst [vmem:[#allocation2 + $0x2c] sm:$0xf] %v811
        %876 = vst [vmem:[#allocation2 + $0x30] sm:$0xf] %v812
        %877 = vst [vmem:[#allocation2 + $0x34] sm:$0xf] %v813
        %878 = vst [vmem:[#allocation2 + $0x38] sm:$0xf] %v814
        %879 = vst [vmem:[#allocation2 + $0x3c] sm:$0xf] %v815
        %880 = vst [vmem:[#allocation2 + $0x40] sm:$0xf] %v816
        %881 = vst [vmem:[#allocation2 + $0x44] sm:$0xf] %v817
        %882 = vst [vmem:[#allocation2 + $0x48] sm:$0xf] %v818
        %883 = vst [vmem:[#allocation2 + $0x4c] sm:$0xf] %v819
        %884 = vst [vmem:[#allocation2 + $0x50] sm:$0xf] %v820
        %885 = vst [vmem:[#allocation2 + $0x54] sm:$0xf] %v821
        %886 = vst [vmem:[#allocation2 + $0x58] sm:$0xf] %v822
        %887 = vst [vmem:[#allocation2 + $0x5c] sm:$0xf] %v823
        %888 = vst [vmem:[#allocation2 + $0x60] sm:$0xf] %v824
        %889 = vst [vmem:[#allocation2 + $0x64] sm:$0xf] %v825
        %890 = vst [vmem:[#allocation2 + $0x68] sm:$0xf] %v826
        %891 = vst [vmem:[#allocation2 + $0x6c] sm:$0xf] %v827
        %892 = vst [vmem:[#allocation2 + $0x70] sm:$0xf] %v828
        %893 = vst [vmem:[#allocation2 + $0x74] sm:$0xf] %v829
        %894 = vst [vmem:[#allocation2 + $0x78] sm:$0xf] %v830
        %895 = vst [vmem:[#allocation2 + $0x7c] sm:$0xf] %v831
        %896 = vst [vmem:[#allocation2 + $0x80] sm:$0xf] %v832
        %897 = vst [vmem:[#allocation2 + $0x84] sm:$0xf] %v833
        %898 = vst [vmem:[#allocation2 + $0x88] sm:$0xf] %v834
        %899 = vst [vmem:[#allocation2 + $0x8c] sm:$0xf] %v835
        %900 = vst [vmem:[#allocation2 + $0x90] sm:$0xf] %v836
        %901 = vst [vmem:[#allocation2 + $0x94] sm:$0xf] %v837
        %902 = vst [vmem:[#allocation2 + $0x98] sm:$0xf] %v838
        %903 = vst [vmem:[#allocation2 + $0x9c] sm:$0xf] %v839
        %904 = vst [vmem:[#allocation2 + $0xa0] sm:$0xf] %v840
        %905 = vst [vmem:[#allocation2 + $0xa4] sm:$0xf] %v841
        %906 = vst [vmem:[#allocation2 + $0xa8] sm:$0xf] %v842
        %907 = vst [vmem:[#allocation2 + $0xac] sm:$0xf] %v843
        %908 = vst [vmem:[#allocation2 + $0xb0] sm:$0xf] %v844
        %909 = vst [vmem:[#allocation2 + $0xb4] sm:$0xf] %v845
        %910 = vst [vmem:[#allocation2 + $0xb8] sm:$0xf] %v846
        %911 = vst [vmem:[#allocation2 + $0xbc] sm:$0xf] %v847
        %912 = vst [vmem:[#allocation2 + $0xc0] sm:$0xf] %v848
        %913 = vst [vmem:[#allocation2 + $0xc4] sm:$0xf] %v849
        %914 = vst [vmem:[#allocation2 + $0xc8] sm:$0xf] %v850
        %915 = vst [vmem:[#allocation2 + $0xcc] sm:$0xf] %v851
        %916 = vst [vmem:[#allocation2 + $0xd0] sm:$0xf] %v852
        %917 = vst [vmem:[#allocation2 + $0xd4] sm:$0xf] %v853
        %918 = vst [vmem:[#allocation2 + $0xd8] sm:$0xf] %v854
        %919 = vst [vmem:[#allocation2 + $0xdc] sm:$0xf] %v855
        %920 = vst [vmem:[#allocation2 + $0xe0] sm:$0xf] %v856
        %921 = vst [vmem:[#allocation2 + $0xe4] sm:$0xf] %v857
        %922 = vst [vmem:[#allocation2 + $0xe8] sm:$0xf] %v858
        %923 = vst [vmem:[#allocation2 + $0xec] sm:$0xf] %v859
        %924 = vst [vmem:[#allocation2 + $0xf0] sm:$0xf] %v860
        %925 = vst [vmem:[#allocation2 + $0xf4] sm:$0xf] %v861
        %926 = vst [vmem:[#allocation2 + $0xf8] sm:$0xf] %v862
        %927 = vst [vmem:[#allocation2 + $0xfc] sm:$0xf] %v863
        %v928 = vld [vmem:[%s232] sm:$0xf]
        %v929 = vld [vmem:[%s232 + $0x4] sm:$0xf]
        %v930 = vld [vmem:[%s232 + $0x8] sm:$0xf]
        %v931 = vld [vmem:[%s232 + $0xc] sm:$0xf]
        %v932 = vld [vmem:[%s232 + $0x10] sm:$0xf]
        %v933 = vld [vmem:[%s232 + $0x14] sm:$0xf]
        %v934 = vld [vmem:[%s232 + $0x18] sm:$0xf]
        %v935 = vld [vmem:[%s232 + $0x1c] sm:$0xf]
        %v936 = vld [vmem:[%s232 + $0x20] sm:$0xf]
        %v937 = vld [vmem:[%s232 + $0x24] sm:$0xf]
        %v938 = vld [vmem:[%s232 + $0x28] sm:$0xf]
        %v939 = vld [vmem:[%s232 + $0x2c] sm:$0xf]
        %v940 = vld [vmem:[%s232 + $0x30] sm:$0xf]
        %v941 = vld [vmem:[%s232 + $0x34] sm:$0xf]
        %v942 = vld [vmem:[%s232 + $0x38] sm:$0xf]
        %v943 = vld [vmem:[%s232 + $0x3c] sm:$0xf]
        %v944 = vld [vmem:[#allocation2] sm:$0xf]
        %v945 = vld [vmem:[#allocation2 + $0x4] sm:$0xf]
        %v946 = vld [vmem:[#allocation2 + $0x8] sm:$0xf]
        %v947 = vld [vmem:[#allocation2 + $0xc] sm:$0xf]
        %v948 = vld [vmem:[#allocation2 + $0x10] sm:$0xf]
        %v949 = vld [vmem:[#allocation2 + $0x14] sm:$0xf]
        %v950 = vld [vmem:[#allocation2 + $0x18] sm:$0xf]
        %v951 = vld [vmem:[#allocation2 + $0x1c] sm:$0xf]
        %v952 = vld [vmem:[#allocation2 + $0x20] sm:$0xf]
        %v953 = vld [vmem:[#allocation2 + $0x24] sm:$0xf]
        %v954 = vld [vmem:[#allocation2 + $0x28] sm:$0xf]
        %v955 = vld [vmem:[#allocation2 + $0x2c] sm:$0xf]
        %v956 = vld [vmem:[#allocation2 + $0x30] sm:$0xf]
        %v957 = vld [vmem:[#allocation2 + $0x34] sm:$0xf]
        %v958 = vld [vmem:[#allocation2 + $0x38] sm:$0xf]
        %v959 = vld [vmem:[#allocation2 + $0x3c] sm:$0xf]
        %v960 = vperm.slane %v294, 0
        %v977 = vunpack.c.l.b16 %v928
        %v978 = vunpack.c.l.b16 %v929
        %v979 = vunpack.c.l.b16 %v930
        %v980 = vunpack.c.l.b16 %v931
        %v981 = vunpack.c.l.b16 %v932
        %v982 = vunpack.c.l.b16 %v933
        %v983 = vunpack.c.l.b16 %v934
        %v984 = vunpack.c.l.b16 %v935
        %v985 = vunpack.c.l.b16 %v936
        %v986 = vunpack.c.l.b16 %v937
        %v987 = vunpack.c.l.b16 %v938
        %v988 = vunpack.c.l.b16 %v939
        %v989 = vunpack.c.l.b16 %v940
        %v990 = vunpack.c.l.b16 %v941
        %v991 = vunpack.c.l.b16 %v942
        %v992 = vunpack.c.l.b16 %v943
        %v993 = vpack.c.b16 %v978, %v977
        %v994 = vpack.c.b16 %v980, %v979
        %v995 = vpack.c.b16 %v982, %v981
        %v996 = vpack.c.b16 %v984, %v983
        %v997 = vpack.c.b16 %v986, %v985
        %v998 = vpack.c.b16 %v988, %v987
        %v999 = vpack.c.b16 %v990, %v989
        %v1000 = vpack.c.b16 %v992, %v991
        %v1025 = vunpack.c.l.b16 %v944
        %v1026 = vunpack.c.l.b16 %v945
        %v1027 = vunpack.c.l.b16 %v946
        %v1028 = vunpack.c.l.b16 %v947
        %v1029 = vunpack.c.l.b16 %v948
        %v1030 = vunpack.c.l.b16 %v949
        %v1031 = vunpack.c.l.b16 %v950
        %v1032 = vunpack.c.l.b16 %v951
        %v1033 = vunpack.c.l.b16 %v952
        %v1034 = vunpack.c.l.b16 %v953
        %v1035 = vunpack.c.l.b16 %v954
        %v1036 = vunpack.c.l.b16 %v955
        %v1037 = vunpack.c.l.b16 %v956
        %v1038 = vunpack.c.l.b16 %v957
        %v1039 = vunpack.c.l.b16 %v958
        %v1040 = vunpack.c.l.b16 %v959
        %v1041 = vpack.c.b16 %v1026, %v1025
        %v1042 = vpack.c.b16 %v1028, %v1027
        %v1043 = vpack.c.b16 %v1030, %v1029
        %v1044 = vpack.c.b16 %v1032, %v1031
        %v1045 = vpack.c.b16 %v1034, %v1033
        %v1046 = vpack.c.b16 %v1036, %v1035
        %v1047 = vpack.c.b16 %v1038, %v1037
        %v1048 = vpack.c.b16 %v1040, %v1039
        %1057 = vmatpush.bf16.msra.mxu0 %v1048
        %1058 = vmatpush.bf16.msra.mxu0 %v1047
        %1059 = vmatpush.bf16.msra.mxu0 %v1046
        %1060 = vmatpush.bf16.msra.mxu0 %v1045
        %1061 = vmatpush.bf16.msra.mxu0 %v1044
        %1062 = vmatpush.bf16.msra.mxu0 %v1043
        %1063 = vmatpush.bf16.msra.mxu0 %v1042
        %1064 = vmatpush.bf16.msra.mxu0 %v1041
        %1065 = vmatmul.bf16.gmra.mxu0 %v993
        %v1066 = vpop.f32.mrf.mxu0
        %v1067 = vadd.f32 %v960, %v1066
        %v1068 = vpop.f32.mrf.mxu0
        %v1069 = vadd.f32 %v960, %v1068
        %1070 = vmatmul.bf16.gmra.mxu0 %v994
        %v1071 = vpop.f32.mrf.mxu0
        %v1072 = vadd.f32 %v960, %v1071
        %v1073 = vpop.f32.mrf.mxu0
        %v1074 = vadd.f32 %v960, %v1073
        %1075 = vmatmul.bf16.gmra.mxu0 %v995
        %v1076 = vpop.f32.mrf.mxu0
        %v1077 = vadd.f32 %v960, %v1076
        %v1078 = vpop.f32.mrf.mxu0
        %v1079 = vadd.f32 %v960, %v1078
        %1080 = vmatmul.bf16.gmra.mxu0 %v996
        %v1081 = vpop.f32.mrf.mxu0
        %v1082 = vadd.f32 %v960, %v1081
        %v1083 = vpop.f32.mrf.mxu0
        %v1084 = vadd.f32 %v960, %v1083
        %1085 = vmatmul.bf16.gmra.mxu0 %v997
        %v1086 = vpop.f32.mrf.mxu0
        %v1087 = vadd.f32 %v960, %v1086
        %v1088 = vpop.f32.mrf.mxu0
        %v1089 = vadd.f32 %v960, %v1088
        %1090 = vmatmul.bf16.gmra.mxu0 %v998
        %v1091 = vpop.f32.mrf.mxu0
        %v1092 = vadd.f32 %v960, %v1091
        %v1093 = vpop.f32.mrf.mxu0
        %v1094 = vadd.f32 %v960, %v1093
        %1095 = vmatmul.bf16.gmra.mxu0 %v999
        %v1096 = vpop.f32.mrf.mxu0
        %v1097 = vadd.f32 %v960, %v1096
        %v1098 = vpop.f32.mrf.mxu0
        %v1099 = vadd.f32 %v960, %v1098
        %1100 = vmatmul.bf16.gmra.mxu0 %v1000
        %v1101 = vpop.f32.mrf.mxu0
        %v1102 = vadd.f32 %v960, %v1101
        %v1103 = vpop.f32.mrf.mxu0
        %v1104 = vadd.f32 %v960, %v1103
        %1105 = vdwg.mxu0
        %v1106 = vmax.f32 %v1067, 0.0
        %v1107 = vmax.f32 %v1069, 0.0
        %v1108 = vmax.f32 %v1072, 0.0
        %v1109 = vmax.f32 %v1074, 0.0
        %v1110 = vmax.f32 %v1077, 0.0
        %v1111 = vmax.f32 %v1079, 0.0
        %v1112 = vmax.f32 %v1082, 0.0
        %v1113 = vmax.f32 %v1084, 0.0
        %v1114 = vmax.f32 %v1087, 0.0
        %v1115 = vmax.f32 %v1089, 0.0
        %v1116 = vmax.f32 %v1092, 0.0
        %v1117 = vmax.f32 %v1094, 0.0
        %v1118 = vmax.f32 %v1097, 0.0
        %v1119 = vmax.f32 %v1099, 0.0
        %v1120 = vmax.f32 %v1102, 0.0
        %v1121 = vmax.f32 %v1104, 0.0
        %v1122 = vpack.c.bf16 %v1106, %v1106
        %v1123 = vpack.c.bf16 %v1107, %v1107
        %v1124 = vpack.c.bf16 %v1108, %v1108
        %v1125 = vpack.c.bf16 %v1109, %v1109
        %v1126 = vpack.c.bf16 %v1110, %v1110
        %v1127 = vpack.c.bf16 %v1111, %v1111
        %v1128 = vpack.c.bf16 %v1112, %v1112
        %v1129 = vpack.c.bf16 %v1113, %v1113
        %v1130 = vpack.c.bf16 %v1114, %v1114
        %v1131 = vpack.c.bf16 %v1115, %v1115
        %v1132 = vpack.c.bf16 %v1116, %v1116
        %v1133 = vpack.c.bf16 %v1117, %v1117
        %v1134 = vpack.c.bf16 %v1118, %v1118
        %v1135 = vpack.c.bf16 %v1119, %v1119
        %v1136 = vpack.c.bf16 %v1120, %v1120
        %v1137 = vpack.c.bf16 %v1121, %v1121
        %1138 = vst [vmem:[#allocation3] sm:$0xf] %v1122
        %1139 = vst [vmem:[#allocation3 + $0x4] sm:$0xf] %v1123
        %1140 = vst [vmem:[#allocation3 + $0x8] sm:$0xf] %v1124
        %1141 = vst [vmem:[#allocation3 + $0xc] sm:$0xf] %v1125
        %1142 = vst [vmem:[#allocation3 + $0x10] sm:$0xf] %v1126
        %1143 = vst [vmem:[#allocation3 + $0x14] sm:$0xf] %v1127
        %1144 = vst [vmem:[#allocation3 + $0x18] sm:$0xf] %v1128
        %1145 = vst [vmem:[#allocation3 + $0x1c] sm:$0xf] %v1129
        %1146 = vst [vmem:[#allocation3 + $0x20] sm:$0xf] %v1130
        %1147 = vst [vmem:[#allocation3 + $0x24] sm:$0xf] %v1131
        %1148 = vst [vmem:[#allocation3 + $0x28] sm:$0xf] %v1132
        %1149 = vst [vmem:[#allocation3 + $0x2c] sm:$0xf] %v1133
        %1150 = vst [vmem:[#allocation3 + $0x30] sm:$0xf] %v1134
        %1151 = vst [vmem:[#allocation3 + $0x34] sm:$0xf] %v1135
        %1152 = vst [vmem:[#allocation3 + $0x38] sm:$0xf] %v1136
        %1153 = vst [vmem:[#allocation3 + $0x3c] sm:$0xf] %v1137
        %s1154 = scalar_lea.vmem %s232, 64
        %v1155 = vld [vmem:[%s1154] sm:$0xf]
        %v1156 = vld [vmem:[%s1154 + $0x4] sm:$0xf]
        %v1157 = vld [vmem:[%s1154 + $0x8] sm:$0xf]
        %v1158 = vld [vmem:[%s1154 + $0xc] sm:$0xf]
        %v1159 = vld [vmem:[%s1154 + $0x10] sm:$0xf]
        %v1160 = vld [vmem:[%s1154 + $0x14] sm:$0xf]
        %v1161 = vld [vmem:[%s1154 + $0x18] sm:$0xf]
        %v1162 = vld [vmem:[%s1154 + $0x1c] sm:$0xf]
        %v1163 = vld [vmem:[%s1154 + $0x20] sm:$0xf]
        %v1164 = vld [vmem:[%s1154 + $0x24] sm:$0xf]
        %v1165 = vld [vmem:[%s1154 + $0x28] sm:$0xf]
        %v1166 = vld [vmem:[%s1154 + $0x2c] sm:$0xf]
        %v1167 = vld [vmem:[%s1154 + $0x30] sm:$0xf]
        %v1168 = vld [vmem:[%s1154 + $0x34] sm:$0xf]
        %v1169 = vld [vmem:[%s1154 + $0x38] sm:$0xf]
        %v1170 = vld [vmem:[%s1154 + $0x3c] sm:$0xf]
        %v1171 = vld [vmem:[#allocation2 + $0x40] sm:$0xf]
        %v1172 = vld [vmem:[#allocation2 + $0x44] sm:$0xf]
        %v1173 = vld [vmem:[#allocation2 + $0x48] sm:$0xf]
        %v1174 = vld [vmem:[#allocation2 + $0x4c] sm:$0xf]
        %v1175 = vld [vmem:[#allocation2 + $0x50] sm:$0xf]
        %v1176 = vld [vmem:[#allocation2 + $0x54] sm:$0xf]
        %v1177 = vld [vmem:[#allocation2 + $0x58] sm:$0xf]
        %v1178 = vld [vmem:[#allocation2 + $0x5c] sm:$0xf]
        %v1179 = vld [vmem:[#allocation2 + $0x60] sm:$0xf]
        %v1180 = vld [vmem:[#allocation2 + $0x64] sm:$0xf]
        %v1181 = vld [vmem:[#allocation2 + $0x68] sm:$0xf]
        %v1182 = vld [vmem:[#allocation2 + $0x6c] sm:$0xf]
        %v1183 = vld [vmem:[#allocation2 + $0x70] sm:$0xf]
        %v1184 = vld [vmem:[#allocation2 + $0x74] sm:$0xf]
        %v1185 = vld [vmem:[#allocation2 + $0x78] sm:$0xf]
        %v1186 = vld [vmem:[#allocation2 + $0x7c] sm:$0xf]
        %v1203 = vunpack.c.l.b16 %v1155
        %v1204 = vunpack.c.l.b16 %v1156
        %v1205 = vunpack.c.l.b16 %v1157
        %v1206 = vunpack.c.l.b16 %v1158
        %v1207 = vunpack.c.l.b16 %v1159
        %v1208 = vunpack.c.l.b16 %v1160
        %v1209 = vunpack.c.l.b16 %v1161
        %v1210 = vunpack.c.l.b16 %v1162
        %v1211 = vunpack.c.l.b16 %v1163
        %v1212 = vunpack.c.l.b16 %v1164
        %v1213 = vunpack.c.l.b16 %v1165
        %v1214 = vunpack.c.l.b16 %v1166
        %v1215 = vunpack.c.l.b16 %v1167
        %v1216 = vunpack.c.l.b16 %v1168
        %v1217 = vunpack.c.l.b16 %v1169
        %v1218 = vunpack.c.l.b16 %v1170
        %v1219 = vpack.c.b16 %v1204, %v1203
        %v1220 = vpack.c.b16 %v1206, %v1205
        %v1221 = vpack.c.b16 %v1208, %v1207
        %v1222 = vpack.c.b16 %v1210, %v1209
        %v1223 = vpack.c.b16 %v1212, %v1211
        %v1224 = vpack.c.b16 %v1214, %v1213
        %v1225 = vpack.c.b16 %v1216, %v1215
        %v1226 = vpack.c.b16 %v1218, %v1217
        %v1251 = vunpack.c.l.b16 %v1171
        %v1252 = vunpack.c.l.b16 %v1172
        %v1253 = vunpack.c.l.b16 %v1173
        %v1254 = vunpack.c.l.b16 %v1174
        %v1255 = vunpack.c.l.b16 %v1175
        %v1256 = vunpack.c.l.b16 %v1176
        %v1257 = vunpack.c.l.b16 %v1177
        %v1258 = vunpack.c.l.b16 %v1178
        %v1259 = vunpack.c.l.b16 %v1179
        %v1260 = vunpack.c.l.b16 %v1180
        %v1261 = vunpack.c.l.b16 %v1181
        %v1262 = vunpack.c.l.b16 %v1182
        %v1263 = vunpack.c.l.b16 %v1183
        %v1264 = vunpack.c.l.b16 %v1184
        %v1265 = vunpack.c.l.b16 %v1185
        %v1266 = vunpack.c.l.b16 %v1186
        %v1267 = vpack.c.b16 %v1252, %v1251
        %v1268 = vpack.c.b16 %v1254, %v1253
        %v1269 = vpack.c.b16 %v1256, %v1255
        %v1270 = vpack.c.b16 %v1258, %v1257
        %v1271 = vpack.c.b16 %v1260, %v1259
        %v1272 = vpack.c.b16 %v1262, %v1261
        %v1273 = vpack.c.b16 %v1264, %v1263
        %v1274 = vpack.c.b16 %v1266, %v1265
        %1283 = vmatpush.bf16.msra.mxu0 %v1274
        %1284 = vmatpush.bf16.msra.mxu0 %v1273
        %1285 = vmatpush.bf16.msra.mxu0 %v1272
        %1286 = vmatpush.bf16.msra.mxu0 %v1271
        %1287 = vmatpush.bf16.msra.mxu0 %v1270
        %1288 = vmatpush.bf16.msra.mxu0 %v1269
        %1289 = vmatpush.bf16.msra.mxu0 %v1268
        %1290 = vmatpush.bf16.msra.mxu0 %v1267
        %1291 = vmatmul.bf16.gmra.mxu0 %v1219
        %v1292 = vpop.f32.mrf.mxu0
        %v1293 = vadd.f32 %v960, %v1292
        %v1294 = vpop.f32.mrf.mxu0
        %v1295 = vadd.f32 %v960, %v1294
        %1296 = vmatmul.bf16.gmra.mxu0 %v1220
        %v1297 = vpop.f32.mrf.mxu0
        %v1298 = vadd.f32 %v960, %v1297
        %v1299 = vpop.f32.mrf.mxu0
        %v1300 = vadd.f32 %v960, %v1299
        %1301 = vmatmul.bf16.gmra.mxu0 %v1221
        %v1302 = vpop.f32.mrf.mxu0
        %v1303 = vadd.f32 %v960, %v1302
        %v1304 = vpop.f32.mrf.mxu0
        %v1305 = vadd.f32 %v960, %v1304
        %1306 = vmatmul.bf16.gmra.mxu0 %v1222
        %v1307 = vpop.f32.mrf.mxu0
        %v1308 = vadd.f32 %v960, %v1307
        %v1309 = vpop.f32.mrf.mxu0
        %v1310 = vadd.f32 %v960, %v1309
        %1311 = vmatmul.bf16.gmra.mxu0 %v1223
        %v1312 = vpop.f32.mrf.mxu0
        %v1313 = vadd.f32 %v960, %v1312
        %v1314 = vpop.f32.mrf.mxu0
        %v1315 = vadd.f32 %v960, %v1314
        %1316 = vmatmul.bf16.gmra.mxu0 %v1224
        %v1317 = vpop.f32.mrf.mxu0
        %v1318 = vadd.f32 %v960, %v1317
        %v1319 = vpop.f32.mrf.mxu0
        %v1320 = vadd.f32 %v960, %v1319
        %1321 = vmatmul.bf16.gmra.mxu0 %v1225
        %v1322 = vpop.f32.mrf.mxu0
        %v1323 = vadd.f32 %v960, %v1322
        %v1324 = vpop.f32.mrf.mxu0
        %v1325 = vadd.f32 %v960, %v1324
        %1326 = vmatmul.bf16.gmra.mxu0 %v1226
        %v1327 = vpop.f32.mrf.mxu0
        %v1328 = vadd.f32 %v960, %v1327
        %v1329 = vpop.f32.mrf.mxu0
        %v1330 = vadd.f32 %v960, %v1329
        %1331 = vdwg.mxu0
        %v1332 = vmax.f32 %v1293, 0.0
        %v1333 = vmax.f32 %v1295, 0.0
        %v1334 = vmax.f32 %v1298, 0.0
        %v1335 = vmax.f32 %v1300, 0.0
        %v1336 = vmax.f32 %v1303, 0.0
        %v1337 = vmax.f32 %v1305, 0.0
        %v1338 = vmax.f32 %v1308, 0.0
        %v1339 = vmax.f32 %v1310, 0.0
        %v1340 = vmax.f32 %v1313, 0.0
        %v1341 = vmax.f32 %v1315, 0.0
        %v1342 = vmax.f32 %v1318, 0.0
        %v1343 = vmax.f32 %v1320, 0.0
        %v1344 = vmax.f32 %v1323, 0.0
        %v1345 = vmax.f32 %v1325, 0.0
        %v1346 = vmax.f32 %v1328, 0.0
        %v1347 = vmax.f32 %v1330, 0.0
        %v1348 = vpack.c.bf16 %v1332, %v1332
        %v1349 = vpack.c.bf16 %v1333, %v1333
        %v1350 = vpack.c.bf16 %v1334, %v1334
        %v1351 = vpack.c.bf16 %v1335, %v1335
        %v1352 = vpack.c.bf16 %v1336, %v1336
        %v1353 = vpack.c.bf16 %v1337, %v1337
        %v1354 = vpack.c.bf16 %v1338, %v1338
        %v1355 = vpack.c.bf16 %v1339, %v1339
        %v1356 = vpack.c.bf16 %v1340, %v1340
        %v1357 = vpack.c.bf16 %v1341, %v1341
        %v1358 = vpack.c.bf16 %v1342, %v1342
        %v1359 = vpack.c.bf16 %v1343, %v1343
        %v1360 = vpack.c.bf16 %v1344, %v1344
        %v1361 = vpack.c.bf16 %v1345, %v1345
        %v1362 = vpack.c.bf16 %v1346, %v1346
        %v1363 = vpack.c.bf16 %v1347, %v1347
        %1364 = vst [vmem:[#allocation3 + $0x40] sm:$0xf] %v1348
        %1365 = vst [vmem:[#allocation3 + $0x44] sm:$0xf] %v1349
        %1366 = vst [vmem:[#allocation3 + $0x48] sm:$0xf] %v1350
        %1367 = vst [vmem:[#allocation3 + $0x4c] sm:$0xf] %v1351
        %1368 = vst [vmem:[#allocation3 + $0x50] sm:$0xf] %v1352
        %1369 = vst [vmem:[#allocation3 + $0x54] sm:$0xf] %v1353
        %1370 = vst [vmem:[#allocation3 + $0x58] sm:$0xf] %v1354
        %1371 = vst [vmem:[#allocation3 + $0x5c] sm:$0xf] %v1355
        %1372 = vst [vmem:[#allocation3 + $0x60] sm:$0xf] %v1356
        %1373 = vst [vmem:[#allocation3 + $0x64] sm:$0xf] %v1357
        %1374 = vst [vmem:[#allocation3 + $0x68] sm:$0xf] %v1358
        %1375 = vst [vmem:[#allocation3 + $0x6c] sm:$0xf] %v1359
        %1376 = vst [vmem:[#allocation3 + $0x70] sm:$0xf] %v1360
        %1377 = vst [vmem:[#allocation3 + $0x74] sm:$0xf] %v1361
        %1378 = vst [vmem:[#allocation3 + $0x78] sm:$0xf] %v1362
        %1379 = vst [vmem:[#allocation3 + $0x7c] sm:$0xf] %v1363
        %s1380 = scalar_lea.vmem %s232, 128
        %v1381 = vld [vmem:[%s1380] sm:$0xf]
        %v1382 = vld [vmem:[%s1380 + $0x4] sm:$0xf]
        %v1383 = vld [vmem:[%s1380 + $0x8] sm:$0xf]
        %v1384 = vld [vmem:[%s1380 + $0xc] sm:$0xf]
        %v1385 = vld [vmem:[%s1380 + $0x10] sm:$0xf]
        %v1386 = vld [vmem:[%s1380 + $0x14] sm:$0xf]
        %v1387 = vld [vmem:[%s1380 + $0x18] sm:$0xf]
        %v1388 = vld [vmem:[%s1380 + $0x1c] sm:$0xf]
        %v1389 = vld [vmem:[%s1380 + $0x20] sm:$0xf]
        %v1390 = vld [vmem:[%s1380 + $0x24] sm:$0xf]
        %v1391 = vld [vmem:[%s1380 + $0x28] sm:$0xf]
        %v1392 = vld [vmem:[%s1380 + $0x2c] sm:$0xf]
        %v1393 = vld [vmem:[%s1380 + $0x30] sm:$0xf]
        %v1394 = vld [vmem:[%s1380 + $0x34] sm:$0xf]
        %v1395 = vld [vmem:[%s1380 + $0x38] sm:$0xf]
        %v1396 = vld [vmem:[%s1380 + $0x3c] sm:$0xf]
        %v1397 = vld [vmem:[#allocation2 + $0x80] sm:$0xf]
        %v1398 = vld [vmem:[#allocation2 + $0x84] sm:$0xf]
        %v1399 = vld [vmem:[#allocation2 + $0x88] sm:$0xf]
        %v1400 = vld [vmem:[#allocation2 + $0x8c] sm:$0xf]
        %v1401 = vld [vmem:[#allocation2 + $0x90] sm:$0xf]
        %v1402 = vld [vmem:[#allocation2 + $0x94] sm:$0xf]
        %v1403 = vld [vmem:[#allocation2 + $0x98] sm:$0xf]
        %v1404 = vld [vmem:[#allocation2 + $0x9c] sm:$0xf]
        %v1405 = vld [vmem:[#allocation2 + $0xa0] sm:$0xf]
        %v1406 = vld [vmem:[#allocation2 + $0xa4] sm:$0xf]
        %v1407 = vld [vmem:[#allocation2 + $0xa8] sm:$0xf]
        %v1408 = vld [vmem:[#allocation2 + $0xac] sm:$0xf]
        %v1409 = vld [vmem:[#allocation2 + $0xb0] sm:$0xf]
        %v1410 = vld [vmem:[#allocation2 + $0xb4] sm:$0xf]
        %v1411 = vld [vmem:[#allocation2 + $0xb8] sm:$0xf]
        %v1412 = vld [vmem:[#allocation2 + $0xbc] sm:$0xf]
        %v1429 = vunpack.c.l.b16 %v1381
        %v1430 = vunpack.c.l.b16 %v1382
        %v1431 = vunpack.c.l.b16 %v1383
        %v1432 = vunpack.c.l.b16 %v1384
        %v1433 = vunpack.c.l.b16 %v1385
        %v1434 = vunpack.c.l.b16 %v1386
        %v1435 = vunpack.c.l.b16 %v1387
        %v1436 = vunpack.c.l.b16 %v1388
        %v1437 = vunpack.c.l.b16 %v1389
        %v1438 = vunpack.c.l.b16 %v1390
        %v1439 = vunpack.c.l.b16 %v1391
        %v1440 = vunpack.c.l.b16 %v1392
        %v1441 = vunpack.c.l.b16 %v1393
        %v1442 = vunpack.c.l.b16 %v1394
        %v1443 = vunpack.c.l.b16 %v1395
        %v1444 = vunpack.c.l.b16 %v1396
        %v1445 = vpack.c.b16 %v1430, %v1429
        %v1446 = vpack.c.b16 %v1432, %v1431
        %v1447 = vpack.c.b16 %v1434, %v1433
        %v1448 = vpack.c.b16 %v1436, %v1435
        %v1449 = vpack.c.b16 %v1438, %v1437
        %v1450 = vpack.c.b16 %v1440, %v1439
        %v1451 = vpack.c.b16 %v1442, %v1441
        %v1452 = vpack.c.b16 %v1444, %v1443
        %v1477 = vunpack.c.l.b16 %v1397
        %v1478 = vunpack.c.l.b16 %v1398
        %v1479 = vunpack.c.l.b16 %v1399
        %v1480 = vunpack.c.l.b16 %v1400
        %v1481 = vunpack.c.l.b16 %v1401
        %v1482 = vunpack.c.l.b16 %v1402
        %v1483 = vunpack.c.l.b16 %v1403
        %v1484 = vunpack.c.l.b16 %v1404
        %v1485 = vunpack.c.l.b16 %v1405
        %v1486 = vunpack.c.l.b16 %v1406
        %v1487 = vunpack.c.l.b16 %v1407
        %v1488 = vunpack.c.l.b16 %v1408
        %v1489 = vunpack.c.l.b16 %v1409
        %v1490 = vunpack.c.l.b16 %v1410
        %v1491 = vunpack.c.l.b16 %v1411
        %v1492 = vunpack.c.l.b16 %v1412
        %v1493 = vpack.c.b16 %v1478, %v1477
        %v1494 = vpack.c.b16 %v1480, %v1479
        %v1495 = vpack.c.b16 %v1482, %v1481
        %v1496 = vpack.c.b16 %v1484, %v1483
        %v1497 = vpack.c.b16 %v1486, %v1485
        %v1498 = vpack.c.b16 %v1488, %v1487
        %v1499 = vpack.c.b16 %v1490, %v1489
        %v1500 = vpack.c.b16 %v1492, %v1491
        %1509 = vmatpush.bf16.msra.mxu0 %v1500
        %1510 = vmatpush.bf16.msra.mxu0 %v1499
        %1511 = vmatpush.bf16.msra.mxu0 %v1498
        %1512 = vmatpush.bf16.msra.mxu0 %v1497
        %1513 = vmatpush.bf16.msra.mxu0 %v1496
        %1514 = vmatpush.bf16.msra.mxu0 %v1495
        %1515 = vmatpush.bf16.msra.mxu0 %v1494
        %1516 = vmatpush.bf16.msra.mxu0 %v1493
        %1517 = vmatmul.bf16.gmra.mxu0 %v1445
        %v1518 = vpop.f32.mrf.mxu0
        %v1519 = vadd.f32 %v960, %v1518
        %v1520 = vpop.f32.mrf.mxu0
        %v1521 = vadd.f32 %v960, %v1520
        %1522 = vmatmul.bf16.gmra.mxu0 %v1446
        %v1523 = vpop.f32.mrf.mxu0
        %v1524 = vadd.f32 %v960, %v1523
        %v1525 = vpop.f32.mrf.mxu0
        %v1526 = vadd.f32 %v960, %v1525
        %1527 = vmatmul.bf16.gmra.mxu0 %v1447
        %v1528 = vpop.f32.mrf.mxu0
        %v1529 = vadd.f32 %v960, %v1528
        %v1530 = vpop.f32.mrf.mxu0
        %v1531 = vadd.f32 %v960, %v1530
        %1532 = vmatmul.bf16.gmra.mxu0 %v1448
        %v1533 = vpop.f32.mrf.mxu0
        %v1534 = vadd.f32 %v960, %v1533
        %v1535 = vpop.f32.mrf.mxu0
        %v1536 = vadd.f32 %v960, %v1535
        %1537 = vmatmul.bf16.gmra.mxu0 %v1449
        %v1538 = vpop.f32.mrf.mxu0
        %v1539 = vadd.f32 %v960, %v1538
        %v1540 = vpop.f32.mrf.mxu0
        %v1541 = vadd.f32 %v960, %v1540
        %1542 = vmatmul.bf16.gmra.mxu0 %v1450
        %v1543 = vpop.f32.mrf.mxu0
        %v1544 = vadd.f32 %v960, %v1543
        %v1545 = vpop.f32.mrf.mxu0
        %v1546 = vadd.f32 %v960, %v1545
        %1547 = vmatmul.bf16.gmra.mxu0 %v1451
        %v1548 = vpop.f32.mrf.mxu0
        %v1549 = vadd.f32 %v960, %v1548
        %v1550 = vpop.f32.mrf.mxu0
        %v1551 = vadd.f32 %v960, %v1550
        %1552 = vmatmul.bf16.gmra.mxu0 %v1452
        %v1553 = vpop.f32.mrf.mxu0
        %v1554 = vadd.f32 %v960, %v1553
        %v1555 = vpop.f32.mrf.mxu0
        %v1556 = vadd.f32 %v960, %v1555
        %1557 = vdwg.mxu0
        %v1558 = vmax.f32 %v1519, 0.0
        %v1559 = vmax.f32 %v1521, 0.0
        %v1560 = vmax.f32 %v1524, 0.0
        %v1561 = vmax.f32 %v1526, 0.0
        %v1562 = vmax.f32 %v1529, 0.0
        %v1563 = vmax.f32 %v1531, 0.0
        %v1564 = vmax.f32 %v1534, 0.0
        %v1565 = vmax.f32 %v1536, 0.0
        %v1566 = vmax.f32 %v1539, 0.0
        %v1567 = vmax.f32 %v1541, 0.0
        %v1568 = vmax.f32 %v1544, 0.0
        %v1569 = vmax.f32 %v1546, 0.0
        %v1570 = vmax.f32 %v1549, 0.0
        %v1571 = vmax.f32 %v1551, 0.0
        %v1572 = vmax.f32 %v1554, 0.0
        %v1573 = vmax.f32 %v1556, 0.0
        %v1574 = vpack.c.bf16 %v1558, %v1558
        %v1575 = vpack.c.bf16 %v1559, %v1559
        %v1576 = vpack.c.bf16 %v1560, %v1560
        %v1577 = vpack.c.bf16 %v1561, %v1561
        %v1578 = vpack.c.bf16 %v1562, %v1562
        %v1579 = vpack.c.bf16 %v1563, %v1563
        %v1580 = vpack.c.bf16 %v1564, %v1564
        %v1581 = vpack.c.bf16 %v1565, %v1565
        %v1582 = vpack.c.bf16 %v1566, %v1566
        %v1583 = vpack.c.bf16 %v1567, %v1567
        %v1584 = vpack.c.bf16 %v1568, %v1568
        %v1585 = vpack.c.bf16 %v1569, %v1569
        %v1586 = vpack.c.bf16 %v1570, %v1570
        %v1587 = vpack.c.bf16 %v1571, %v1571
        %v1588 = vpack.c.bf16 %v1572, %v1572
        %v1589 = vpack.c.bf16 %v1573, %v1573
        %1590 = vst [vmem:[#allocation3 + $0x80] sm:$0xf] %v1574
        %1591 = vst [vmem:[#allocation3 + $0x84] sm:$0xf] %v1575
        %1592 = vst [vmem:[#allocation3 + $0x88] sm:$0xf] %v1576
        %1593 = vst [vmem:[#allocation3 + $0x8c] sm:$0xf] %v1577
        %1594 = vst [vmem:[#allocation3 + $0x90] sm:$0xf] %v1578
        %1595 = vst [vmem:[#allocation3 + $0x94] sm:$0xf] %v1579
        %1596 = vst [vmem:[#allocation3 + $0x98] sm:$0xf] %v1580
        %1597 = vst [vmem:[#allocation3 + $0x9c] sm:$0xf] %v1581
        %1598 = vst [vmem:[#allocation3 + $0xa0] sm:$0xf] %v1582
        %1599 = vst [vmem:[#allocation3 + $0xa4] sm:$0xf] %v1583
        %1600 = vst [vmem:[#allocation3 + $0xa8] sm:$0xf] %v1584
        %1601 = vst [vmem:[#allocation3 + $0xac] sm:$0xf] %v1585
        %1602 = vst [vmem:[#allocation3 + $0xb0] sm:$0xf] %v1586
        %1603 = vst [vmem:[#allocation3 + $0xb4] sm:$0xf] %v1587
        %1604 = vst [vmem:[#allocation3 + $0xb8] sm:$0xf] %v1588
        %1605 = vst [vmem:[#allocation3 + $0xbc] sm:$0xf] %v1589
        %s1606 = scalar_lea.vmem %s232, 192
        %v1607 = vld [vmem:[%s1606] sm:$0xf]
        %v1608 = vld [vmem:[%s1606 + $0x4] sm:$0xf]
        %v1609 = vld [vmem:[%s1606 + $0x8] sm:$0xf]
        %v1610 = vld [vmem:[%s1606 + $0xc] sm:$0xf]
        %v1611 = vld [vmem:[%s1606 + $0x10] sm:$0xf]
        %v1612 = vld [vmem:[%s1606 + $0x14] sm:$0xf]
        %v1613 = vld [vmem:[%s1606 + $0x18] sm:$0xf]
        %v1614 = vld [vmem:[%s1606 + $0x1c] sm:$0xf]
        %v1615 = vld [vmem:[%s1606 + $0x20] sm:$0xf]
        %v1616 = vld [vmem:[%s1606 + $0x24] sm:$0xf]
        %v1617 = vld [vmem:[%s1606 + $0x28] sm:$0xf]
        %v1618 = vld [vmem:[%s1606 + $0x2c] sm:$0xf]
        %v1619 = vld [vmem:[%s1606 + $0x30] sm:$0xf]
        %v1620 = vld [vmem:[%s1606 + $0x34] sm:$0xf]
        %v1621 = vld [vmem:[%s1606 + $0x38] sm:$0xf]
        %v1622 = vld [vmem:[%s1606 + $0x3c] sm:$0xf]
        %v1623 = vld [vmem:[#allocation2 + $0xc0] sm:$0xf]
        %v1624 = vld [vmem:[#allocation2 + $0xc4] sm:$0xf]
        %v1625 = vld [vmem:[#allocation2 + $0xc8] sm:$0xf]
        %v1626 = vld [vmem:[#allocation2 + $0xcc] sm:$0xf]
        %v1627 = vld [vmem:[#allocation2 + $0xd0] sm:$0xf]
        %v1628 = vld [vmem:[#allocation2 + $0xd4] sm:$0xf]
        %v1629 = vld [vmem:[#allocation2 + $0xd8] sm:$0xf]
        %v1630 = vld [vmem:[#allocation2 + $0xdc] sm:$0xf]
        %v1631 = vld [vmem:[#allocation2 + $0xe0] sm:$0xf]
        %v1632 = vld [vmem:[#allocation2 + $0xe4] sm:$0xf]
        %v1633 = vld [vmem:[#allocation2 + $0xe8] sm:$0xf]
        %v1634 = vld [vmem:[#allocation2 + $0xec] sm:$0xf]
        %v1635 = vld [vmem:[#allocation2 + $0xf0] sm:$0xf]
        %v1636 = vld [vmem:[#allocation2 + $0xf4] sm:$0xf]
        %v1637 = vld [vmem:[#allocation2 + $0xf8] sm:$0xf]
        %v1638 = vld [vmem:[#allocation2 + $0xfc] sm:$0xf]
        %v1655 = vunpack.c.l.b16 %v1607
        %v1656 = vunpack.c.l.b16 %v1608
        %v1657 = vunpack.c.l.b16 %v1609
        %v1658 = vunpack.c.l.b16 %v1610
        %v1659 = vunpack.c.l.b16 %v1611
        %v1660 = vunpack.c.l.b16 %v1612
        %v1661 = vunpack.c.l.b16 %v1613
        %v1662 = vunpack.c.l.b16 %v1614
        %v1663 = vunpack.c.l.b16 %v1615
        %v1664 = vunpack.c.l.b16 %v1616
        %v1665 = vunpack.c.l.b16 %v1617
        %v1666 = vunpack.c.l.b16 %v1618
        %v1667 = vunpack.c.l.b16 %v1619
        %v1668 = vunpack.c.l.b16 %v1620
        %v1669 = vunpack.c.l.b16 %v1621
        %v1670 = vunpack.c.l.b16 %v1622
        %v1671 = vpack.c.b16 %v1656, %v1655
        %v1672 = vpack.c.b16 %v1658, %v1657
        %v1673 = vpack.c.b16 %v1660, %v1659
        %v1674 = vpack.c.b16 %v1662, %v1661
        %v1675 = vpack.c.b16 %v1664, %v1663
        %v1676 = vpack.c.b16 %v1666, %v1665
        %v1677 = vpack.c.b16 %v1668, %v1667
        %v1678 = vpack.c.b16 %v1670, %v1669
        %v1703 = vunpack.c.l.b16 %v1623
        %v1704 = vunpack.c.l.b16 %v1624
        %v1705 = vunpack.c.l.b16 %v1625
        %v1706 = vunpack.c.l.b16 %v1626
        %v1707 = vunpack.c.l.b16 %v1627
        %v1708 = vunpack.c.l.b16 %v1628
        %v1709 = vunpack.c.l.b16 %v1629
        %v1710 = vunpack.c.l.b16 %v1630
        %v1711 = vunpack.c.l.b16 %v1631
        %v1712 = vunpack.c.l.b16 %v1632
        %v1713 = vunpack.c.l.b16 %v1633
        %v1714 = vunpack.c.l.b16 %v1634
        %v1715 = vunpack.c.l.b16 %v1635
        %v1716 = vunpack.c.l.b16 %v1636
        %v1717 = vunpack.c.l.b16 %v1637
        %v1718 = vunpack.c.l.b16 %v1638
        %v1719 = vpack.c.b16 %v1704, %v1703
        %v1720 = vpack.c.b16 %v1706, %v1705
        %v1721 = vpack.c.b16 %v1708, %v1707
        %v1722 = vpack.c.b16 %v1710, %v1709
        %v1723 = vpack.c.b16 %v1712, %v1711
        %v1724 = vpack.c.b16 %v1714, %v1713
        %v1725 = vpack.c.b16 %v1716, %v1715
        %v1726 = vpack.c.b16 %v1718, %v1717
        %1735 = vmatpush.bf16.msra.mxu0 %v1726
        %1736 = vmatpush.bf16.msra.mxu0 %v1725
        %1737 = vmatpush.bf16.msra.mxu0 %v1724
        %1738 = vmatpush.bf16.msra.mxu0 %v1723
        %1739 = vmatpush.bf16.msra.mxu0 %v1722
        %1740 = vmatpush.bf16.msra.mxu0 %v1721
        %1741 = vmatpush.bf16.msra.mxu0 %v1720
        %1742 = vmatpush.bf16.msra.mxu0 %v1719
        %1743 = vmatmul.bf16.gmra.mxu0 %v1671
        %v1744 = vpop.f32.mrf.mxu0
        %v1745 = vadd.f32 %v960, %v1744
        %v1746 = vpop.f32.mrf.mxu0
        %v1747 = vadd.f32 %v960, %v1746
        %1748 = vmatmul.bf16.gmra.mxu0 %v1672
        %v1749 = vpop.f32.mrf.mxu0
        %v1750 = vadd.f32 %v960, %v1749
        %v1751 = vpop.f32.mrf.mxu0
        %v1752 = vadd.f32 %v960, %v1751
        %1753 = vmatmul.bf16.gmra.mxu0 %v1673
        %v1754 = vpop.f32.mrf.mxu0
        %v1755 = vadd.f32 %v960, %v1754
        %v1756 = vpop.f32.mrf.mxu0
        %v1757 = vadd.f32 %v960, %v1756
        %1758 = vmatmul.bf16.gmra.mxu0 %v1674
        %v1759 = vpop.f32.mrf.mxu0
        %v1760 = vadd.f32 %v960, %v1759
        %v1761 = vpop.f32.mrf.mxu0
        %v1762 = vadd.f32 %v960, %v1761
        %1763 = vmatmul.bf16.gmra.mxu0 %v1675
        %v1764 = vpop.f32.mrf.mxu0
        %v1765 = vadd.f32 %v960, %v1764
        %v1766 = vpop.f32.mrf.mxu0
        %v1767 = vadd.f32 %v960, %v1766
        %1768 = vmatmul.bf16.gmra.mxu0 %v1676
        %v1769 = vpop.f32.mrf.mxu0
        %v1770 = vadd.f32 %v960, %v1769
        %v1771 = vpop.f32.mrf.mxu0
        %v1772 = vadd.f32 %v960, %v1771
        %1773 = vmatmul.bf16.gmra.mxu0 %v1677
        %v1774 = vpop.f32.mrf.mxu0
        %v1775 = vadd.f32 %v960, %v1774
        %v1776 = vpop.f32.mrf.mxu0
        %v1777 = vadd.f32 %v960, %v1776
        %1778 = vmatmul.bf16.gmra.mxu0 %v1678
        %v1779 = vpop.f32.mrf.mxu0
        %v1780 = vadd.f32 %v960, %v1779
        %v1781 = vpop.f32.mrf.mxu0
        %v1782 = vadd.f32 %v960, %v1781
        %1783 = vdwg.mxu0
        %v1784 = vmax.f32 %v1745, 0.0
        %v1785 = vmax.f32 %v1747, 0.0
        %v1786 = vmax.f32 %v1750, 0.0
        %v1787 = vmax.f32 %v1752, 0.0
        %v1788 = vmax.f32 %v1755, 0.0
        %v1789 = vmax.f32 %v1757, 0.0
        %v1790 = vmax.f32 %v1760, 0.0
        %v1791 = vmax.f32 %v1762, 0.0
        %v1792 = vmax.f32 %v1765, 0.0
        %v1793 = vmax.f32 %v1767, 0.0
        %v1794 = vmax.f32 %v1770, 0.0
        %v1795 = vmax.f32 %v1772, 0.0
        %v1796 = vmax.f32 %v1775, 0.0
        %v1797 = vmax.f32 %v1777, 0.0
        %v1798 = vmax.f32 %v1780, 0.0
        %v1799 = vmax.f32 %v1782, 0.0
        %v1800 = vpack.c.bf16 %v1784, %v1784
        %v1801 = vpack.c.bf16 %v1785, %v1785
        %v1802 = vpack.c.bf16 %v1786, %v1786
        %v1803 = vpack.c.bf16 %v1787, %v1787
        %v1804 = vpack.c.bf16 %v1788, %v1788
        %v1805 = vpack.c.bf16 %v1789, %v1789
        %v1806 = vpack.c.bf16 %v1790, %v1790
        %v1807 = vpack.c.bf16 %v1791, %v1791
        %v1808 = vpack.c.bf16 %v1792, %v1792
        %v1809 = vpack.c.bf16 %v1793, %v1793
        %v1810 = vpack.c.bf16 %v1794, %v1794
        %v1811 = vpack.c.bf16 %v1795, %v1795
        %v1812 = vpack.c.bf16 %v1796, %v1796
        %v1813 = vpack.c.bf16 %v1797, %v1797
        %v1814 = vpack.c.bf16 %v1798, %v1798
        %v1815 = vpack.c.bf16 %v1799, %v1799
        %1816 = vst [vmem:[#allocation3 + $0xc0] sm:$0xf] %v1800
        %1817 = vst [vmem:[#allocation3 + $0xc4] sm:$0xf] %v1801
        %1818 = vst [vmem:[#allocation3 + $0xc8] sm:$0xf] %v1802
        %1819 = vst [vmem:[#allocation3 + $0xcc] sm:$0xf] %v1803
        %1820 = vst [vmem:[#allocation3 + $0xd0] sm:$0xf] %v1804
        %1821 = vst [vmem:[#allocation3 + $0xd4] sm:$0xf] %v1805
        %1822 = vst [vmem:[#allocation3 + $0xd8] sm:$0xf] %v1806
        %1823 = vst [vmem:[#allocation3 + $0xdc] sm:$0xf] %v1807
        %1824 = vst [vmem:[#allocation3 + $0xe0] sm:$0xf] %v1808
        %1825 = vst [vmem:[#allocation3 + $0xe4] sm:$0xf] %v1809
        %1826 = vst [vmem:[#allocation3 + $0xe8] sm:$0xf] %v1810
        %1827 = vst [vmem:[#allocation3 + $0xec] sm:$0xf] %v1811
        %1828 = vst [vmem:[#allocation3 + $0xf0] sm:$0xf] %v1812
        %1829 = vst [vmem:[#allocation3 + $0xf4] sm:$0xf] %v1813
        %1830 = vst [vmem:[#allocation3 + $0xf8] sm:$0xf] %v1814
        %1831 = vst [vmem:[#allocation3 + $0xfc] sm:$0xf] %v1815
        %v1832 = vld [vmem:[#allocation3] sm:$0xf]
        %v1833 = vld [vmem:[#allocation3 + $0x4] sm:$0xf]
        %v1834 = vld [vmem:[#allocation3 + $0x8] sm:$0xf]
        %v1835 = vld [vmem:[#allocation3 + $0xc] sm:$0xf]
        %v1836 = vld [vmem:[#allocation3 + $0x10] sm:$0xf]
        %v1837 = vld [vmem:[#allocation3 + $0x14] sm:$0xf]
        %v1838 = vld [vmem:[#allocation3 + $0x18] sm:$0xf]
        %v1839 = vld [vmem:[#allocation3 + $0x1c] sm:$0xf]
        %v1840 = vld [vmem:[#allocation3 + $0x20] sm:$0xf]
        %v1841 = vld [vmem:[#allocation3 + $0x24] sm:$0xf]
        %v1842 = vld [vmem:[#allocation3 + $0x28] sm:$0xf]
        %v1843 = vld [vmem:[#allocation3 + $0x2c] sm:$0xf]
        %v1844 = vld [vmem:[#allocation3 + $0x30] sm:$0xf]
        %v1845 = vld [vmem:[#allocation3 + $0x34] sm:$0xf]
        %v1846 = vld [vmem:[#allocation3 + $0x38] sm:$0xf]
        %v1847 = vld [vmem:[#allocation3 + $0x3c] sm:$0xf]
        %v1848 = vld [vmem:[#allocation3 + $0x40] sm:$0xf]
        %v1849 = vld [vmem:[#allocation3 + $0x44] sm:$0xf]
        %v1850 = vld [vmem:[#allocation3 + $0x48] sm:$0xf]
        %v1851 = vld [vmem:[#allocation3 + $0x4c] sm:$0xf]
        %v1852 = vld [vmem:[#allocation3 + $0x50] sm:$0xf]
        %v1853 = vld [vmem:[#allocation3 + $0x54] sm:$0xf]
        %v1854 = vld [vmem:[#allocation3 + $0x58] sm:$0xf]
        %v1855 = vld [vmem:[#allocation3 + $0x5c] sm:$0xf]
        %v1856 = vld [vmem:[#allocation3 + $0x60] sm:$0xf]
        %v1857 = vld [vmem:[#allocation3 + $0x64] sm:$0xf]
        %v1858 = vld [vmem:[#allocation3 + $0x68] sm:$0xf]
        %v1859 = vld [vmem:[#allocation3 + $0x6c] sm:$0xf]
        %v1860 = vld [vmem:[#allocation3 + $0x70] sm:$0xf]
        %v1861 = vld [vmem:[#allocation3 + $0x74] sm:$0xf]
        %v1862 = vld [vmem:[#allocation3 + $0x78] sm:$0xf]
        %v1863 = vld [vmem:[#allocation3 + $0x7c] sm:$0xf]
        %v1864 = vld [vmem:[#allocation3 + $0x80] sm:$0xf]
        %v1865 = vld [vmem:[#allocation3 + $0x84] sm:$0xf]
        %v1866 = vld [vmem:[#allocation3 + $0x88] sm:$0xf]
        %v1867 = vld [vmem:[#allocation3 + $0x8c] sm:$0xf]
        %v1868 = vld [vmem:[#allocation3 + $0x90] sm:$0xf]
        %v1869 = vld [vmem:[#allocation3 + $0x94] sm:$0xf]
        %v1870 = vld [vmem:[#allocation3 + $0x98] sm:$0xf]
        %v1871 = vld [vmem:[#allocation3 + $0x9c] sm:$0xf]
        %v1872 = vld [vmem:[#allocation3 + $0xa0] sm:$0xf]
        %v1873 = vld [vmem:[#allocation3 + $0xa4] sm:$0xf]
        %v1874 = vld [vmem:[#allocation3 + $0xa8] sm:$0xf]
        %v1875 = vld [vmem:[#allocation3 + $0xac] sm:$0xf]
        %v1876 = vld [vmem:[#allocation3 + $0xb0] sm:$0xf]
        %v1877 = vld [vmem:[#allocation3 + $0xb4] sm:$0xf]
        %v1878 = vld [vmem:[#allocation3 + $0xb8] sm:$0xf]
        %v1879 = vld [vmem:[#allocation3 + $0xbc] sm:$0xf]
        %v1880 = vld [vmem:[#allocation3 + $0xc0] sm:$0xf]
        %v1881 = vld [vmem:[#allocation3 + $0xc4] sm:$0xf]
        %v1882 = vld [vmem:[#allocation3 + $0xc8] sm:$0xf]
        %v1883 = vld [vmem:[#allocation3 + $0xcc] sm:$0xf]
        %v1884 = vld [vmem:[#allocation3 + $0xd0] sm:$0xf]
        %v1885 = vld [vmem:[#allocation3 + $0xd4] sm:$0xf]
        %v1886 = vld [vmem:[#allocation3 + $0xd8] sm:$0xf]
        %v1887 = vld [vmem:[#allocation3 + $0xdc] sm:$0xf]
        %v1888 = vld [vmem:[#allocation3 + $0xe0] sm:$0xf]
        %v1889 = vld [vmem:[#allocation3 + $0xe4] sm:$0xf]
        %v1890 = vld [vmem:[#allocation3 + $0xe8] sm:$0xf]
        %v1891 = vld [vmem:[#allocation3 + $0xec] sm:$0xf]
        %v1892 = vld [vmem:[#allocation3 + $0xf0] sm:$0xf]
        %v1893 = vld [vmem:[#allocation3 + $0xf4] sm:$0xf]
        %v1894 = vld [vmem:[#allocation3 + $0xf8] sm:$0xf]
        %v1895 = vld [vmem:[#allocation3 + $0xfc] sm:$0xf]
        %v1960 = vunpack.c.l.b16 %v1832
        %v1961 = vunpack.c.l.b16 %v1833
        %v1962 = vunpack.c.l.b16 %v1834
        %v1963 = vunpack.c.l.b16 %v1835
        %v1964 = vunpack.c.l.b16 %v1836
        %v1965 = vunpack.c.l.b16 %v1837
        %v1966 = vunpack.c.l.b16 %v1838
        %v1967 = vunpack.c.l.b16 %v1839
        %v1968 = vunpack.c.l.b16 %v1840
        %v1969 = vunpack.c.l.b16 %v1841
        %v1970 = vunpack.c.l.b16 %v1842
        %v1971 = vunpack.c.l.b16 %v1843
        %v1972 = vunpack.c.l.b16 %v1844
        %v1973 = vunpack.c.l.b16 %v1845
        %v1974 = vunpack.c.l.b16 %v1846
        %v1975 = vunpack.c.l.b16 %v1847
        %v1976 = vunpack.c.l.b16 %v1848
        %v1977 = vunpack.c.l.b16 %v1849
        %v1978 = vunpack.c.l.b16 %v1850
        %v1979 = vunpack.c.l.b16 %v1851
        %v1980 = vunpack.c.l.b16 %v1852
        %v1981 = vunpack.c.l.b16 %v1853
        %v1982 = vunpack.c.l.b16 %v1854
        %v1983 = vunpack.c.l.b16 %v1855
        %v1984 = vunpack.c.l.b16 %v1856
        %v1985 = vunpack.c.l.b16 %v1857
        %v1986 = vunpack.c.l.b16 %v1858
        %v1987 = vunpack.c.l.b16 %v1859
        %v1988 = vunpack.c.l.b16 %v1860
        %v1989 = vunpack.c.l.b16 %v1861
        %v1990 = vunpack.c.l.b16 %v1862
        %v1991 = vunpack.c.l.b16 %v1863
        %v1992 = vunpack.c.l.b16 %v1864
        %v1993 = vunpack.c.l.b16 %v1865
        %v1994 = vunpack.c.l.b16 %v1866
        %v1995 = vunpack.c.l.b16 %v1867
        %v1996 = vunpack.c.l.b16 %v1868
        %v1997 = vunpack.c.l.b16 %v1869
        %v1998 = vunpack.c.l.b16 %v1870
        %v1999 = vunpack.c.l.b16 %v1871
        %v2000 = vunpack.c.l.b16 %v1872
        %v2001 = vunpack.c.l.b16 %v1873
        %v2002 = vunpack.c.l.b16 %v1874
        %v2003 = vunpack.c.l.b16 %v1875
        %v2004 = vunpack.c.l.b16 %v1876
        %v2005 = vunpack.c.l.b16 %v1877
        %v2006 = vunpack.c.l.b16 %v1878
        %v2007 = vunpack.c.l.b16 %v1879
        %v2008 = vunpack.c.l.b16 %v1880
        %v2009 = vunpack.c.l.b16 %v1881
        %v2010 = vunpack.c.l.b16 %v1882
        %v2011 = vunpack.c.l.b16 %v1883
        %v2012 = vunpack.c.l.b16 %v1884
        %v2013 = vunpack.c.l.b16 %v1885
        %v2014 = vunpack.c.l.b16 %v1886
        %v2015 = vunpack.c.l.b16 %v1887
        %v2016 = vunpack.c.l.b16 %v1888
        %v2017 = vunpack.c.l.b16 %v1889
        %v2018 = vunpack.c.l.b16 %v1890
        %v2019 = vunpack.c.l.b16 %v1891
        %v2020 = vunpack.c.l.b16 %v1892
        %v2021 = vunpack.c.l.b16 %v1893
        %v2022 = vunpack.c.l.b16 %v1894
        %v2023 = vunpack.c.l.b16 %v1895
        %v2024 = vpack.c.b16 %v1961, %v1960
        %v2025 = vpack.c.b16 %v1963, %v1962
        %v2026 = vpack.c.b16 %v1965, %v1964
        %v2027 = vpack.c.b16 %v1967, %v1966
        %v2028 = vpack.c.b16 %v1969, %v1968
        %v2029 = vpack.c.b16 %v1971, %v1970
        %v2030 = vpack.c.b16 %v1973, %v1972
        %v2031 = vpack.c.b16 %v1975, %v1974
        %v2032 = vpack.c.b16 %v1977, %v1976
        %v2033 = vpack.c.b16 %v1979, %v1978
        %v2034 = vpack.c.b16 %v1981, %v1980
        %v2035 = vpack.c.b16 %v1983, %v1982
        %v2036 = vpack.c.b16 %v1985, %v1984
        %v2037 = vpack.c.b16 %v1987, %v1986
        %v2038 = vpack.c.b16 %v1989, %v1988
        %v2039 = vpack.c.b16 %v1991, %v1990
        %v2040 = vpack.c.b16 %v1993, %v1992
        %v2041 = vpack.c.b16 %v1995, %v1994
        %v2042 = vpack.c.b16 %v1997, %v1996
        %v2043 = vpack.c.b16 %v1999, %v1998
        %v2044 = vpack.c.b16 %v2001, %v2000
        %v2045 = vpack.c.b16 %v2003, %v2002
        %v2046 = vpack.c.b16 %v2005, %v2004
        %v2047 = vpack.c.b16 %v2007, %v2006
        %v2048 = vpack.c.b16 %v2009, %v2008
        %v2049 = vpack.c.b16 %v2011, %v2010
        %v2050 = vpack.c.b16 %v2013, %v2012
        %v2051 = vpack.c.b16 %v2015, %v2014
        %v2052 = vpack.c.b16 %v2017, %v2016
        %v2053 = vpack.c.b16 %v2019, %v2018
        %v2054 = vpack.c.b16 %v2021, %v2020
        %v2055 = vpack.c.b16 %v2023, %v2022
        %v2104 = vunpack.c.l.b16 %v246
        %v2105 = vunpack.c.l.b16 %v247
        %v2106 = vunpack.c.l.b16 %v248
        %v2107 = vunpack.c.l.b16 %v249
        %v2108 = vunpack.c.l.b16 %v250
        %v2109 = vunpack.c.l.b16 %v251
        %v2110 = vunpack.c.l.b16 %v252
        %v2111 = vunpack.c.l.b16 %v253
        %v2112 = vunpack.c.l.b16 %v254
        %v2113 = vunpack.c.l.b16 %v255
        %v2114 = vunpack.c.l.b16 %v256
        %v2115 = vunpack.c.l.b16 %v257
        %v2116 = vunpack.c.l.b16 %v258
        %v2117 = vunpack.c.l.b16 %v259
        %v2118 = vunpack.c.l.b16 %v260
        %v2119 = vunpack.c.l.b16 %v261
        %v2120 = vpack.c.b16 %v2105, %v2104
        %v2121 = vpack.c.b16 %v2107, %v2106
        %v2122 = vpack.c.b16 %v2109, %v2108
        %v2123 = vpack.c.b16 %v2111, %v2110
        %v2124 = vpack.c.b16 %v2113, %v2112
        %v2125 = vpack.c.b16 %v2115, %v2114
        %v2126 = vpack.c.b16 %v2117, %v2116
        %v2127 = vpack.c.b16 %v2119, %v2118
        %2136 = vmatpush.bf16.msra.mxu0 %v2127
        %2137 = vmatpush.bf16.msra.mxu0 %v2126
        %2138 = vmatpush.bf16.msra.mxu0 %v2125
        %2139 = vmatpush.bf16.msra.mxu0 %v2124
        %2140 = vmatpush.bf16.msra.mxu0 %v2123
        %2141 = vmatpush.bf16.msra.mxu0 %v2122
        %2142 = vmatpush.bf16.msra.mxu0 %v2121
        %2143 = vmatpush.bf16.msra.mxu0 %v2120
        %2144 = vmatmul.bf16.gmra.mxu0 %v2024
        %v2145 = vpop.f32.mrf.mxu0
        %v2146 = vadd.f32 0.0, %v2145
        %v2147 = vpop.f32.mrf.mxu0
        %v2148 = vadd.f32 0.0, %v2147
        %2149 = vmatmul.bf16.gmra.mxu0 %v2025
        %v2150 = vpop.f32.mrf.mxu0
        %v2151 = vadd.f32 0.0, %v2150
        %v2152 = vpop.f32.mrf.mxu0
        %v2153 = vadd.f32 0.0, %v2152
        %2154 = vmatmul.bf16.gmra.mxu0 %v2026
        %v2155 = vpop.f32.mrf.mxu0
        %v2156 = vadd.f32 0.0, %v2155
        %v2157 = vpop.f32.mrf.mxu0
        %v2158 = vadd.f32 0.0, %v2157
        %2159 = vmatmul.bf16.gmra.mxu0 %v2027
        %v2160 = vpop.f32.mrf.mxu0
        %v2161 = vadd.f32 0.0, %v2160
        %v2162 = vpop.f32.mrf.mxu0
        %v2163 = vadd.f32 0.0, %v2162
        %2164 = vmatmul.bf16.gmra.mxu0 %v2028
        %v2165 = vpop.f32.mrf.mxu0
        %v2166 = vadd.f32 0.0, %v2165
        %v2167 = vpop.f32.mrf.mxu0
        %v2168 = vadd.f32 0.0, %v2167
        %2169 = vmatmul.bf16.gmra.mxu0 %v2029
        %v2170 = vpop.f32.mrf.mxu0
        %v2171 = vadd.f32 0.0, %v2170
        %v2172 = vpop.f32.mrf.mxu0
        %v2173 = vadd.f32 0.0, %v2172
        %2174 = vmatmul.bf16.gmra.mxu0 %v2030
        %v2175 = vpop.f32.mrf.mxu0
        %v2176 = vadd.f32 0.0, %v2175
        %v2177 = vpop.f32.mrf.mxu0
        %v2178 = vadd.f32 0.0, %v2177
        %2179 = vmatmul.bf16.gmra.mxu0 %v2031
        %v2180 = vpop.f32.mrf.mxu0
        %v2181 = vadd.f32 0.0, %v2180
        %v2182 = vpop.f32.mrf.mxu0
        %v2183 = vadd.f32 0.0, %v2182
        %2184 = vmatmul.bf16.gmra.mxu0 %v2032
        %v2185 = vpop.f32.mrf.mxu0
        %v2186 = vadd.f32 0.0, %v2185
        %v2187 = vpop.f32.mrf.mxu0
        %v2188 = vadd.f32 0.0, %v2187
        %2189 = vmatmul.bf16.gmra.mxu0 %v2033
        %v2190 = vpop.f32.mrf.mxu0
        %v2191 = vadd.f32 0.0, %v2190
        %v2192 = vpop.f32.mrf.mxu0
        %v2193 = vadd.f32 0.0, %v2192
        %2194 = vmatmul.bf16.gmra.mxu0 %v2034
        %v2195 = vpop.f32.mrf.mxu0
        %v2196 = vadd.f32 0.0, %v2195
        %v2197 = vpop.f32.mrf.mxu0
        %v2198 = vadd.f32 0.0, %v2197
        %2199 = vmatmul.bf16.gmra.mxu0 %v2035
        %v2200 = vpop.f32.mrf.mxu0
        %v2201 = vadd.f32 0.0, %v2200
        %v2202 = vpop.f32.mrf.mxu0
        %v2203 = vadd.f32 0.0, %v2202
        %2204 = vmatmul.bf16.gmra.mxu0 %v2036
        %v2205 = vpop.f32.mrf.mxu0
        %v2206 = vadd.f32 0.0, %v2205
        %v2207 = vpop.f32.mrf.mxu0
        %v2208 = vadd.f32 0.0, %v2207
        %2209 = vmatmul.bf16.gmra.mxu0 %v2037
        %v2210 = vpop.f32.mrf.mxu0
        %v2211 = vadd.f32 0.0, %v2210
        %v2212 = vpop.f32.mrf.mxu0
        %v2213 = vadd.f32 0.0, %v2212
        %2214 = vmatmul.bf16.gmra.mxu0 %v2038
        %v2215 = vpop.f32.mrf.mxu0
        %v2216 = vadd.f32 0.0, %v2215
        %v2217 = vpop.f32.mrf.mxu0
        %v2218 = vadd.f32 0.0, %v2217
        %2219 = vmatmul.bf16.gmra.mxu0 %v2039
        %v2220 = vpop.f32.mrf.mxu0
        %v2221 = vadd.f32 0.0, %v2220
        %v2222 = vpop.f32.mrf.mxu0
        %v2223 = vadd.f32 0.0, %v2222
        %2224 = vmatmul.bf16.gmra.mxu0 %v2040
        %v2225 = vpop.f32.mrf.mxu0
        %v2226 = vadd.f32 0.0, %v2225
        %v2227 = vpop.f32.mrf.mxu0
        %v2228 = vadd.f32 0.0, %v2227
        %2229 = vmatmul.bf16.gmra.mxu0 %v2041
        %v2230 = vpop.f32.mrf.mxu0
        %v2231 = vadd.f32 0.0, %v2230
        %v2232 = vpop.f32.mrf.mxu0
        %v2233 = vadd.f32 0.0, %v2232
        %2234 = vmatmul.bf16.gmra.mxu0 %v2042
        %v2235 = vpop.f32.mrf.mxu0
        %v2236 = vadd.f32 0.0, %v2235
        %v2237 = vpop.f32.mrf.mxu0
        %v2238 = vadd.f32 0.0, %v2237
        %2239 = vmatmul.bf16.gmra.mxu0 %v2043
        %v2240 = vpop.f32.mrf.mxu0
        %v2241 = vadd.f32 0.0, %v2240
        %v2242 = vpop.f32.mrf.mxu0
        %v2243 = vadd.f32 0.0, %v2242
        %2244 = vmatmul.bf16.gmra.mxu0 %v2044
        %v2245 = vpop.f32.mrf.mxu0
        %v2246 = vadd.f32 0.0, %v2245
        %v2247 = vpop.f32.mrf.mxu0
        %v2248 = vadd.f32 0.0, %v2247
        %2249 = vmatmul.bf16.gmra.mxu0 %v2045
        %v2250 = vpop.f32.mrf.mxu0
        %v2251 = vadd.f32 0.0, %v2250
        %v2252 = vpop.f32.mrf.mxu0
        %v2253 = vadd.f32 0.0, %v2252
        %2254 = vmatmul.bf16.gmra.mxu0 %v2046
        %v2255 = vpop.f32.mrf.mxu0
        %v2256 = vadd.f32 0.0, %v2255
        %v2257 = vpop.f32.mrf.mxu0
        %v2258 = vadd.f32 0.0, %v2257
        %2259 = vmatmul.bf16.gmra.mxu0 %v2047
        %v2260 = vpop.f32.mrf.mxu0
        %v2261 = vadd.f32 0.0, %v2260
        %v2262 = vpop.f32.mrf.mxu0
        %v2263 = vadd.f32 0.0, %v2262
        %2264 = vmatmul.bf16.gmra.mxu0 %v2048
        %v2265 = vpop.f32.mrf.mxu0
        %v2266 = vadd.f32 0.0, %v2265
        %v2267 = vpop.f32.mrf.mxu0
        %v2268 = vadd.f32 0.0, %v2267
        %2269 = vmatmul.bf16.gmra.mxu0 %v2049
        %v2270 = vpop.f32.mrf.mxu0
        %v2271 = vadd.f32 0.0, %v2270
        %v2272 = vpop.f32.mrf.mxu0
        %v2273 = vadd.f32 0.0, %v2272
        %2274 = vmatmul.bf16.gmra.mxu0 %v2050
        %v2275 = vpop.f32.mrf.mxu0
        %v2276 = vadd.f32 0.0, %v2275
        %v2277 = vpop.f32.mrf.mxu0
        %v2278 = vadd.f32 0.0, %v2277
        %2279 = vmatmul.bf16.gmra.mxu0 %v2051
        %v2280 = vpop.f32.mrf.mxu0
        %v2281 = vadd.f32 0.0, %v2280
        %v2282 = vpop.f32.mrf.mxu0
        %v2283 = vadd.f32 0.0, %v2282
        %2284 = vmatmul.bf16.gmra.mxu0 %v2052
        %v2285 = vpop.f32.mrf.mxu0
        %v2286 = vadd.f32 0.0, %v2285
        %v2287 = vpop.f32.mrf.mxu0
        %v2288 = vadd.f32 0.0, %v2287
        %2289 = vmatmul.bf16.gmra.mxu0 %v2053
        %v2290 = vpop.f32.mrf.mxu0
        %v2291 = vadd.f32 0.0, %v2290
        %v2292 = vpop.f32.mrf.mxu0
        %v2293 = vadd.f32 0.0, %v2292
        %2294 = vmatmul.bf16.gmra.mxu0 %v2054
        %v2295 = vpop.f32.mrf.mxu0
        %v2296 = vadd.f32 0.0, %v2295
        %v2297 = vpop.f32.mrf.mxu0
        %v2298 = vadd.f32 0.0, %v2297
        %2299 = vmatmul.bf16.gmra.mxu0 %v2055
        %v2300 = vpop.f32.mrf.mxu0
        %v2301 = vadd.f32 0.0, %v2300
        %v2302 = vpop.f32.mrf.mxu0
        %v2303 = vadd.f32 0.0, %v2302
        %2304 = vdwg.mxu0
        %v2305 = vpack.c.bf16 %v2146, %v2146
        %v2306 = vpack.c.bf16 %v2148, %v2148
        %v2307 = vpack.c.bf16 %v2151, %v2151
        %v2308 = vpack.c.bf16 %v2153, %v2153
        %v2309 = vpack.c.bf16 %v2156, %v2156
        %v2310 = vpack.c.bf16 %v2158, %v2158
        %v2311 = vpack.c.bf16 %v2161, %v2161
        %v2312 = vpack.c.bf16 %v2163, %v2163
        %v2313 = vpack.c.bf16 %v2166, %v2166
        %v2314 = vpack.c.bf16 %v2168, %v2168
        %v2315 = vpack.c.bf16 %v2171, %v2171
        %v2316 = vpack.c.bf16 %v2173, %v2173
        %v2317 = vpack.c.bf16 %v2176, %v2176
        %v2318 = vpack.c.bf16 %v2178, %v2178
        %v2319 = vpack.c.bf16 %v2181, %v2181
        %v2320 = vpack.c.bf16 %v2183, %v2183
        %v2321 = vpack.c.bf16 %v2186, %v2186
        %v2322 = vpack.c.bf16 %v2188, %v2188
        %v2323 = vpack.c.bf16 %v2191, %v2191
        %v2324 = vpack.c.bf16 %v2193, %v2193
        %v2325 = vpack.c.bf16 %v2196, %v2196
        %v2326 = vpack.c.bf16 %v2198, %v2198
        %v2327 = vpack.c.bf16 %v2201, %v2201
        %v2328 = vpack.c.bf16 %v2203, %v2203
        %v2329 = vpack.c.bf16 %v2206, %v2206
        %v2330 = vpack.c.bf16 %v2208, %v2208
        %v2331 = vpack.c.bf16 %v2211, %v2211
        %v2332 = vpack.c.bf16 %v2213, %v2213
        %v2333 = vpack.c.bf16 %v2216, %v2216
        %v2334 = vpack.c.bf16 %v2218, %v2218
        %v2335 = vpack.c.bf16 %v2221, %v2221
        %v2336 = vpack.c.bf16 %v2223, %v2223
        %v2337 = vpack.c.bf16 %v2226, %v2226
        %v2338 = vpack.c.bf16 %v2228, %v2228
        %v2339 = vpack.c.bf16 %v2231, %v2231
        %v2340 = vpack.c.bf16 %v2233, %v2233
        %v2341 = vpack.c.bf16 %v2236, %v2236
        %v2342 = vpack.c.bf16 %v2238, %v2238
        %v2343 = vpack.c.bf16 %v2241, %v2241
        %v2344 = vpack.c.bf16 %v2243, %v2243
        %v2345 = vpack.c.bf16 %v2246, %v2246
        %v2346 = vpack.c.bf16 %v2248, %v2248
        %v2347 = vpack.c.bf16 %v2251, %v2251
        %v2348 = vpack.c.bf16 %v2253, %v2253
        %v2349 = vpack.c.bf16 %v2256, %v2256
        %v2350 = vpack.c.bf16 %v2258, %v2258
        %v2351 = vpack.c.bf16 %v2261, %v2261
        %v2352 = vpack.c.bf16 %v2263, %v2263
        %v2353 = vpack.c.bf16 %v2266, %v2266
        %v2354 = vpack.c.bf16 %v2268, %v2268
        %v2355 = vpack.c.bf16 %v2271, %v2271
        %v2356 = vpack.c.bf16 %v2273, %v2273
        %v2357 = vpack.c.bf16 %v2276, %v2276
        %v2358 = vpack.c.bf16 %v2278, %v2278
        %v2359 = vpack.c.bf16 %v2281, %v2281
        %v2360 = vpack.c.bf16 %v2283, %v2283
        %v2361 = vpack.c.bf16 %v2286, %v2286
        %v2362 = vpack.c.bf16 %v2288, %v2288
        %v2363 = vpack.c.bf16 %v2291, %v2291
        %v2364 = vpack.c.bf16 %v2293, %v2293
        %v2365 = vpack.c.bf16 %v2296, %v2296
        %v2366 = vpack.c.bf16 %v2298, %v2298
        %v2367 = vpack.c.bf16 %v2301, %v2301
        %v2368 = vpack.c.bf16 %v2303, %v2303
        %2369 = vst [vmem:[#allocation2] sm:$0xf] %v2305
        %2370 = vst [vmem:[#allocation2 + $0x4] sm:$0xf] %v2306
        %2371 = vst [vmem:[#allocation2 + $0x8] sm:$0xf] %v2307
        %2372 = vst [vmem:[#allocation2 + $0xc] sm:$0xf] %v2308
        %2373 = vst [vmem:[#allocation2 + $0x10] sm:$0xf] %v2309
        %2374 = vst [vmem:[#allocation2 + $0x14] sm:$0xf] %v2310
        %2375 = vst [vmem:[#allocation2 + $0x18] sm:$0xf] %v2311
        %2376 = vst [vmem:[#allocation2 + $0x1c] sm:$0xf] %v2312
        %2377 = vst [vmem:[#allocation2 + $0x20] sm:$0xf] %v2313
        %2378 = vst [vmem:[#allocation2 + $0x24] sm:$0xf] %v2314
        %2379 = vst [vmem:[#allocation2 + $0x28] sm:$0xf] %v2315
        %2380 = vst [vmem:[#allocation2 + $0x2c] sm:$0xf] %v2316
        %2381 = vst [vmem:[#allocation2 + $0x30] sm:$0xf] %v2317
        %2382 = vst [vmem:[#allocation2 + $0x34] sm:$0xf] %v2318
        %2383 = vst [vmem:[#allocation2 + $0x38] sm:$0xf] %v2319
        %2384 = vst [vmem:[#allocation2 + $0x3c] sm:$0xf] %v2320
        %2385 = vst [vmem:[#allocation2 + $0x40] sm:$0xf] %v2321
        %2386 = vst [vmem:[#allocation2 + $0x44] sm:$0xf] %v2322
        %2387 = vst [vmem:[#allocation2 + $0x48] sm:$0xf] %v2323
        %2388 = vst [vmem:[#allocation2 + $0x4c] sm:$0xf] %v2324
        %2389 = vst [vmem:[#allocation2 + $0x50] sm:$0xf] %v2325
        %2390 = vst [vmem:[#allocation2 + $0x54] sm:$0xf] %v2326
        %2391 = vst [vmem:[#allocation2 + $0x58] sm:$0xf] %v2327
        %2392 = vst [vmem:[#allocation2 + $0x5c] sm:$0xf] %v2328
        %2393 = vst [vmem:[#allocation2 + $0x60] sm:$0xf] %v2329
        %2394 = vst [vmem:[#allocation2 + $0x64] sm:$0xf] %v2330
        %2395 = vst [vmem:[#allocation2 + $0x68] sm:$0xf] %v2331
        %2396 = vst [vmem:[#allocation2 + $0x6c] sm:$0xf] %v2332
        %2397 = vst [vmem:[#allocation2 + $0x70] sm:$0xf] %v2333
        %2398 = vst [vmem:[#allocation2 + $0x74] sm:$0xf] %v2334
        %2399 = vst [vmem:[#allocation2 + $0x78] sm:$0xf] %v2335
        %2400 = vst [vmem:[#allocation2 + $0x7c] sm:$0xf] %v2336
        %2401 = vst [vmem:[#allocation2 + $0x80] sm:$0xf] %v2337
        %2402 = vst [vmem:[#allocation2 + $0x84] sm:$0xf] %v2338
        %2403 = vst [vmem:[#allocation2 + $0x88] sm:$0xf] %v2339
        %2404 = vst [vmem:[#allocation2 + $0x8c] sm:$0xf] %v2340
        %2405 = vst [vmem:[#allocation2 + $0x90] sm:$0xf] %v2341
        %2406 = vst [vmem:[#allocation2 + $0x94] sm:$0xf] %v2342
        %2407 = vst [vmem:[#allocation2 + $0x98] sm:$0xf] %v2343
        %2408 = vst [vmem:[#allocation2 + $0x9c] sm:$0xf] %v2344
        %2409 = vst [vmem:[#allocation2 + $0xa0] sm:$0xf] %v2345
        %2410 = vst [vmem:[#allocation2 + $0xa4] sm:$0xf] %v2346
        %2411 = vst [vmem:[#allocation2 + $0xa8] sm:$0xf] %v2347
        %2412 = vst [vmem:[#allocation2 + $0xac] sm:$0xf] %v2348
        %2413 = vst [vmem:[#allocation2 + $0xb0] sm:$0xf] %v2349
        %2414 = vst [vmem:[#allocation2 + $0xb4] sm:$0xf] %v2350
        %2415 = vst [vmem:[#allocation2 + $0xb8] sm:$0xf] %v2351
        %2416 = vst [vmem:[#allocation2 + $0xbc] sm:$0xf] %v2352
        %2417 = vst [vmem:[#allocation2 + $0xc0] sm:$0xf] %v2353
        %2418 = vst [vmem:[#allocation2 + $0xc4] sm:$0xf] %v2354
        %2419 = vst [vmem:[#allocation2 + $0xc8] sm:$0xf] %v2355
        %2420 = vst [vmem:[#allocation2 + $0xcc] sm:$0xf] %v2356
        %2421 = vst [vmem:[#allocation2 + $0xd0] sm:$0xf] %v2357
        %2422 = vst [vmem:[#allocation2 + $0xd4] sm:$0xf] %v2358
        %2423 = vst [vmem:[#allocation2 + $0xd8] sm:$0xf] %v2359
        %2424 = vst [vmem:[#allocation2 + $0xdc] sm:$0xf] %v2360
        %2425 = vst [vmem:[#allocation2 + $0xe0] sm:$0xf] %v2361
        %2426 = vst [vmem:[#allocation2 + $0xe4] sm:$0xf] %v2362
        %2427 = vst [vmem:[#allocation2 + $0xe8] sm:$0xf] %v2363
        %2428 = vst [vmem:[#allocation2 + $0xec] sm:$0xf] %v2364
        %2429 = vst [vmem:[#allocation2 + $0xf0] sm:$0xf] %v2365
        %2430 = vst [vmem:[#allocation2 + $0xf4] sm:$0xf] %v2366
        %2431 = vst [vmem:[#allocation2 + $0xf8] sm:$0xf] %v2367
        %2432 = vst [vmem:[#allocation2 + $0xfc] sm:$0xf] %v2368
        %v2433 = vld [vmem:[%s232] sm:$0xf]
        %v2434 = vld [vmem:[%s232 + $0x4] sm:$0xf]
        %v2435 = vld [vmem:[%s232 + $0x8] sm:$0xf]
        %v2436 = vld [vmem:[%s232 + $0xc] sm:$0xf]
        %v2437 = vld [vmem:[%s232 + $0x10] sm:$0xf]
        %v2438 = vld [vmem:[%s232 + $0x14] sm:$0xf]
        %v2439 = vld [vmem:[%s232 + $0x18] sm:$0xf]
        %v2440 = vld [vmem:[%s232 + $0x1c] sm:$0xf]
        %v2441 = vld [vmem:[%s232 + $0x20] sm:$0xf]
        %v2442 = vld [vmem:[%s232 + $0x24] sm:$0xf]
        %v2443 = vld [vmem:[%s232 + $0x28] sm:$0xf]
        %v2444 = vld [vmem:[%s232 + $0x2c] sm:$0xf]
        %v2445 = vld [vmem:[%s232 + $0x30] sm:$0xf]
        %v2446 = vld [vmem:[%s232 + $0x34] sm:$0xf]
        %v2447 = vld [vmem:[%s232 + $0x38] sm:$0xf]
        %v2448 = vld [vmem:[%s232 + $0x3c] sm:$0xf]
        %v2449 = vld [vmem:[#allocation2] sm:$0xf]
        %v2450 = vld [vmem:[#allocation2 + $0x4] sm:$0xf]
        %v2451 = vld [vmem:[#allocation2 + $0x8] sm:$0xf]
        %v2452 = vld [vmem:[#allocation2 + $0xc] sm:$0xf]
        %v2453 = vld [vmem:[#allocation2 + $0x10] sm:$0xf]
        %v2454 = vld [vmem:[#allocation2 + $0x14] sm:$0xf]
        %v2455 = vld [vmem:[#allocation2 + $0x18] sm:$0xf]
        %v2456 = vld [vmem:[#allocation2 + $0x1c] sm:$0xf]
        %v2457 = vld [vmem:[#allocation2 + $0x20] sm:$0xf]
        %v2458 = vld [vmem:[#allocation2 + $0x24] sm:$0xf]
        %v2459 = vld [vmem:[#allocation2 + $0x28] sm:$0xf]
        %v2460 = vld [vmem:[#allocation2 + $0x2c] sm:$0xf]
        %v2461 = vld [vmem:[#allocation2 + $0x30] sm:$0xf]
        %v2462 = vld [vmem:[#allocation2 + $0x34] sm:$0xf]
        %v2463 = vld [vmem:[#allocation2 + $0x38] sm:$0xf]
        %v2464 = vld [vmem:[#allocation2 + $0x3c] sm:$0xf]
        %v2465 = vperm.slane %v295, 0
        %v2482 = vunpack.c.l.b16 %v2433
        %v2483 = vunpack.c.l.b16 %v2434
        %v2484 = vunpack.c.l.b16 %v2435
        %v2485 = vunpack.c.l.b16 %v2436
        %v2486 = vunpack.c.l.b16 %v2437
        %v2487 = vunpack.c.l.b16 %v2438
        %v2488 = vunpack.c.l.b16 %v2439
        %v2489 = vunpack.c.l.b16 %v2440
        %v2490 = vunpack.c.l.b16 %v2441
        %v2491 = vunpack.c.l.b16 %v2442
        %v2492 = vunpack.c.l.b16 %v2443
        %v2493 = vunpack.c.l.b16 %v2444
        %v2494 = vunpack.c.l.b16 %v2445
        %v2495 = vunpack.c.l.b16 %v2446
        %v2496 = vunpack.c.l.b16 %v2447
        %v2497 = vunpack.c.l.b16 %v2448
        %v2498 = vpack.c.b16 %v2483, %v2482
        %v2499 = vpack.c.b16 %v2485, %v2484
        %v2500 = vpack.c.b16 %v2487, %v2486
        %v2501 = vpack.c.b16 %v2489, %v2488
        %v2502 = vpack.c.b16 %v2491, %v2490
        %v2503 = vpack.c.b16 %v2493, %v2492
        %v2504 = vpack.c.b16 %v2495, %v2494
        %v2505 = vpack.c.b16 %v2497, %v2496
        %v2530 = vunpack.c.l.b16 %v2449
        %v2531 = vunpack.c.l.b16 %v2450
        %v2532 = vunpack.c.l.b16 %v2451
        %v2533 = vunpack.c.l.b16 %v2452
        %v2534 = vunpack.c.l.b16 %v2453
        %v2535 = vunpack.c.l.b16 %v2454
        %v2536 = vunpack.c.l.b16 %v2455
        %v2537 = vunpack.c.l.b16 %v2456
        %v2538 = vunpack.c.l.b16 %v2457
        %v2539 = vunpack.c.l.b16 %v2458
        %v2540 = vunpack.c.l.b16 %v2459
        %v2541 = vunpack.c.l.b16 %v2460
        %v2542 = vunpack.c.l.b16 %v2461
        %v2543 = vunpack.c.l.b16 %v2462
        %v2544 = vunpack.c.l.b16 %v2463
        %v2545 = vunpack.c.l.b16 %v2464
        %v2546 = vpack.c.b16 %v2531, %v2530
        %v2547 = vpack.c.b16 %v2533, %v2532
        %v2548 = vpack.c.b16 %v2535, %v2534
        %v2549 = vpack.c.b16 %v2537, %v2536
        %v2550 = vpack.c.b16 %v2539, %v2538
        %v2551 = vpack.c.b16 %v2541, %v2540
        %v2552 = vpack.c.b16 %v2543, %v2542
        %v2553 = vpack.c.b16 %v2545, %v2544
        %2562 = vmatpush.bf16.msra.mxu0 %v2553
        %2563 = vmatpush.bf16.msra.mxu0 %v2552
        %2564 = vmatpush.bf16.msra.mxu0 %v2551
        %2565 = vmatpush.bf16.msra.mxu0 %v2550
        %2566 = vmatpush.bf16.msra.mxu0 %v2549
        %2567 = vmatpush.bf16.msra.mxu0 %v2548
        %2568 = vmatpush.bf16.msra.mxu0 %v2547
        %2569 = vmatpush.bf16.msra.mxu0 %v2546
        %2570 = vmatmul.bf16.gmra.mxu0 %v2498
        %v2571 = vpop.f32.mrf.mxu0
        %v2572 = vadd.f32 %v2465, %v2571
        %v2573 = vpop.f32.mrf.mxu0
        %v2574 = vadd.f32 %v2465, %v2573
        %2575 = vmatmul.bf16.gmra.mxu0 %v2499
        %v2576 = vpop.f32.mrf.mxu0
        %v2577 = vadd.f32 %v2465, %v2576
        %v2578 = vpop.f32.mrf.mxu0
        %v2579 = vadd.f32 %v2465, %v2578
        %2580 = vmatmul.bf16.gmra.mxu0 %v2500
        %v2581 = vpop.f32.mrf.mxu0
        %v2582 = vadd.f32 %v2465, %v2581
        %v2583 = vpop.f32.mrf.mxu0
        %v2584 = vadd.f32 %v2465, %v2583
        %2585 = vmatmul.bf16.gmra.mxu0 %v2501
        %v2586 = vpop.f32.mrf.mxu0
        %v2587 = vadd.f32 %v2465, %v2586
        %v2588 = vpop.f32.mrf.mxu0
        %v2589 = vadd.f32 %v2465, %v2588
        %2590 = vmatmul.bf16.gmra.mxu0 %v2502
        %v2591 = vpop.f32.mrf.mxu0
        %v2592 = vadd.f32 %v2465, %v2591
        %v2593 = vpop.f32.mrf.mxu0
        %v2594 = vadd.f32 %v2465, %v2593
        %2595 = vmatmul.bf16.gmra.mxu0 %v2503
        %v2596 = vpop.f32.mrf.mxu0
        %v2597 = vadd.f32 %v2465, %v2596
        %v2598 = vpop.f32.mrf.mxu0
        %v2599 = vadd.f32 %v2465, %v2598
        %2600 = vmatmul.bf16.gmra.mxu0 %v2504
        %v2601 = vpop.f32.mrf.mxu0
        %v2602 = vadd.f32 %v2465, %v2601
        %v2603 = vpop.f32.mrf.mxu0
        %v2604 = vadd.f32 %v2465, %v2603
        %2605 = vmatmul.bf16.gmra.mxu0 %v2505
        %v2606 = vpop.f32.mrf.mxu0
        %v2607 = vadd.f32 %v2465, %v2606
        %v2608 = vpop.f32.mrf.mxu0
        %v2609 = vadd.f32 %v2465, %v2608
        %2610 = vdwg.mxu0
        %v2611 = vmax.f32 %v2572, 0.0
        %v2612 = vmax.f32 %v2574, 0.0
        %v2613 = vmax.f32 %v2577, 0.0
        %v2614 = vmax.f32 %v2579, 0.0
        %v2615 = vmax.f32 %v2582, 0.0
        %v2616 = vmax.f32 %v2584, 0.0
        %v2617 = vmax.f32 %v2587, 0.0
        %v2618 = vmax.f32 %v2589, 0.0
        %v2619 = vmax.f32 %v2592, 0.0
        %v2620 = vmax.f32 %v2594, 0.0
        %v2621 = vmax.f32 %v2597, 0.0
        %v2622 = vmax.f32 %v2599, 0.0
        %v2623 = vmax.f32 %v2602, 0.0
        %v2624 = vmax.f32 %v2604, 0.0
        %v2625 = vmax.f32 %v2607, 0.0
        %v2626 = vmax.f32 %v2609, 0.0
        %v2627 = vpack.c.bf16 %v2611, %v2611
        %v2628 = vpack.c.bf16 %v2612, %v2612
        %v2629 = vpack.c.bf16 %v2613, %v2613
        %v2630 = vpack.c.bf16 %v2614, %v2614
        %v2631 = vpack.c.bf16 %v2615, %v2615
        %v2632 = vpack.c.bf16 %v2616, %v2616
        %v2633 = vpack.c.bf16 %v2617, %v2617
        %v2634 = vpack.c.bf16 %v2618, %v2618
        %v2635 = vpack.c.bf16 %v2619, %v2619
        %v2636 = vpack.c.bf16 %v2620, %v2620
        %v2637 = vpack.c.bf16 %v2621, %v2621
        %v2638 = vpack.c.bf16 %v2622, %v2622
        %v2639 = vpack.c.bf16 %v2623, %v2623
        %v2640 = vpack.c.bf16 %v2624, %v2624
        %v2641 = vpack.c.bf16 %v2625, %v2625
        %v2642 = vpack.c.bf16 %v2626, %v2626
        %2643 = vst [vmem:[#allocation3] sm:$0xf] %v2627
        %2644 = vst [vmem:[#allocation3 + $0x4] sm:$0xf] %v2628
        %2645 = vst [vmem:[#allocation3 + $0x8] sm:$0xf] %v2629
        %2646 = vst [vmem:[#allocation3 + $0xc] sm:$0xf] %v2630
        %2647 = vst [vmem:[#allocation3 + $0x10] sm:$0xf] %v2631
        %2648 = vst [vmem:[#allocation3 + $0x14] sm:$0xf] %v2632
        %2649 = vst [vmem:[#allocation3 + $0x18] sm:$0xf] %v2633
        %2650 = vst [vmem:[#allocation3 + $0x1c] sm:$0xf] %v2634
        %2651 = vst [vmem:[#allocation3 + $0x20] sm:$0xf] %v2635
        %2652 = vst [vmem:[#allocation3 + $0x24] sm:$0xf] %v2636
        %2653 = vst [vmem:[#allocation3 + $0x28] sm:$0xf] %v2637
        %2654 = vst [vmem:[#allocation3 + $0x2c] sm:$0xf] %v2638
        %2655 = vst [vmem:[#allocation3 + $0x30] sm:$0xf] %v2639
        %2656 = vst [vmem:[#allocation3 + $0x34] sm:$0xf] %v2640
        %2657 = vst [vmem:[#allocation3 + $0x38] sm:$0xf] %v2641
        %2658 = vst [vmem:[#allocation3 + $0x3c] sm:$0xf] %v2642
        %v2659 = vld [vmem:[%s1154] sm:$0xf]
        %v2660 = vld [vmem:[%s1154 + $0x4] sm:$0xf]
        %v2661 = vld [vmem:[%s1154 + $0x8] sm:$0xf]
        %v2662 = vld [vmem:[%s1154 + $0xc] sm:$0xf]
        %v2663 = vld [vmem:[%s1154 + $0x10] sm:$0xf]
        %v2664 = vld [vmem:[%s1154 + $0x14] sm:$0xf]
        %v2665 = vld [vmem:[%s1154 + $0x18] sm:$0xf]
        %v2666 = vld [vmem:[%s1154 + $0x1c] sm:$0xf]
        %v2667 = vld [vmem:[%s1154 + $0x20] sm:$0xf]
        %v2668 = vld [vmem:[%s1154 + $0x24] sm:$0xf]
        %v2669 = vld [vmem:[%s1154 + $0x28] sm:$0xf]
        %v2670 = vld [vmem:[%s1154 + $0x2c] sm:$0xf]
        %v2671 = vld [vmem:[%s1154 + $0x30] sm:$0xf]
        %v2672 = vld [vmem:[%s1154 + $0x34] sm:$0xf]
        %v2673 = vld [vmem:[%s1154 + $0x38] sm:$0xf]
        %v2674 = vld [vmem:[%s1154 + $0x3c] sm:$0xf]
        %v2675 = vld [vmem:[#allocation2 + $0x40] sm:$0xf]
        %v2676 = vld [vmem:[#allocation2 + $0x44] sm:$0xf]
        %v2677 = vld [vmem:[#allocation2 + $0x48] sm:$0xf]
        %v2678 = vld [vmem:[#allocation2 + $0x4c] sm:$0xf]
        %v2679 = vld [vmem:[#allocation2 + $0x50] sm:$0xf]
        %v2680 = vld [vmem:[#allocation2 + $0x54] sm:$0xf]
        %v2681 = vld [vmem:[#allocation2 + $0x58] sm:$0xf]
        %v2682 = vld [vmem:[#allocation2 + $0x5c] sm:$0xf]
        %v2683 = vld [vmem:[#allocation2 + $0x60] sm:$0xf]
        %v2684 = vld [vmem:[#allocation2 + $0x64] sm:$0xf]
        %v2685 = vld [vmem:[#allocation2 + $0x68] sm:$0xf]
        %v2686 = vld [vmem:[#allocation2 + $0x6c] sm:$0xf]
        %v2687 = vld [vmem:[#allocation2 + $0x70] sm:$0xf]
        %v2688 = vld [vmem:[#allocation2 + $0x74] sm:$0xf]
        %v2689 = vld [vmem:[#allocation2 + $0x78] sm:$0xf]
        %v2690 = vld [vmem:[#allocation2 + $0x7c] sm:$0xf]
        %v2707 = vunpack.c.l.b16 %v2659
        %v2708 = vunpack.c.l.b16 %v2660
        %v2709 = vunpack.c.l.b16 %v2661
        %v2710 = vunpack.c.l.b16 %v2662
        %v2711 = vunpack.c.l.b16 %v2663
        %v2712 = vunpack.c.l.b16 %v2664
        %v2713 = vunpack.c.l.b16 %v2665
        %v2714 = vunpack.c.l.b16 %v2666
        %v2715 = vunpack.c.l.b16 %v2667
        %v2716 = vunpack.c.l.b16 %v2668
        %v2717 = vunpack.c.l.b16 %v2669
        %v2718 = vunpack.c.l.b16 %v2670
        %v2719 = vunpack.c.l.b16 %v2671
        %v2720 = vunpack.c.l.b16 %v2672
        %v2721 = vunpack.c.l.b16 %v2673
        %v2722 = vunpack.c.l.b16 %v2674
        %v2723 = vpack.c.b16 %v2708, %v2707
        %v2724 = vpack.c.b16 %v2710, %v2709
        %v2725 = vpack.c.b16 %v2712, %v2711
        %v2726 = vpack.c.b16 %v2714, %v2713
        %v2727 = vpack.c.b16 %v2716, %v2715
        %v2728 = vpack.c.b16 %v2718, %v2717
        %v2729 = vpack.c.b16 %v2720, %v2719
        %v2730 = vpack.c.b16 %v2722, %v2721
        %v2755 = vunpack.c.l.b16 %v2675
        %v2756 = vunpack.c.l.b16 %v2676
        %v2757 = vunpack.c.l.b16 %v2677
        %v2758 = vunpack.c.l.b16 %v2678
        %v2759 = vunpack.c.l.b16 %v2679
        %v2760 = vunpack.c.l.b16 %v2680
        %v2761 = vunpack.c.l.b16 %v2681
        %v2762 = vunpack.c.l.b16 %v2682
        %v2763 = vunpack.c.l.b16 %v2683
        %v2764 = vunpack.c.l.b16 %v2684
        %v2765 = vunpack.c.l.b16 %v2685
        %v2766 = vunpack.c.l.b16 %v2686
        %v2767 = vunpack.c.l.b16 %v2687
        %v2768 = vunpack.c.l.b16 %v2688
        %v2769 = vunpack.c.l.b16 %v2689
        %v2770 = vunpack.c.l.b16 %v2690
        %v2771 = vpack.c.b16 %v2756, %v2755
        %v2772 = vpack.c.b16 %v2758, %v2757
        %v2773 = vpack.c.b16 %v2760, %v2759
        %v2774 = vpack.c.b16 %v2762, %v2761
        %v2775 = vpack.c.b16 %v2764, %v2763
        %v2776 = vpack.c.b16 %v2766, %v2765
        %v2777 = vpack.c.b16 %v2768, %v2767
        %v2778 = vpack.c.b16 %v2770, %v2769
        %2787 = vmatpush.bf16.msra.mxu0 %v2778
        %2788 = vmatpush.bf16.msra.mxu0 %v2777
        %2789 = vmatpush.bf16.msra.mxu0 %v2776
        %2790 = vmatpush.bf16.msra.mxu0 %v2775
        %2791 = vmatpush.bf16.msra.mxu0 %v2774
        %2792 = vmatpush.bf16.msra.mxu0 %v2773
        %2793 = vmatpush.bf16.msra.mxu0 %v2772
        %2794 = vmatpush.bf16.msra.mxu0 %v2771
        %2795 = vmatmul.bf16.gmra.mxu0 %v2723
        %v2796 = vpop.f32.mrf.mxu0
        %v2797 = vadd.f32 %v2465, %v2796
        %v2798 = vpop.f32.mrf.mxu0
        %v2799 = vadd.f32 %v2465, %v2798
        %2800 = vmatmul.bf16.gmra.mxu0 %v2724
        %v2801 = vpop.f32.mrf.mxu0
        %v2802 = vadd.f32 %v2465, %v2801
        %v2803 = vpop.f32.mrf.mxu0
        %v2804 = vadd.f32 %v2465, %v2803
        %2805 = vmatmul.bf16.gmra.mxu0 %v2725
        %v2806 = vpop.f32.mrf.mxu0
        %v2807 = vadd.f32 %v2465, %v2806
        %v2808 = vpop.f32.mrf.mxu0
        %v2809 = vadd.f32 %v2465, %v2808
        %2810 = vmatmul.bf16.gmra.mxu0 %v2726
        %v2811 = vpop.f32.mrf.mxu0
        %v2812 = vadd.f32 %v2465, %v2811
        %v2813 = vpop.f32.mrf.mxu0
        %v2814 = vadd.f32 %v2465, %v2813
        %2815 = vmatmul.bf16.gmra.mxu0 %v2727
        %v2816 = vpop.f32.mrf.mxu0
        %v2817 = vadd.f32 %v2465, %v2816
        %v2818 = vpop.f32.mrf.mxu0
        %v2819 = vadd.f32 %v2465, %v2818
        %2820 = vmatmul.bf16.gmra.mxu0 %v2728
        %v2821 = vpop.f32.mrf.mxu0
        %v2822 = vadd.f32 %v2465, %v2821
        %v2823 = vpop.f32.mrf.mxu0
        %v2824 = vadd.f32 %v2465, %v2823
        %2825 = vmatmul.bf16.gmra.mxu0 %v2729
        %v2826 = vpop.f32.mrf.mxu0
        %v2827 = vadd.f32 %v2465, %v2826
        %v2828 = vpop.f32.mrf.mxu0
        %v2829 = vadd.f32 %v2465, %v2828
        %2830 = vmatmul.bf16.gmra.mxu0 %v2730
        %v2831 = vpop.f32.mrf.mxu0
        %v2832 = vadd.f32 %v2465, %v2831
        %v2833 = vpop.f32.mrf.mxu0
        %v2834 = vadd.f32 %v2465, %v2833
        %2835 = vdwg.mxu0
        %v2836 = vmax.f32 %v2797, 0.0
        %v2837 = vmax.f32 %v2799, 0.0
        %v2838 = vmax.f32 %v2802, 0.0
        %v2839 = vmax.f32 %v2804, 0.0
        %v2840 = vmax.f32 %v2807, 0.0
        %v2841 = vmax.f32 %v2809, 0.0
        %v2842 = vmax.f32 %v2812, 0.0
        %v2843 = vmax.f32 %v2814, 0.0
        %v2844 = vmax.f32 %v2817, 0.0
        %v2845 = vmax.f32 %v2819, 0.0
        %v2846 = vmax.f32 %v2822, 0.0
        %v2847 = vmax.f32 %v2824, 0.0
        %v2848 = vmax.f32 %v2827, 0.0
        %v2849 = vmax.f32 %v2829, 0.0
        %v2850 = vmax.f32 %v2832, 0.0
        %v2851 = vmax.f32 %v2834, 0.0
        %v2852 = vpack.c.bf16 %v2836, %v2836
        %v2853 = vpack.c.bf16 %v2837, %v2837
        %v2854 = vpack.c.bf16 %v2838, %v2838
        %v2855 = vpack.c.bf16 %v2839, %v2839
        %v2856 = vpack.c.bf16 %v2840, %v2840
        %v2857 = vpack.c.bf16 %v2841, %v2841
        %v2858 = vpack.c.bf16 %v2842, %v2842
        %v2859 = vpack.c.bf16 %v2843, %v2843
        %v2860 = vpack.c.bf16 %v2844, %v2844
        %v2861 = vpack.c.bf16 %v2845, %v2845
        %v2862 = vpack.c.bf16 %v2846, %v2846
        %v2863 = vpack.c.bf16 %v2847, %v2847
        %v2864 = vpack.c.bf16 %v2848, %v2848
        %v2865 = vpack.c.bf16 %v2849, %v2849
        %v2866 = vpack.c.bf16 %v2850, %v2850
        %v2867 = vpack.c.bf16 %v2851, %v2851
        %2868 = vst [vmem:[#allocation3 + $0x40] sm:$0xf] %v2852
        %2869 = vst [vmem:[#allocation3 + $0x44] sm:$0xf] %v2853
        %2870 = vst [vmem:[#allocation3 + $0x48] sm:$0xf] %v2854
        %2871 = vst [vmem:[#allocation3 + $0x4c] sm:$0xf] %v2855
        %2872 = vst [vmem:[#allocation3 + $0x50] sm:$0xf] %v2856
        %2873 = vst [vmem:[#allocation3 + $0x54] sm:$0xf] %v2857
        %2874 = vst [vmem:[#allocation3 + $0x58] sm:$0xf] %v2858
        %2875 = vst [vmem:[#allocation3 + $0x5c] sm:$0xf] %v2859
        %2876 = vst [vmem:[#allocation3 + $0x60] sm:$0xf] %v2860
        %2877 = vst [vmem:[#allocation3 + $0x64] sm:$0xf] %v2861
        %2878 = vst [vmem:[#allocation3 + $0x68] sm:$0xf] %v2862
        %2879 = vst [vmem:[#allocation3 + $0x6c] sm:$0xf] %v2863
        %2880 = vst [vmem:[#allocation3 + $0x70] sm:$0xf] %v2864
        %2881 = vst [vmem:[#allocation3 + $0x74] sm:$0xf] %v2865
        %2882 = vst [vmem:[#allocation3 + $0x78] sm:$0xf] %v2866
        %2883 = vst [vmem:[#allocation3 + $0x7c] sm:$0xf] %v2867
        %v2884 = vld [vmem:[%s1380] sm:$0xf]
        %v2885 = vld [vmem:[%s1380 + $0x4] sm:$0xf]
        %v2886 = vld [vmem:[%s1380 + $0x8] sm:$0xf]
        %v2887 = vld [vmem:[%s1380 + $0xc] sm:$0xf]
        %v2888 = vld [vmem:[%s1380 + $0x10] sm:$0xf]
        %v2889 = vld [vmem:[%s1380 + $0x14] sm:$0xf]
        %v2890 = vld [vmem:[%s1380 + $0x18] sm:$0xf]
        %v2891 = vld [vmem:[%s1380 + $0x1c] sm:$0xf]
        %v2892 = vld [vmem:[%s1380 + $0x20] sm:$0xf]
        %v2893 = vld [vmem:[%s1380 + $0x24] sm:$0xf]
        %v2894 = vld [vmem:[%s1380 + $0x28] sm:$0xf]
        %v2895 = vld [vmem:[%s1380 + $0x2c] sm:$0xf]
        %v2896 = vld [vmem:[%s1380 + $0x30] sm:$0xf]
        %v2897 = vld [vmem:[%s1380 + $0x34] sm:$0xf]
        %v2898 = vld [vmem:[%s1380 + $0x38] sm:$0xf]
        %v2899 = vld [vmem:[%s1380 + $0x3c] sm:$0xf]
        %v2900 = vld [vmem:[#allocation2 + $0x80] sm:$0xf]
        %v2901 = vld [vmem:[#allocation2 + $0x84] sm:$0xf]
        %v2902 = vld [vmem:[#allocation2 + $0x88] sm:$0xf]
        %v2903 = vld [vmem:[#allocation2 + $0x8c] sm:$0xf]
        %v2904 = vld [vmem:[#allocation2 + $0x90] sm:$0xf]
        %v2905 = vld [vmem:[#allocation2 + $0x94] sm:$0xf]
        %v2906 = vld [vmem:[#allocation2 + $0x98] sm:$0xf]
        %v2907 = vld [vmem:[#allocation2 + $0x9c] sm:$0xf]
        %v2908 = vld [vmem:[#allocation2 + $0xa0] sm:$0xf]
        %v2909 = vld [vmem:[#allocation2 + $0xa4] sm:$0xf]
        %v2910 = vld [vmem:[#allocation2 + $0xa8] sm:$0xf]
        %v2911 = vld [vmem:[#allocation2 + $0xac] sm:$0xf]
        %v2912 = vld [vmem:[#allocation2 + $0xb0] sm:$0xf]
        %v2913 = vld [vmem:[#allocation2 + $0xb4] sm:$0xf]
        %v2914 = vld [vmem:[#allocation2 + $0xb8] sm:$0xf]
        %v2915 = vld [vmem:[#allocation2 + $0xbc] sm:$0xf]
        %v2932 = vunpack.c.l.b16 %v2884
        %v2933 = vunpack.c.l.b16 %v2885
        %v2934 = vunpack.c.l.b16 %v2886
        %v2935 = vunpack.c.l.b16 %v2887
        %v2936 = vunpack.c.l.b16 %v2888
        %v2937 = vunpack.c.l.b16 %v2889
        %v2938 = vunpack.c.l.b16 %v2890
        %v2939 = vunpack.c.l.b16 %v2891
        %v2940 = vunpack.c.l.b16 %v2892
        %v2941 = vunpack.c.l.b16 %v2893
        %v2942 = vunpack.c.l.b16 %v2894
        %v2943 = vunpack.c.l.b16 %v2895
        %v2944 = vunpack.c.l.b16 %v2896
        %v2945 = vunpack.c.l.b16 %v2897
        %v2946 = vunpack.c.l.b16 %v2898
        %v2947 = vunpack.c.l.b16 %v2899
        %v2948 = vpack.c.b16 %v2933, %v2932
        %v2949 = vpack.c.b16 %v2935, %v2934
        %v2950 = vpack.c.b16 %v2937, %v2936
        %v2951 = vpack.c.b16 %v2939, %v2938
        %v2952 = vpack.c.b16 %v2941, %v2940
        %v2953 = vpack.c.b16 %v2943, %v2942
        %v2954 = vpack.c.b16 %v2945, %v2944
        %v2955 = vpack.c.b16 %v2947, %v2946
        %v2980 = vunpack.c.l.b16 %v2900
        %v2981 = vunpack.c.l.b16 %v2901
        %v2982 = vunpack.c.l.b16 %v2902
        %v2983 = vunpack.c.l.b16 %v2903
        %v2984 = vunpack.c.l.b16 %v2904
        %v2985 = vunpack.c.l.b16 %v2905
        %v2986 = vunpack.c.l.b16 %v2906
        %v2987 = vunpack.c.l.b16 %v2907
        %v2988 = vunpack.c.l.b16 %v2908
        %v2989 = vunpack.c.l.b16 %v2909
        %v2990 = vunpack.c.l.b16 %v2910
        %v2991 = vunpack.c.l.b16 %v2911
        %v2992 = vunpack.c.l.b16 %v2912
        %v2993 = vunpack.c.l.b16 %v2913
        %v2994 = vunpack.c.l.b16 %v2914
        %v2995 = vunpack.c.l.b16 %v2915
        %v2996 = vpack.c.b16 %v2981, %v2980
        %v2997 = vpack.c.b16 %v2983, %v2982
        %v2998 = vpack.c.b16 %v2985, %v2984
        %v2999 = vpack.c.b16 %v2987, %v2986
        %v3000 = vpack.c.b16 %v2989, %v2988
        %v3001 = vpack.c.b16 %v2991, %v2990
        %v3002 = vpack.c.b16 %v2993, %v2992
        %v3003 = vpack.c.b16 %v2995, %v2994
        %3012 = vmatpush.bf16.msra.mxu0 %v3003
        %3013 = vmatpush.bf16.msra.mxu0 %v3002
        %3014 = vmatpush.bf16.msra.mxu0 %v3001
        %3015 = vmatpush.bf16.msra.mxu0 %v3000
        %3016 = vmatpush.bf16.msra.mxu0 %v2999
        %3017 = vmatpush.bf16.msra.mxu0 %v2998
        %3018 = vmatpush.bf16.msra.mxu0 %v2997
        %3019 = vmatpush.bf16.msra.mxu0 %v2996
        %3020 = vmatmul.bf16.gmra.mxu0 %v2948
        %v3021 = vpop.f32.mrf.mxu0
        %v3022 = vadd.f32 %v2465, %v3021
        %v3023 = vpop.f32.mrf.mxu0
        %v3024 = vadd.f32 %v2465, %v3023
        %3025 = vmatmul.bf16.gmra.mxu0 %v2949
        %v3026 = vpop.f32.mrf.mxu0
        %v3027 = vadd.f32 %v2465, %v3026
        %v3028 = vpop.f32.mrf.mxu0
        %v3029 = vadd.f32 %v2465, %v3028
        %3030 = vmatmul.bf16.gmra.mxu0 %v2950
        %v3031 = vpop.f32.mrf.mxu0
        %v3032 = vadd.f32 %v2465, %v3031
        %v3033 = vpop.f32.mrf.mxu0
        %v3034 = vadd.f32 %v2465, %v3033
        %3035 = vmatmul.bf16.gmra.mxu0 %v2951
        %v3036 = vpop.f32.mrf.mxu0
        %v3037 = vadd.f32 %v2465, %v3036
        %v3038 = vpop.f32.mrf.mxu0
        %v3039 = vadd.f32 %v2465, %v3038
        %3040 = vmatmul.bf16.gmra.mxu0 %v2952
        %v3041 = vpop.f32.mrf.mxu0
        %v3042 = vadd.f32 %v2465, %v3041
        %v3043 = vpop.f32.mrf.mxu0
        %v3044 = vadd.f32 %v2465, %v3043
        %3045 = vmatmul.bf16.gmra.mxu0 %v2953
        %v3046 = vpop.f32.mrf.mxu0
        %v3047 = vadd.f32 %v2465, %v3046
        %v3048 = vpop.f32.mrf.mxu0
        %v3049 = vadd.f32 %v2465, %v3048
        %3050 = vmatmul.bf16.gmra.mxu0 %v2954
        %v3051 = vpop.f32.mrf.mxu0
        %v3052 = vadd.f32 %v2465, %v3051
        %v3053 = vpop.f32.mrf.mxu0
        %v3054 = vadd.f32 %v2465, %v3053
        %3055 = vmatmul.bf16.gmra.mxu0 %v2955
        %v3056 = vpop.f32.mrf.mxu0
        %v3057 = vadd.f32 %v2465, %v3056
        %v3058 = vpop.f32.mrf.mxu0
        %v3059 = vadd.f32 %v2465, %v3058
        %3060 = vdwg.mxu0
        %v3061 = vmax.f32 %v3022, 0.0
        %v3062 = vmax.f32 %v3024, 0.0
        %v3063 = vmax.f32 %v3027, 0.0
        %v3064 = vmax.f32 %v3029, 0.0
        %v3065 = vmax.f32 %v3032, 0.0
        %v3066 = vmax.f32 %v3034, 0.0
        %v3067 = vmax.f32 %v3037, 0.0
        %v3068 = vmax.f32 %v3039, 0.0
        %v3069 = vmax.f32 %v3042, 0.0
        %v3070 = vmax.f32 %v3044, 0.0
        %v3071 = vmax.f32 %v3047, 0.0
        %v3072 = vmax.f32 %v3049, 0.0
        %v3073 = vmax.f32 %v3052, 0.0
        %v3074 = vmax.f32 %v3054, 0.0
        %v3075 = vmax.f32 %v3057, 0.0
        %v3076 = vmax.f32 %v3059, 0.0
        %v3077 = vpack.c.bf16 %v3061, %v3061
        %v3078 = vpack.c.bf16 %v3062, %v3062
        %v3079 = vpack.c.bf16 %v3063, %v3063
        %v3080 = vpack.c.bf16 %v3064, %v3064
        %v3081 = vpack.c.bf16 %v3065, %v3065
        %v3082 = vpack.c.bf16 %v3066, %v3066
        %v3083 = vpack.c.bf16 %v3067, %v3067
        %v3084 = vpack.c.bf16 %v3068, %v3068
        %v3085 = vpack.c.bf16 %v3069, %v3069
        %v3086 = vpack.c.bf16 %v3070, %v3070
        %v3087 = vpack.c.bf16 %v3071, %v3071
        %v3088 = vpack.c.bf16 %v3072, %v3072
        %v3089 = vpack.c.bf16 %v3073, %v3073
        %v3090 = vpack.c.bf16 %v3074, %v3074
        %v3091 = vpack.c.bf16 %v3075, %v3075
        %v3092 = vpack.c.bf16 %v3076, %v3076
        %3093 = vst [vmem:[#allocation3 + $0x80] sm:$0xf] %v3077
        %3094 = vst [vmem:[#allocation3 + $0x84] sm:$0xf] %v3078
        %3095 = vst [vmem:[#allocation3 + $0x88] sm:$0xf] %v3079
        %3096 = vst [vmem:[#allocation3 + $0x8c] sm:$0xf] %v3080
        %3097 = vst [vmem:[#allocation3 + $0x90] sm:$0xf] %v3081
        %3098 = vst [vmem:[#allocation3 + $0x94] sm:$0xf] %v3082
        %3099 = vst [vmem:[#allocation3 + $0x98] sm:$0xf] %v3083
        %3100 = vst [vmem:[#allocation3 + $0x9c] sm:$0xf] %v3084
        %3101 = vst [vmem:[#allocation3 + $0xa0] sm:$0xf] %v3085
        %3102 = vst [vmem:[#allocation3 + $0xa4] sm:$0xf] %v3086
        %3103 = vst [vmem:[#allocation3 + $0xa8] sm:$0xf] %v3087
        %3104 = vst [vmem:[#allocation3 + $0xac] sm:$0xf] %v3088
        %3105 = vst [vmem:[#allocation3 + $0xb0] sm:$0xf] %v3089
        %3106 = vst [vmem:[#allocation3 + $0xb4] sm:$0xf] %v3090
        %3107 = vst [vmem:[#allocation3 + $0xb8] sm:$0xf] %v3091
        %3108 = vst [vmem:[#allocation3 + $0xbc] sm:$0xf] %v3092
        %v3109 = vld [vmem:[%s1606] sm:$0xf]
        %v3110 = vld [vmem:[%s1606 + $0x4] sm:$0xf]
        %v3111 = vld [vmem:[%s1606 + $0x8] sm:$0xf]
        %v3112 = vld [vmem:[%s1606 + $0xc] sm:$0xf]
        %v3113 = vld [vmem:[%s1606 + $0x10] sm:$0xf]
        %v3114 = vld [vmem:[%s1606 + $0x14] sm:$0xf]
        %v3115 = vld [vmem:[%s1606 + $0x18] sm:$0xf]
        %v3116 = vld [vmem:[%s1606 + $0x1c] sm:$0xf]
        %v3117 = vld [vmem:[%s1606 + $0x20] sm:$0xf]
        %v3118 = vld [vmem:[%s1606 + $0x24] sm:$0xf]
        %v3119 = vld [vmem:[%s1606 + $0x28] sm:$0xf]
        %v3120 = vld [vmem:[%s1606 + $0x2c] sm:$0xf]
        %v3121 = vld [vmem:[%s1606 + $0x30] sm:$0xf]
        %v3122 = vld [vmem:[%s1606 + $0x34] sm:$0xf]
        %v3123 = vld [vmem:[%s1606 + $0x38] sm:$0xf]
        %v3124 = vld [vmem:[%s1606 + $0x3c] sm:$0xf]
        %v3125 = vld [vmem:[#allocation2 + $0xc0] sm:$0xf]
        %v3126 = vld [vmem:[#allocation2 + $0xc4] sm:$0xf]
        %v3127 = vld [vmem:[#allocation2 + $0xc8] sm:$0xf]
        %v3128 = vld [vmem:[#allocation2 + $0xcc] sm:$0xf]
        %v3129 = vld [vmem:[#allocation2 + $0xd0] sm:$0xf]
        %v3130 = vld [vmem:[#allocation2 + $0xd4] sm:$0xf]
        %v3131 = vld [vmem:[#allocation2 + $0xd8] sm:$0xf]
        %v3132 = vld [vmem:[#allocation2 + $0xdc] sm:$0xf]
        %v3133 = vld [vmem:[#allocation2 + $0xe0] sm:$0xf]
        %v3134 = vld [vmem:[#allocation2 + $0xe4] sm:$0xf]
        %v3135 = vld [vmem:[#allocation2 + $0xe8] sm:$0xf]
        %v3136 = vld [vmem:[#allocation2 + $0xec] sm:$0xf]
        %v3137 = vld [vmem:[#allocation2 + $0xf0] sm:$0xf]
        %v3138 = vld [vmem:[#allocation2 + $0xf4] sm:$0xf]
        %v3139 = vld [vmem:[#allocation2 + $0xf8] sm:$0xf]
        %v3140 = vld [vmem:[#allocation2 + $0xfc] sm:$0xf]
        %v3157 = vunpack.c.l.b16 %v3109
        %v3158 = vunpack.c.l.b16 %v3110
        %v3159 = vunpack.c.l.b16 %v3111
        %v3160 = vunpack.c.l.b16 %v3112
        %v3161 = vunpack.c.l.b16 %v3113
        %v3162 = vunpack.c.l.b16 %v3114
        %v3163 = vunpack.c.l.b16 %v3115
        %v3164 = vunpack.c.l.b16 %v3116
        %v3165 = vunpack.c.l.b16 %v3117
        %v3166 = vunpack.c.l.b16 %v3118
        %v3167 = vunpack.c.l.b16 %v3119
        %v3168 = vunpack.c.l.b16 %v3120
        %v3169 = vunpack.c.l.b16 %v3121
        %v3170 = vunpack.c.l.b16 %v3122
        %v3171 = vunpack.c.l.b16 %v3123
        %v3172 = vunpack.c.l.b16 %v3124
        %v3173 = vpack.c.b16 %v3158, %v3157
        %v3174 = vpack.c.b16 %v3160, %v3159
        %v3175 = vpack.c.b16 %v3162, %v3161
        %v3176 = vpack.c.b16 %v3164, %v3163
        %v3177 = vpack.c.b16 %v3166, %v3165
        %v3178 = vpack.c.b16 %v3168, %v3167
        %v3179 = vpack.c.b16 %v3170, %v3169
        %v3180 = vpack.c.b16 %v3172, %v3171
        %v3205 = vunpack.c.l.b16 %v3125
        %v3206 = vunpack.c.l.b16 %v3126
        %v3207 = vunpack.c.l.b16 %v3127
        %v3208 = vunpack.c.l.b16 %v3128
        %v3209 = vunpack.c.l.b16 %v3129
        %v3210 = vunpack.c.l.b16 %v3130
        %v3211 = vunpack.c.l.b16 %v3131
        %v3212 = vunpack.c.l.b16 %v3132
        %v3213 = vunpack.c.l.b16 %v3133
        %v3214 = vunpack.c.l.b16 %v3134
        %v3215 = vunpack.c.l.b16 %v3135
        %v3216 = vunpack.c.l.b16 %v3136
        %v3217 = vunpack.c.l.b16 %v3137
        %v3218 = vunpack.c.l.b16 %v3138
        %v3219 = vunpack.c.l.b16 %v3139
        %v3220 = vunpack.c.l.b16 %v3140
        %v3221 = vpack.c.b16 %v3206, %v3205
        %v3222 = vpack.c.b16 %v3208, %v3207
        %v3223 = vpack.c.b16 %v3210, %v3209
        %v3224 = vpack.c.b16 %v3212, %v3211
        %v3225 = vpack.c.b16 %v3214, %v3213
        %v3226 = vpack.c.b16 %v3216, %v3215
        %v3227 = vpack.c.b16 %v3218, %v3217
        %v3228 = vpack.c.b16 %v3220, %v3219
        %3237 = vmatpush.bf16.msra.mxu0 %v3228
        %3238 = vmatpush.bf16.msra.mxu0 %v3227
        %3239 = vmatpush.bf16.msra.mxu0 %v3226
        %3240 = vmatpush.bf16.msra.mxu0 %v3225
        %3241 = vmatpush.bf16.msra.mxu0 %v3224
        %3242 = vmatpush.bf16.msra.mxu0 %v3223
        %3243 = vmatpush.bf16.msra.mxu0 %v3222
        %3244 = vmatpush.bf16.msra.mxu0 %v3221
        %3245 = vmatmul.bf16.gmra.mxu0 %v3173
        %v3246 = vpop.f32.mrf.mxu0
        %v3247 = vadd.f32 %v2465, %v3246
        %v3248 = vpop.f32.mrf.mxu0
        %v3249 = vadd.f32 %v2465, %v3248
        %3250 = vmatmul.bf16.gmra.mxu0 %v3174
        %v3251 = vpop.f32.mrf.mxu0
        %v3252 = vadd.f32 %v2465, %v3251
        %v3253 = vpop.f32.mrf.mxu0
        %v3254 = vadd.f32 %v2465, %v3253
        %3255 = vmatmul.bf16.gmra.mxu0 %v3175
        %v3256 = vpop.f32.mrf.mxu0
        %v3257 = vadd.f32 %v2465, %v3256
        %v3258 = vpop.f32.mrf.mxu0
        %v3259 = vadd.f32 %v2465, %v3258
        %3260 = vmatmul.bf16.gmra.mxu0 %v3176
        %v3261 = vpop.f32.mrf.mxu0
        %v3262 = vadd.f32 %v2465, %v3261
        %v3263 = vpop.f32.mrf.mxu0
        %v3264 = vadd.f32 %v2465, %v3263
        %3265 = vmatmul.bf16.gmra.mxu0 %v3177
        %v3266 = vpop.f32.mrf.mxu0
        %v3267 = vadd.f32 %v2465, %v3266
        %v3268 = vpop.f32.mrf.mxu0
        %v3269 = vadd.f32 %v2465, %v3268
        %3270 = vmatmul.bf16.gmra.mxu0 %v3178
        %v3271 = vpop.f32.mrf.mxu0
        %v3272 = vadd.f32 %v2465, %v3271
        %v3273 = vpop.f32.mrf.mxu0
        %v3274 = vadd.f32 %v2465, %v3273
        %3275 = vmatmul.bf16.gmra.mxu0 %v3179
        %v3276 = vpop.f32.mrf.mxu0
        %v3277 = vadd.f32 %v2465, %v3276
        %v3278 = vpop.f32.mrf.mxu0
        %v3279 = vadd.f32 %v2465, %v3278
        %3280 = vmatmul.bf16.gmra.mxu0 %v3180
        %v3281 = vpop.f32.mrf.mxu0
        %v3282 = vadd.f32 %v2465, %v3281
        %v3283 = vpop.f32.mrf.mxu0
        %v3284 = vadd.f32 %v2465, %v3283
        %3285 = vdwg.mxu0
        %v3286 = vmax.f32 %v3247, 0.0
        %v3287 = vmax.f32 %v3249, 0.0
        %v3288 = vmax.f32 %v3252, 0.0
        %v3289 = vmax.f32 %v3254, 0.0
        %v3290 = vmax.f32 %v3257, 0.0
        %v3291 = vmax.f32 %v3259, 0.0
        %v3292 = vmax.f32 %v3262, 0.0
        %v3293 = vmax.f32 %v3264, 0.0
        %v3294 = vmax.f32 %v3267, 0.0
        %v3295 = vmax.f32 %v3269, 0.0
        %v3296 = vmax.f32 %v3272, 0.0
        %v3297 = vmax.f32 %v3274, 0.0
        %v3298 = vmax.f32 %v3277, 0.0
        %v3299 = vmax.f32 %v3279, 0.0
        %v3300 = vmax.f32 %v3282, 0.0
        %v3301 = vmax.f32 %v3284, 0.0
        %v3302 = vpack.c.bf16 %v3286, %v3286
        %v3303 = vpack.c.bf16 %v3287, %v3287
        %v3304 = vpack.c.bf16 %v3288, %v3288
        %v3305 = vpack.c.bf16 %v3289, %v3289
        %v3306 = vpack.c.bf16 %v3290, %v3290
        %v3307 = vpack.c.bf16 %v3291, %v3291
        %v3308 = vpack.c.bf16 %v3292, %v3292
        %v3309 = vpack.c.bf16 %v3293, %v3293
        %v3310 = vpack.c.bf16 %v3294, %v3294
        %v3311 = vpack.c.bf16 %v3295, %v3295
        %v3312 = vpack.c.bf16 %v3296, %v3296
        %v3313 = vpack.c.bf16 %v3297, %v3297
        %v3314 = vpack.c.bf16 %v3298, %v3298
        %v3315 = vpack.c.bf16 %v3299, %v3299
        %v3316 = vpack.c.bf16 %v3300, %v3300
        %v3317 = vpack.c.bf16 %v3301, %v3301
        %3318 = vst [vmem:[#allocation3 + $0xc0] sm:$0xf] %v3302
        %3319 = vst [vmem:[#allocation3 + $0xc4] sm:$0xf] %v3303
        %3320 = vst [vmem:[#allocation3 + $0xc8] sm:$0xf] %v3304
        %3321 = vst [vmem:[#allocation3 + $0xcc] sm:$0xf] %v3305
        %3322 = vst [vmem:[#allocation3 + $0xd0] sm:$0xf] %v3306
        %3323 = vst [vmem:[#allocation3 + $0xd4] sm:$0xf] %v3307
        %3324 = vst [vmem:[#allocation3 + $0xd8] sm:$0xf] %v3308
        %3325 = vst [vmem:[#allocation3 + $0xdc] sm:$0xf] %v3309
        %3326 = vst [vmem:[#allocation3 + $0xe0] sm:$0xf] %v3310
        %3327 = vst [vmem:[#allocation3 + $0xe4] sm:$0xf] %v3311
        %3328 = vst [vmem:[#allocation3 + $0xe8] sm:$0xf] %v3312
        %3329 = vst [vmem:[#allocation3 + $0xec] sm:$0xf] %v3313
        %3330 = vst [vmem:[#allocation3 + $0xf0] sm:$0xf] %v3314
        %3331 = vst [vmem:[#allocation3 + $0xf4] sm:$0xf] %v3315
        %3332 = vst [vmem:[#allocation3 + $0xf8] sm:$0xf] %v3316
        %3333 = vst [vmem:[#allocation3 + $0xfc] sm:$0xf] %v3317
        %v3334 = vld [vmem:[#allocation3] sm:$0xf]
        %v3335 = vld [vmem:[#allocation3 + $0x4] sm:$0xf]
        %v3336 = vld [vmem:[#allocation3 + $0x8] sm:$0xf]
        %v3337 = vld [vmem:[#allocation3 + $0xc] sm:$0xf]
        %v3338 = vld [vmem:[#allocation3 + $0x10] sm:$0xf]
        %v3339 = vld [vmem:[#allocation3 + $0x14] sm:$0xf]
        %v3340 = vld [vmem:[#allocation3 + $0x18] sm:$0xf]
        %v3341 = vld [vmem:[#allocation3 + $0x1c] sm:$0xf]
        %v3342 = vld [vmem:[#allocation3 + $0x20] sm:$0xf]
        %v3343 = vld [vmem:[#allocation3 + $0x24] sm:$0xf]
        %v3344 = vld [vmem:[#allocation3 + $0x28] sm:$0xf]
        %v3345 = vld [vmem:[#allocation3 + $0x2c] sm:$0xf]
        %v3346 = vld [vmem:[#allocation3 + $0x30] sm:$0xf]
        %v3347 = vld [vmem:[#allocation3 + $0x34] sm:$0xf]
        %v3348 = vld [vmem:[#allocation3 + $0x38] sm:$0xf]
        %v3349 = vld [vmem:[#allocation3 + $0x3c] sm:$0xf]
        %v3350 = vld [vmem:[#allocation3 + $0x40] sm:$0xf]
        %v3351 = vld [vmem:[#allocation3 + $0x44] sm:$0xf]
        %v3352 = vld [vmem:[#allocation3 + $0x48] sm:$0xf]
        %v3353 = vld [vmem:[#allocation3 + $0x4c] sm:$0xf]
        %v3354 = vld [vmem:[#allocation3 + $0x50] sm:$0xf]
        %v3355 = vld [vmem:[#allocation3 + $0x54] sm:$0xf]
        %v3356 = vld [vmem:[#allocation3 + $0x58] sm:$0xf]
        %v3357 = vld [vmem:[#allocation3 + $0x5c] sm:$0xf]
        %v3358 = vld [vmem:[#allocation3 + $0x60] sm:$0xf]
        %v3359 = vld [vmem:[#allocation3 + $0x64] sm:$0xf]
        %v3360 = vld [vmem:[#allocation3 + $0x68] sm:$0xf]
        %v3361 = vld [vmem:[#allocation3 + $0x6c] sm:$0xf]
        %v3362 = vld [vmem:[#allocation3 + $0x70] sm:$0xf]
        %v3363 = vld [vmem:[#allocation3 + $0x74] sm:$0xf]
        %v3364 = vld [vmem:[#allocation3 + $0x78] sm:$0xf]
        %v3365 = vld [vmem:[#allocation3 + $0x7c] sm:$0xf]
        %v3366 = vld [vmem:[#allocation3 + $0x80] sm:$0xf]
        %v3367 = vld [vmem:[#allocation3 + $0x84] sm:$0xf]
        %v3368 = vld [vmem:[#allocation3 + $0x88] sm:$0xf]
        %v3369 = vld [vmem:[#allocation3 + $0x8c] sm:$0xf]
        %v3370 = vld [vmem:[#allocation3 + $0x90] sm:$0xf]
        %v3371 = vld [vmem:[#allocation3 + $0x94] sm:$0xf]
        %v3372 = vld [vmem:[#allocation3 + $0x98] sm:$0xf]
        %v3373 = vld [vmem:[#allocation3 + $0x9c] sm:$0xf]
        %v3374 = vld [vmem:[#allocation3 + $0xa0] sm:$0xf]
        %v3375 = vld [vmem:[#allocation3 + $0xa4] sm:$0xf]
        %v3376 = vld [vmem:[#allocation3 + $0xa8] sm:$0xf]
        %v3377 = vld [vmem:[#allocation3 + $0xac] sm:$0xf]
        %v3378 = vld [vmem:[#allocation3 + $0xb0] sm:$0xf]
        %v3379 = vld [vmem:[#allocation3 + $0xb4] sm:$0xf]
        %v3380 = vld [vmem:[#allocation3 + $0xb8] sm:$0xf]
        %v3381 = vld [vmem:[#allocation3 + $0xbc] sm:$0xf]
        %v3382 = vld [vmem:[#allocation3 + $0xc0] sm:$0xf]
        %v3383 = vld [vmem:[#allocation3 + $0xc4] sm:$0xf]
        %v3384 = vld [vmem:[#allocation3 + $0xc8] sm:$0xf]
        %v3385 = vld [vmem:[#allocation3 + $0xcc] sm:$0xf]
        %v3386 = vld [vmem:[#allocation3 + $0xd0] sm:$0xf]
        %v3387 = vld [vmem:[#allocation3 + $0xd4] sm:$0xf]
        %v3388 = vld [vmem:[#allocation3 + $0xd8] sm:$0xf]
        %v3389 = vld [vmem:[#allocation3 + $0xdc] sm:$0xf]
        %v3390 = vld [vmem:[#allocation3 + $0xe0] sm:$0xf]
        %v3391 = vld [vmem:[#allocation3 + $0xe4] sm:$0xf]
        %v3392 = vld [vmem:[#allocation3 + $0xe8] sm:$0xf]
        %v3393 = vld [vmem:[#allocation3 + $0xec] sm:$0xf]
        %v3394 = vld [vmem:[#allocation3 + $0xf0] sm:$0xf]
        %v3395 = vld [vmem:[#allocation3 + $0xf4] sm:$0xf]
        %v3396 = vld [vmem:[#allocation3 + $0xf8] sm:$0xf]
        %v3397 = vld [vmem:[#allocation3 + $0xfc] sm:$0xf]
        %v3462 = vunpack.c.l.b16 %v3334
        %v3463 = vunpack.c.l.b16 %v3335
        %v3464 = vunpack.c.l.b16 %v3336
        %v3465 = vunpack.c.l.b16 %v3337
        %v3466 = vunpack.c.l.b16 %v3338
        %v3467 = vunpack.c.l.b16 %v3339
        %v3468 = vunpack.c.l.b16 %v3340
        %v3469 = vunpack.c.l.b16 %v3341
        %v3470 = vunpack.c.l.b16 %v3342
        %v3471 = vunpack.c.l.b16 %v3343
        %v3472 = vunpack.c.l.b16 %v3344
        %v3473 = vunpack.c.l.b16 %v3345
        %v3474 = vunpack.c.l.b16 %v3346
        %v3475 = vunpack.c.l.b16 %v3347
        %v3476 = vunpack.c.l.b16 %v3348
        %v3477 = vunpack.c.l.b16 %v3349
        %v3478 = vunpack.c.l.b16 %v3350
        %v3479 = vunpack.c.l.b16 %v3351
        %v3480 = vunpack.c.l.b16 %v3352
        %v3481 = vunpack.c.l.b16 %v3353
        %v3482 = vunpack.c.l.b16 %v3354
        %v3483 = vunpack.c.l.b16 %v3355
        %v3484 = vunpack.c.l.b16 %v3356
        %v3485 = vunpack.c.l.b16 %v3357
        %v3486 = vunpack.c.l.b16 %v3358
        %v3487 = vunpack.c.l.b16 %v3359
        %v3488 = vunpack.c.l.b16 %v3360
        %v3489 = vunpack.c.l.b16 %v3361
        %v3490 = vunpack.c.l.b16 %v3362
        %v3491 = vunpack.c.l.b16 %v3363
        %v3492 = vunpack.c.l.b16 %v3364
        %v3493 = vunpack.c.l.b16 %v3365
        %v3494 = vunpack.c.l.b16 %v3366
        %v3495 = vunpack.c.l.b16 %v3367
        %v3496 = vunpack.c.l.b16 %v3368
        %v3497 = vunpack.c.l.b16 %v3369
        %v3498 = vunpack.c.l.b16 %v3370
        %v3499 = vunpack.c.l.b16 %v3371
        %v3500 = vunpack.c.l.b16 %v3372
        %v3501 = vunpack.c.l.b16 %v3373
        %v3502 = vunpack.c.l.b16 %v3374
        %v3503 = vunpack.c.l.b16 %v3375
        %v3504 = vunpack.c.l.b16 %v3376
        %v3505 = vunpack.c.l.b16 %v3377
        %v3506 = vunpack.c.l.b16 %v3378
        %v3507 = vunpack.c.l.b16 %v3379
        %v3508 = vunpack.c.l.b16 %v3380
        %v3509 = vunpack.c.l.b16 %v3381
        %v3510 = vunpack.c.l.b16 %v3382
        %v3511 = vunpack.c.l.b16 %v3383
        %v3512 = vunpack.c.l.b16 %v3384
        %v3513 = vunpack.c.l.b16 %v3385
        %v3514 = vunpack.c.l.b16 %v3386
        %v3515 = vunpack.c.l.b16 %v3387
        %v3516 = vunpack.c.l.b16 %v3388
        %v3517 = vunpack.c.l.b16 %v3389
        %v3518 = vunpack.c.l.b16 %v3390
        %v3519 = vunpack.c.l.b16 %v3391
        %v3520 = vunpack.c.l.b16 %v3392
        %v3521 = vunpack.c.l.b16 %v3393
        %v3522 = vunpack.c.l.b16 %v3394
        %v3523 = vunpack.c.l.b16 %v3395
        %v3524 = vunpack.c.l.b16 %v3396
        %v3525 = vunpack.c.l.b16 %v3397
        %v3526 = vpack.c.b16 %v3463, %v3462
        %v3527 = vpack.c.b16 %v3465, %v3464
        %v3528 = vpack.c.b16 %v3467, %v3466
        %v3529 = vpack.c.b16 %v3469, %v3468
        %v3530 = vpack.c.b16 %v3471, %v3470
        %v3531 = vpack.c.b16 %v3473, %v3472
        %v3532 = vpack.c.b16 %v3475, %v3474
        %v3533 = vpack.c.b16 %v3477, %v3476
        %v3534 = vpack.c.b16 %v3479, %v3478
        %v3535 = vpack.c.b16 %v3481, %v3480
        %v3536 = vpack.c.b16 %v3483, %v3482
        %v3537 = vpack.c.b16 %v3485, %v3484
        %v3538 = vpack.c.b16 %v3487, %v3486
        %v3539 = vpack.c.b16 %v3489, %v3488
        %v3540 = vpack.c.b16 %v3491, %v3490
        %v3541 = vpack.c.b16 %v3493, %v3492
        %v3542 = vpack.c.b16 %v3495, %v3494
        %v3543 = vpack.c.b16 %v3497, %v3496
        %v3544 = vpack.c.b16 %v3499, %v3498
        %v3545 = vpack.c.b16 %v3501, %v3500
        %v3546 = vpack.c.b16 %v3503, %v3502
        %v3547 = vpack.c.b16 %v3505, %v3504
        %v3548 = vpack.c.b16 %v3507, %v3506
        %v3549 = vpack.c.b16 %v3509, %v3508
        %v3550 = vpack.c.b16 %v3511, %v3510
        %v3551 = vpack.c.b16 %v3513, %v3512
        %v3552 = vpack.c.b16 %v3515, %v3514
        %v3553 = vpack.c.b16 %v3517, %v3516
        %v3554 = vpack.c.b16 %v3519, %v3518
        %v3555 = vpack.c.b16 %v3521, %v3520
        %v3556 = vpack.c.b16 %v3523, %v3522
        %v3557 = vpack.c.b16 %v3525, %v3524
        %v3606 = vunpack.c.l.b16 %v262
        %v3607 = vunpack.c.l.b16 %v263
        %v3608 = vunpack.c.l.b16 %v264
        %v3609 = vunpack.c.l.b16 %v265
        %v3610 = vunpack.c.l.b16 %v266
        %v3611 = vunpack.c.l.b16 %v267
        %v3612 = vunpack.c.l.b16 %v268
        %v3613 = vunpack.c.l.b16 %v269
        %v3614 = vunpack.c.l.b16 %v270
        %v3615 = vunpack.c.l.b16 %v271
        %v3616 = vunpack.c.l.b16 %v272
        %v3617 = vunpack.c.l.b16 %v273
        %v3618 = vunpack.c.l.b16 %v274
        %v3619 = vunpack.c.l.b16 %v275
        %v3620 = vunpack.c.l.b16 %v276
        %v3621 = vunpack.c.l.b16 %v277
        %v3622 = vpack.c.b16 %v3607, %v3606
        %v3623 = vpack.c.b16 %v3609, %v3608
        %v3624 = vpack.c.b16 %v3611, %v3610
        %v3625 = vpack.c.b16 %v3613, %v3612
        %v3626 = vpack.c.b16 %v3615, %v3614
        %v3627 = vpack.c.b16 %v3617, %v3616
        %v3628 = vpack.c.b16 %v3619, %v3618
        %v3629 = vpack.c.b16 %v3621, %v3620
        %3638 = vmatpush.bf16.msra.mxu0 %v3629
        %3639 = vmatpush.bf16.msra.mxu0 %v3628
        %3640 = vmatpush.bf16.msra.mxu0 %v3627
        %3641 = vmatpush.bf16.msra.mxu0 %v3626
        %3642 = vmatpush.bf16.msra.mxu0 %v3625
        %3643 = vmatpush.bf16.msra.mxu0 %v3624
        %3644 = vmatpush.bf16.msra.mxu0 %v3623
        %3645 = vmatpush.bf16.msra.mxu0 %v3622
        %3646 = vmatmul.bf16.gmra.mxu0 %v3526
        %v3647 = vpop.f32.mrf.mxu0
        %v3648 = vadd.f32 0.0, %v3647
        %v3649 = vpop.f32.mrf.mxu0
        %v3650 = vadd.f32 0.0, %v3649
        %3651 = vmatmul.bf16.gmra.mxu0 %v3527
        %v3652 = vpop.f32.mrf.mxu0
        %v3653 = vadd.f32 0.0, %v3652
        %v3654 = vpop.f32.mrf.mxu0
        %v3655 = vadd.f32 0.0, %v3654
        %3656 = vmatmul.bf16.gmra.mxu0 %v3528
        %v3657 = vpop.f32.mrf.mxu0
        %v3658 = vadd.f32 0.0, %v3657
        %v3659 = vpop.f32.mrf.mxu0
        %v3660 = vadd.f32 0.0, %v3659
        %3661 = vmatmul.bf16.gmra.mxu0 %v3529
        %v3662 = vpop.f32.mrf.mxu0
        %v3663 = vadd.f32 0.0, %v3662
        %v3664 = vpop.f32.mrf.mxu0
        %v3665 = vadd.f32 0.0, %v3664
        %3666 = vmatmul.bf16.gmra.mxu0 %v3530
        %v3667 = vpop.f32.mrf.mxu0
        %v3668 = vadd.f32 0.0, %v3667
        %v3669 = vpop.f32.mrf.mxu0
        %v3670 = vadd.f32 0.0, %v3669
        %3671 = vmatmul.bf16.gmra.mxu0 %v3531
        %v3672 = vpop.f32.mrf.mxu0
        %v3673 = vadd.f32 0.0, %v3672
        %v3674 = vpop.f32.mrf.mxu0
        %v3675 = vadd.f32 0.0, %v3674
        %3676 = vmatmul.bf16.gmra.mxu0 %v3532
        %v3677 = vpop.f32.mrf.mxu0
        %v3678 = vadd.f32 0.0, %v3677
        %v3679 = vpop.f32.mrf.mxu0
        %v3680 = vadd.f32 0.0, %v3679
        %3681 = vmatmul.bf16.gmra.mxu0 %v3533
        %v3682 = vpop.f32.mrf.mxu0
        %v3683 = vadd.f32 0.0, %v3682
        %v3684 = vpop.f32.mrf.mxu0
        %v3685 = vadd.f32 0.0, %v3684
        %3686 = vmatmul.bf16.gmra.mxu0 %v3534
        %v3687 = vpop.f32.mrf.mxu0
        %v3688 = vadd.f32 0.0, %v3687
        %v3689 = vpop.f32.mrf.mxu0
        %v3690 = vadd.f32 0.0, %v3689
        %3691 = vmatmul.bf16.gmra.mxu0 %v3535
        %v3692 = vpop.f32.mrf.mxu0
        %v3693 = vadd.f32 0.0, %v3692
        %v3694 = vpop.f32.mrf.mxu0
        %v3695 = vadd.f32 0.0, %v3694
        %3696 = vmatmul.bf16.gmra.mxu0 %v3536
        %v3697 = vpop.f32.mrf.mxu0
        %v3698 = vadd.f32 0.0, %v3697
        %v3699 = vpop.f32.mrf.mxu0
        %v3700 = vadd.f32 0.0, %v3699
        %3701 = vmatmul.bf16.gmra.mxu0 %v3537
        %v3702 = vpop.f32.mrf.mxu0
        %v3703 = vadd.f32 0.0, %v3702
        %v3704 = vpop.f32.mrf.mxu0
        %v3705 = vadd.f32 0.0, %v3704
        %3706 = vmatmul.bf16.gmra.mxu0 %v3538
        %v3707 = vpop.f32.mrf.mxu0
        %v3708 = vadd.f32 0.0, %v3707
        %v3709 = vpop.f32.mrf.mxu0
        %v3710 = vadd.f32 0.0, %v3709
        %3711 = vmatmul.bf16.gmra.mxu0 %v3539
        %v3712 = vpop.f32.mrf.mxu0
        %v3713 = vadd.f32 0.0, %v3712
        %v3714 = vpop.f32.mrf.mxu0
        %v3715 = vadd.f32 0.0, %v3714
        %3716 = vmatmul.bf16.gmra.mxu0 %v3540
        %v3717 = vpop.f32.mrf.mxu0
        %v3718 = vadd.f32 0.0, %v3717
        %v3719 = vpop.f32.mrf.mxu0
        %v3720 = vadd.f32 0.0, %v3719
        %3721 = vmatmul.bf16.gmra.mxu0 %v3541
        %v3722 = vpop.f32.mrf.mxu0
        %v3723 = vadd.f32 0.0, %v3722
        %v3724 = vpop.f32.mrf.mxu0
        %v3725 = vadd.f32 0.0, %v3724
        %3726 = vmatmul.bf16.gmra.mxu0 %v3542
        %v3727 = vpop.f32.mrf.mxu0
        %v3728 = vadd.f32 0.0, %v3727
        %v3729 = vpop.f32.mrf.mxu0
        %v3730 = vadd.f32 0.0, %v3729
        %3731 = vmatmul.bf16.gmra.mxu0 %v3543
        %v3732 = vpop.f32.mrf.mxu0
        %v3733 = vadd.f32 0.0, %v3732
        %v3734 = vpop.f32.mrf.mxu0
        %v3735 = vadd.f32 0.0, %v3734
        %3736 = vmatmul.bf16.gmra.mxu0 %v3544
        %v3737 = vpop.f32.mrf.mxu0
        %v3738 = vadd.f32 0.0, %v3737
        %v3739 = vpop.f32.mrf.mxu0
        %v3740 = vadd.f32 0.0, %v3739
        %3741 = vmatmul.bf16.gmra.mxu0 %v3545
        %v3742 = vpop.f32.mrf.mxu0
        %v3743 = vadd.f32 0.0, %v3742
        %v3744 = vpop.f32.mrf.mxu0
        %v3745 = vadd.f32 0.0, %v3744
        %3746 = vmatmul.bf16.gmra.mxu0 %v3546
        %v3747 = vpop.f32.mrf.mxu0
        %v3748 = vadd.f32 0.0, %v3747
        %v3749 = vpop.f32.mrf.mxu0
        %v3750 = vadd.f32 0.0, %v3749
        %3751 = vmatmul.bf16.gmra.mxu0 %v3547
        %v3752 = vpop.f32.mrf.mxu0
        %v3753 = vadd.f32 0.0, %v3752
        %v3754 = vpop.f32.mrf.mxu0
        %v3755 = vadd.f32 0.0, %v3754
        %3756 = vmatmul.bf16.gmra.mxu0 %v3548
        %v3757 = vpop.f32.mrf.mxu0
        %v3758 = vadd.f32 0.0, %v3757
        %v3759 = vpop.f32.mrf.mxu0
        %v3760 = vadd.f32 0.0, %v3759
        %3761 = vmatmul.bf16.gmra.mxu0 %v3549
        %v3762 = vpop.f32.mrf.mxu0
        %v3763 = vadd.f32 0.0, %v3762
        %v3764 = vpop.f32.mrf.mxu0
        %v3765 = vadd.f32 0.0, %v3764
        %3766 = vmatmul.bf16.gmra.mxu0 %v3550
        %v3767 = vpop.f32.mrf.mxu0
        %v3768 = vadd.f32 0.0, %v3767
        %v3769 = vpop.f32.mrf.mxu0
        %v3770 = vadd.f32 0.0, %v3769
        %3771 = vmatmul.bf16.gmra.mxu0 %v3551
        %v3772 = vpop.f32.mrf.mxu0
        %v3773 = vadd.f32 0.0, %v3772
        %v3774 = vpop.f32.mrf.mxu0
        %v3775 = vadd.f32 0.0, %v3774
        %3776 = vmatmul.bf16.gmra.mxu0 %v3552
        %v3777 = vpop.f32.mrf.mxu0
        %v3778 = vadd.f32 0.0, %v3777
        %v3779 = vpop.f32.mrf.mxu0
        %v3780 = vadd.f32 0.0, %v3779
        %3781 = vmatmul.bf16.gmra.mxu0 %v3553
        %v3782 = vpop.f32.mrf.mxu0
        %v3783 = vadd.f32 0.0, %v3782
        %v3784 = vpop.f32.mrf.mxu0
        %v3785 = vadd.f32 0.0, %v3784
        %3786 = vmatmul.bf16.gmra.mxu0 %v3554
        %v3787 = vpop.f32.mrf.mxu0
        %v3788 = vadd.f32 0.0, %v3787
        %v3789 = vpop.f32.mrf.mxu0
        %v3790 = vadd.f32 0.0, %v3789
        %3791 = vmatmul.bf16.gmra.mxu0 %v3555
        %v3792 = vpop.f32.mrf.mxu0
        %v3793 = vadd.f32 0.0, %v3792
        %v3794 = vpop.f32.mrf.mxu0
        %v3795 = vadd.f32 0.0, %v3794
        %3796 = vmatmul.bf16.gmra.mxu0 %v3556
        %v3797 = vpop.f32.mrf.mxu0
        %v3798 = vadd.f32 0.0, %v3797
        %v3799 = vpop.f32.mrf.mxu0
        %v3800 = vadd.f32 0.0, %v3799
        %3801 = vmatmul.bf16.gmra.mxu0 %v3557
        %v3802 = vpop.f32.mrf.mxu0
        %v3803 = vadd.f32 0.0, %v3802
        %v3804 = vpop.f32.mrf.mxu0
        %v3805 = vadd.f32 0.0, %v3804
        %3806 = vdwg.mxu0
        %v3807 = vpack.c.bf16 %v3648, %v3648
        %v3808 = vpack.c.bf16 %v3650, %v3650
        %v3809 = vpack.c.bf16 %v3653, %v3653
        %v3810 = vpack.c.bf16 %v3655, %v3655
        %v3811 = vpack.c.bf16 %v3658, %v3658
        %v3812 = vpack.c.bf16 %v3660, %v3660
        %v3813 = vpack.c.bf16 %v3663, %v3663
        %v3814 = vpack.c.bf16 %v3665, %v3665
        %v3815 = vpack.c.bf16 %v3668, %v3668
        %v3816 = vpack.c.bf16 %v3670, %v3670
        %v3817 = vpack.c.bf16 %v3673, %v3673
        %v3818 = vpack.c.bf16 %v3675, %v3675
        %v3819 = vpack.c.bf16 %v3678, %v3678
        %v3820 = vpack.c.bf16 %v3680, %v3680
        %v3821 = vpack.c.bf16 %v3683, %v3683
        %v3822 = vpack.c.bf16 %v3685, %v3685
        %v3823 = vpack.c.bf16 %v3688, %v3688
        %v3824 = vpack.c.bf16 %v3690, %v3690
        %v3825 = vpack.c.bf16 %v3693, %v3693
        %v3826 = vpack.c.bf16 %v3695, %v3695
        %v3827 = vpack.c.bf16 %v3698, %v3698
        %v3828 = vpack.c.bf16 %v3700, %v3700
        %v3829 = vpack.c.bf16 %v3703, %v3703
        %v3830 = vpack.c.bf16 %v3705, %v3705
        %v3831 = vpack.c.bf16 %v3708, %v3708
        %v3832 = vpack.c.bf16 %v3710, %v3710
        %v3833 = vpack.c.bf16 %v3713, %v3713
        %v3834 = vpack.c.bf16 %v3715, %v3715
        %v3835 = vpack.c.bf16 %v3718, %v3718
        %v3836 = vpack.c.bf16 %v3720, %v3720
        %v3837 = vpack.c.bf16 %v3723, %v3723
        %v3838 = vpack.c.bf16 %v3725, %v3725
        %v3839 = vpack.c.bf16 %v3728, %v3728
        %v3840 = vpack.c.bf16 %v3730, %v3730
        %v3841 = vpack.c.bf16 %v3733, %v3733
        %v3842 = vpack.c.bf16 %v3735, %v3735
        %v3843 = vpack.c.bf16 %v3738, %v3738
        %v3844 = vpack.c.bf16 %v3740, %v3740
        %v3845 = vpack.c.bf16 %v3743, %v3743
        %v3846 = vpack.c.bf16 %v3745, %v3745
        %v3847 = vpack.c.bf16 %v3748, %v3748
        %v3848 = vpack.c.bf16 %v3750, %v3750
        %v3849 = vpack.c.bf16 %v3753, %v3753
        %v3850 = vpack.c.bf16 %v3755, %v3755
        %v3851 = vpack.c.bf16 %v3758, %v3758
        %v3852 = vpack.c.bf16 %v3760, %v3760
        %v3853 = vpack.c.bf16 %v3763, %v3763
        %v3854 = vpack.c.bf16 %v3765, %v3765
        %v3855 = vpack.c.bf16 %v3768, %v3768
        %v3856 = vpack.c.bf16 %v3770, %v3770
        %v3857 = vpack.c.bf16 %v3773, %v3773
        %v3858 = vpack.c.bf16 %v3775, %v3775
        %v3859 = vpack.c.bf16 %v3778, %v3778
        %v3860 = vpack.c.bf16 %v3780, %v3780
        %v3861 = vpack.c.bf16 %v3783, %v3783
        %v3862 = vpack.c.bf16 %v3785, %v3785
        %v3863 = vpack.c.bf16 %v3788, %v3788
        %v3864 = vpack.c.bf16 %v3790, %v3790
        %v3865 = vpack.c.bf16 %v3793, %v3793
        %v3866 = vpack.c.bf16 %v3795, %v3795
        %v3867 = vpack.c.bf16 %v3798, %v3798
        %v3868 = vpack.c.bf16 %v3800, %v3800
        %v3869 = vpack.c.bf16 %v3803, %v3803
        %v3870 = vpack.c.bf16 %v3805, %v3805
        %3871 = vst [vmem:[#allocation2] sm:$0xf] %v3807
        %3872 = vst [vmem:[#allocation2 + $0x4] sm:$0xf] %v3808
        %3873 = vst [vmem:[#allocation2 + $0x8] sm:$0xf] %v3809
        %3874 = vst [vmem:[#allocation2 + $0xc] sm:$0xf] %v3810
        %3875 = vst [vmem:[#allocation2 + $0x10] sm:$0xf] %v3811
        %3876 = vst [vmem:[#allocation2 + $0x14] sm:$0xf] %v3812
        %3877 = vst [vmem:[#allocation2 + $0x18] sm:$0xf] %v3813
        %3878 = vst [vmem:[#allocation2 + $0x1c] sm:$0xf] %v3814
        %3879 = vst [vmem:[#allocation2 + $0x20] sm:$0xf] %v3815
        %3880 = vst [vmem:[#allocation2 + $0x24] sm:$0xf] %v3816
        %3881 = vst [vmem:[#allocation2 + $0x28] sm:$0xf] %v3817
        %3882 = vst [vmem:[#allocation2 + $0x2c] sm:$0xf] %v3818
        %3883 = vst [vmem:[#allocation2 + $0x30] sm:$0xf] %v3819
        %3884 = vst [vmem:[#allocation2 + $0x34] sm:$0xf] %v3820
        %3885 = vst [vmem:[#allocation2 + $0x38] sm:$0xf] %v3821
        %3886 = vst [vmem:[#allocation2 + $0x3c] sm:$0xf] %v3822
        %3887 = vst [vmem:[#allocation2 + $0x40] sm:$0xf] %v3823
        %3888 = vst [vmem:[#allocation2 + $0x44] sm:$0xf] %v3824
        %3889 = vst [vmem:[#allocation2 + $0x48] sm:$0xf] %v3825
        %3890 = vst [vmem:[#allocation2 + $0x4c] sm:$0xf] %v3826
        %3891 = vst [vmem:[#allocation2 + $0x50] sm:$0xf] %v3827
        %3892 = vst [vmem:[#allocation2 + $0x54] sm:$0xf] %v3828
        %3893 = vst [vmem:[#allocation2 + $0x58] sm:$0xf] %v3829
        %3894 = vst [vmem:[#allocation2 + $0x5c] sm:$0xf] %v3830
        %3895 = vst [vmem:[#allocation2 + $0x60] sm:$0xf] %v3831
        %3896 = vst [vmem:[#allocation2 + $0x64] sm:$0xf] %v3832
        %3897 = vst [vmem:[#allocation2 + $0x68] sm:$0xf] %v3833
        %3898 = vst [vmem:[#allocation2 + $0x6c] sm:$0xf] %v3834
        %3899 = vst [vmem:[#allocation2 + $0x70] sm:$0xf] %v3835
        %3900 = vst [vmem:[#allocation2 + $0x74] sm:$0xf] %v3836
        %3901 = vst [vmem:[#allocation2 + $0x78] sm:$0xf] %v3837
        %3902 = vst [vmem:[#allocation2 + $0x7c] sm:$0xf] %v3838
        %3903 = vst [vmem:[#allocation2 + $0x80] sm:$0xf] %v3839
        %3904 = vst [vmem:[#allocation2 + $0x84] sm:$0xf] %v3840
        %3905 = vst [vmem:[#allocation2 + $0x88] sm:$0xf] %v3841
        %3906 = vst [vmem:[#allocation2 + $0x8c] sm:$0xf] %v3842
        %3907 = vst [vmem:[#allocation2 + $0x90] sm:$0xf] %v3843
        %3908 = vst [vmem:[#allocation2 + $0x94] sm:$0xf] %v3844
        %3909 = vst [vmem:[#allocation2 + $0x98] sm:$0xf] %v3845
        %3910 = vst [vmem:[#allocation2 + $0x9c] sm:$0xf] %v3846
        %3911 = vst [vmem:[#allocation2 + $0xa0] sm:$0xf] %v3847
        %3912 = vst [vmem:[#allocation2 + $0xa4] sm:$0xf] %v3848
        %3913 = vst [vmem:[#allocation2 + $0xa8] sm:$0xf] %v3849
        %3914 = vst [vmem:[#allocation2 + $0xac] sm:$0xf] %v3850
        %3915 = vst [vmem:[#allocation2 + $0xb0] sm:$0xf] %v3851
        %3916 = vst [vmem:[#allocation2 + $0xb4] sm:$0xf] %v3852
        %3917 = vst [vmem:[#allocation2 + $0xb8] sm:$0xf] %v3853
        %3918 = vst [vmem:[#allocation2 + $0xbc] sm:$0xf] %v3854
        %3919 = vst [vmem:[#allocation2 + $0xc0] sm:$0xf] %v3855
        %3920 = vst [vmem:[#allocation2 + $0xc4] sm:$0xf] %v3856
        %3921 = vst [vmem:[#allocation2 + $0xc8] sm:$0xf] %v3857
        %3922 = vst [vmem:[#allocation2 + $0xcc] sm:$0xf] %v3858
        %3923 = vst [vmem:[#allocation2 + $0xd0] sm:$0xf] %v3859
        %3924 = vst [vmem:[#allocation2 + $0xd4] sm:$0xf] %v3860
        %3925 = vst [vmem:[#allocation2 + $0xd8] sm:$0xf] %v3861
        %3926 = vst [vmem:[#allocation2 + $0xdc] sm:$0xf] %v3862
        %3927 = vst [vmem:[#allocation2 + $0xe0] sm:$0xf] %v3863
        %3928 = vst [vmem:[#allocation2 + $0xe4] sm:$0xf] %v3864
        %3929 = vst [vmem:[#allocation2 + $0xe8] sm:$0xf] %v3865
        %3930 = vst [vmem:[#allocation2 + $0xec] sm:$0xf] %v3866
        %3931 = vst [vmem:[#allocation2 + $0xf0] sm:$0xf] %v3867
        %3932 = vst [vmem:[#allocation2 + $0xf4] sm:$0xf] %v3868
        %3933 = vst [vmem:[#allocation2 + $0xf8] sm:$0xf] %v3869
        %3934 = vst [vmem:[#allocation2 + $0xfc] sm:$0xf] %v3870
        %v3935 = vld [vmem:[%s232] sm:$0xf]
        %v3936 = vld [vmem:[%s232 + $0x4] sm:$0xf]
        %v3937 = vld [vmem:[%s232 + $0x8] sm:$0xf]
        %v3938 = vld [vmem:[%s232 + $0xc] sm:$0xf]
        %v3939 = vld [vmem:[%s232 + $0x10] sm:$0xf]
        %v3940 = vld [vmem:[%s232 + $0x14] sm:$0xf]
        %v3941 = vld [vmem:[%s232 + $0x18] sm:$0xf]
        %v3942 = vld [vmem:[%s232 + $0x1c] sm:$0xf]
        %v3943 = vld [vmem:[%s232 + $0x20] sm:$0xf]
        %v3944 = vld [vmem:[%s232 + $0x24] sm:$0xf]
        %v3945 = vld [vmem:[%s232 + $0x28] sm:$0xf]
        %v3946 = vld [vmem:[%s232 + $0x2c] sm:$0xf]
        %v3947 = vld [vmem:[%s232 + $0x30] sm:$0xf]
        %v3948 = vld [vmem:[%s232 + $0x34] sm:$0xf]
        %v3949 = vld [vmem:[%s232 + $0x38] sm:$0xf]
        %v3950 = vld [vmem:[%s232 + $0x3c] sm:$0xf]
        %v3951 = vld [vmem:[#allocation2] sm:$0xf]
        %v3952 = vld [vmem:[#allocation2 + $0x4] sm:$0xf]
        %v3953 = vld [vmem:[#allocation2 + $0x8] sm:$0xf]
        %v3954 = vld [vmem:[#allocation2 + $0xc] sm:$0xf]
        %v3955 = vld [vmem:[#allocation2 + $0x10] sm:$0xf]
        %v3956 = vld [vmem:[#allocation2 + $0x14] sm:$0xf]
        %v3957 = vld [vmem:[#allocation2 + $0x18] sm:$0xf]
        %v3958 = vld [vmem:[#allocation2 + $0x1c] sm:$0xf]
        %v3959 = vld [vmem:[#allocation2 + $0x20] sm:$0xf]
        %v3960 = vld [vmem:[#allocation2 + $0x24] sm:$0xf]
        %v3961 = vld [vmem:[#allocation2 + $0x28] sm:$0xf]
        %v3962 = vld [vmem:[#allocation2 + $0x2c] sm:$0xf]
        %v3963 = vld [vmem:[#allocation2 + $0x30] sm:$0xf]
        %v3964 = vld [vmem:[#allocation2 + $0x34] sm:$0xf]
        %v3965 = vld [vmem:[#allocation2 + $0x38] sm:$0xf]
        %v3966 = vld [vmem:[#allocation2 + $0x3c] sm:$0xf]
        %v3967 = vperm.slane %v296, 0
        %v3984 = vunpack.c.l.b16 %v3935
        %v3985 = vunpack.c.l.b16 %v3936
        %v3986 = vunpack.c.l.b16 %v3937
        %v3987 = vunpack.c.l.b16 %v3938
        %v3988 = vunpack.c.l.b16 %v3939
        %v3989 = vunpack.c.l.b16 %v3940
        %v3990 = vunpack.c.l.b16 %v3941
        %v3991 = vunpack.c.l.b16 %v3942
        %v3992 = vunpack.c.l.b16 %v3943
        %v3993 = vunpack.c.l.b16 %v3944
        %v3994 = vunpack.c.l.b16 %v3945
        %v3995 = vunpack.c.l.b16 %v3946
        %v3996 = vunpack.c.l.b16 %v3947
        %v3997 = vunpack.c.l.b16 %v3948
        %v3998 = vunpack.c.l.b16 %v3949
        %v3999 = vunpack.c.l.b16 %v3950
        %v4000 = vpack.c.b16 %v3985, %v3984
        %v4001 = vpack.c.b16 %v3987, %v3986
        %v4002 = vpack.c.b16 %v3989, %v3988
        %v4003 = vpack.c.b16 %v3991, %v3990
        %v4004 = vpack.c.b16 %v3993, %v3992
        %v4005 = vpack.c.b16 %v3995, %v3994
        %v4006 = vpack.c.b16 %v3997, %v3996
        %v4007 = vpack.c.b16 %v3999, %v3998
        %v4032 = vunpack.c.l.b16 %v3951
        %v4033 = vunpack.c.l.b16 %v3952
        %v4034 = vunpack.c.l.b16 %v3953
        %v4035 = vunpack.c.l.b16 %v3954
        %v4036 = vunpack.c.l.b16 %v3955
        %v4037 = vunpack.c.l.b16 %v3956
        %v4038 = vunpack.c.l.b16 %v3957
        %v4039 = vunpack.c.l.b16 %v3958
        %v4040 = vunpack.c.l.b16 %v3959
        %v4041 = vunpack.c.l.b16 %v3960
        %v4042 = vunpack.c.l.b16 %v3961
        %v4043 = vunpack.c.l.b16 %v3962
        %v4044 = vunpack.c.l.b16 %v3963
        %v4045 = vunpack.c.l.b16 %v3964
        %v4046 = vunpack.c.l.b16 %v3965
        %v4047 = vunpack.c.l.b16 %v3966
        %v4048 = vpack.c.b16 %v4033, %v4032
        %v4049 = vpack.c.b16 %v4035, %v4034
        %v4050 = vpack.c.b16 %v4037, %v4036
        %v4051 = vpack.c.b16 %v4039, %v4038
        %v4052 = vpack.c.b16 %v4041, %v4040
        %v4053 = vpack.c.b16 %v4043, %v4042
        %v4054 = vpack.c.b16 %v4045, %v4044
        %v4055 = vpack.c.b16 %v4047, %v4046
        %4064 = vmatpush.bf16.msra.mxu0 %v4055
        %4065 = vmatpush.bf16.msra.mxu0 %v4054
        %4066 = vmatpush.bf16.msra.mxu0 %v4053
        %4067 = vmatpush.bf16.msra.mxu0 %v4052
        %4068 = vmatpush.bf16.msra.mxu0 %v4051
        %4069 = vmatpush.bf16.msra.mxu0 %v4050
        %4070 = vmatpush.bf16.msra.mxu0 %v4049
        %4071 = vmatpush.bf16.msra.mxu0 %v4048
        %4072 = vmatmul.bf16.gmra.mxu0 %v4000
        %v4073 = vpop.f32.mrf.mxu0
        %v4074 = vadd.f32 %v3967, %v4073
        %v4075 = vpop.f32.mrf.mxu0
        %v4076 = vadd.f32 %v3967, %v4075
        %4077 = vmatmul.bf16.gmra.mxu0 %v4001
        %v4078 = vpop.f32.mrf.mxu0
        %v4079 = vadd.f32 %v3967, %v4078
        %v4080 = vpop.f32.mrf.mxu0
        %v4081 = vadd.f32 %v3967, %v4080
        %4082 = vmatmul.bf16.gmra.mxu0 %v4002
        %v4083 = vpop.f32.mrf.mxu0
        %v4084 = vadd.f32 %v3967, %v4083
        %v4085 = vpop.f32.mrf.mxu0
        %v4086 = vadd.f32 %v3967, %v4085
        %4087 = vmatmul.bf16.gmra.mxu0 %v4003
        %v4088 = vpop.f32.mrf.mxu0
        %v4089 = vadd.f32 %v3967, %v4088
        %v4090 = vpop.f32.mrf.mxu0
        %v4091 = vadd.f32 %v3967, %v4090
        %4092 = vmatmul.bf16.gmra.mxu0 %v4004
        %v4093 = vpop.f32.mrf.mxu0
        %v4094 = vadd.f32 %v3967, %v4093
        %v4095 = vpop.f32.mrf.mxu0
        %v4096 = vadd.f32 %v3967, %v4095
        %4097 = vmatmul.bf16.gmra.mxu0 %v4005
        %v4098 = vpop.f32.mrf.mxu0
        %v4099 = vadd.f32 %v3967, %v4098
        %v4100 = vpop.f32.mrf.mxu0
        %v4101 = vadd.f32 %v3967, %v4100
        %4102 = vmatmul.bf16.gmra.mxu0 %v4006
        %v4103 = vpop.f32.mrf.mxu0
        %v4104 = vadd.f32 %v3967, %v4103
        %v4105 = vpop.f32.mrf.mxu0
        %v4106 = vadd.f32 %v3967, %v4105
        %4107 = vmatmul.bf16.gmra.mxu0 %v4007
        %v4108 = vpop.f32.mrf.mxu0
        %v4109 = vadd.f32 %v3967, %v4108
        %v4110 = vpop.f32.mrf.mxu0
        %v4111 = vadd.f32 %v3967, %v4110
        %4112 = vdwg.mxu0
        %v4113 = vmax.f32 %v4074, 0.0
        %v4114 = vmax.f32 %v4076, 0.0
        %v4115 = vmax.f32 %v4079, 0.0
        %v4116 = vmax.f32 %v4081, 0.0
        %v4117 = vmax.f32 %v4084, 0.0
        %v4118 = vmax.f32 %v4086, 0.0
        %v4119 = vmax.f32 %v4089, 0.0
        %v4120 = vmax.f32 %v4091, 0.0
        %v4121 = vmax.f32 %v4094, 0.0
        %v4122 = vmax.f32 %v4096, 0.0
        %v4123 = vmax.f32 %v4099, 0.0
        %v4124 = vmax.f32 %v4101, 0.0
        %v4125 = vmax.f32 %v4104, 0.0
        %v4126 = vmax.f32 %v4106, 0.0
        %v4127 = vmax.f32 %v4109, 0.0
        %v4128 = vmax.f32 %v4111, 0.0
        %v4129 = vpack.c.bf16 %v4113, %v4113
        %v4130 = vpack.c.bf16 %v4114, %v4114
        %v4131 = vpack.c.bf16 %v4115, %v4115
        %v4132 = vpack.c.bf16 %v4116, %v4116
        %v4133 = vpack.c.bf16 %v4117, %v4117
        %v4134 = vpack.c.bf16 %v4118, %v4118
        %v4135 = vpack.c.bf16 %v4119, %v4119
        %v4136 = vpack.c.bf16 %v4120, %v4120
        %v4137 = vpack.c.bf16 %v4121, %v4121
        %v4138 = vpack.c.bf16 %v4122, %v4122
        %v4139 = vpack.c.bf16 %v4123, %v4123
        %v4140 = vpack.c.bf16 %v4124, %v4124
        %v4141 = vpack.c.bf16 %v4125, %v4125
        %v4142 = vpack.c.bf16 %v4126, %v4126
        %v4143 = vpack.c.bf16 %v4127, %v4127
        %v4144 = vpack.c.bf16 %v4128, %v4128
        %4145 = vst [vmem:[#allocation3] sm:$0xf] %v4129
        %4146 = vst [vmem:[#allocation3 + $0x4] sm:$0xf] %v4130
        %4147 = vst [vmem:[#allocation3 + $0x8] sm:$0xf] %v4131
        %4148 = vst [vmem:[#allocation3 + $0xc] sm:$0xf] %v4132
        %4149 = vst [vmem:[#allocation3 + $0x10] sm:$0xf] %v4133
        %4150 = vst [vmem:[#allocation3 + $0x14] sm:$0xf] %v4134
        %4151 = vst [vmem:[#allocation3 + $0x18] sm:$0xf] %v4135
        %4152 = vst [vmem:[#allocation3 + $0x1c] sm:$0xf] %v4136
        %4153 = vst [vmem:[#allocation3 + $0x20] sm:$0xf] %v4137
        %4154 = vst [vmem:[#allocation3 + $0x24] sm:$0xf] %v4138
        %4155 = vst [vmem:[#allocation3 + $0x28] sm:$0xf] %v4139
        %4156 = vst [vmem:[#allocation3 + $0x2c] sm:$0xf] %v4140
        %4157 = vst [vmem:[#allocation3 + $0x30] sm:$0xf] %v4141
        %4158 = vst [vmem:[#allocation3 + $0x34] sm:$0xf] %v4142
        %4159 = vst [vmem:[#allocation3 + $0x38] sm:$0xf] %v4143
        %4160 = vst [vmem:[#allocation3 + $0x3c] sm:$0xf] %v4144
        %v4161 = vld [vmem:[%s1154] sm:$0xf]
        %v4162 = vld [vmem:[%s1154 + $0x4] sm:$0xf]
        %v4163 = vld [vmem:[%s1154 + $0x8] sm:$0xf]
        %v4164 = vld [vmem:[%s1154 + $0xc] sm:$0xf]
        %v4165 = vld [vmem:[%s1154 + $0x10] sm:$0xf]
        %v4166 = vld [vmem:[%s1154 + $0x14] sm:$0xf]
        %v4167 = vld [vmem:[%s1154 + $0x18] sm:$0xf]
        %v4168 = vld [vmem:[%s1154 + $0x1c] sm:$0xf]
        %v4169 = vld [vmem:[%s1154 + $0x20] sm:$0xf]
        %v4170 = vld [vmem:[%s1154 + $0x24] sm:$0xf]
        %v4171 = vld [vmem:[%s1154 + $0x28] sm:$0xf]
        %v4172 = vld [vmem:[%s1154 + $0x2c] sm:$0xf]
        %v4173 = vld [vmem:[%s1154 + $0x30] sm:$0xf]
        %v4174 = vld [vmem:[%s1154 + $0x34] sm:$0xf]
        %v4175 = vld [vmem:[%s1154 + $0x38] sm:$0xf]
        %v4176 = vld [vmem:[%s1154 + $0x3c] sm:$0xf]
        %v4177 = vld [vmem:[#allocation2 + $0x40] sm:$0xf]
        %v4178 = vld [vmem:[#allocation2 + $0x44] sm:$0xf]
        %v4179 = vld [vmem:[#allocation2 + $0x48] sm:$0xf]
        %v4180 = vld [vmem:[#allocation2 + $0x4c] sm:$0xf]
        %v4181 = vld [vmem:[#allocation2 + $0x50] sm:$0xf]
        %v4182 = vld [vmem:[#allocation2 + $0x54] sm:$0xf]
        %v4183 = vld [vmem:[#allocation2 + $0x58] sm:$0xf]
        %v4184 = vld [vmem:[#allocation2 + $0x5c] sm:$0xf]
        %v4185 = vld [vmem:[#allocation2 + $0x60] sm:$0xf]
        %v4186 = vld [vmem:[#allocation2 + $0x64] sm:$0xf]
        %v4187 = vld [vmem:[#allocation2 + $0x68] sm:$0xf]
        %v4188 = vld [vmem:[#allocation2 + $0x6c] sm:$0xf]
        %v4189 = vld [vmem:[#allocation2 + $0x70] sm:$0xf]
        %v4190 = vld [vmem:[#allocation2 + $0x74] sm:$0xf]
        %v4191 = vld [vmem:[#allocation2 + $0x78] sm:$0xf]
        %v4192 = vld [vmem:[#allocation2 + $0x7c] sm:$0xf]
        %v4209 = vunpack.c.l.b16 %v4161
        %v4210 = vunpack.c.l.b16 %v4162
        %v4211 = vunpack.c.l.b16 %v4163
        %v4212 = vunpack.c.l.b16 %v4164
        %v4213 = vunpack.c.l.b16 %v4165
        %v4214 = vunpack.c.l.b16 %v4166
        %v4215 = vunpack.c.l.b16 %v4167
        %v4216 = vunpack.c.l.b16 %v4168
        %v4217 = vunpack.c.l.b16 %v4169
        %v4218 = vunpack.c.l.b16 %v4170
        %v4219 = vunpack.c.l.b16 %v4171
        %v4220 = vunpack.c.l.b16 %v4172
        %v4221 = vunpack.c.l.b16 %v4173
        %v4222 = vunpack.c.l.b16 %v4174
        %v4223 = vunpack.c.l.b16 %v4175
        %v4224 = vunpack.c.l.b16 %v4176
        %v4225 = vpack.c.b16 %v4210, %v4209
        %v4226 = vpack.c.b16 %v4212, %v4211
        %v4227 = vpack.c.b16 %v4214, %v4213
        %v4228 = vpack.c.b16 %v4216, %v4215
        %v4229 = vpack.c.b16 %v4218, %v4217
        %v4230 = vpack.c.b16 %v4220, %v4219
        %v4231 = vpack.c.b16 %v4222, %v4221
        %v4232 = vpack.c.b16 %v4224, %v4223
        %v4257 = vunpack.c.l.b16 %v4177
        %v4258 = vunpack.c.l.b16 %v4178
        %v4259 = vunpack.c.l.b16 %v4179
        %v4260 = vunpack.c.l.b16 %v4180
        %v4261 = vunpack.c.l.b16 %v4181
        %v4262 = vunpack.c.l.b16 %v4182
        %v4263 = vunpack.c.l.b16 %v4183
        %v4264 = vunpack.c.l.b16 %v4184
        %v4265 = vunpack.c.l.b16 %v4185
        %v4266 = vunpack.c.l.b16 %v4186
        %v4267 = vunpack.c.l.b16 %v4187
        %v4268 = vunpack.c.l.b16 %v4188
        %v4269 = vunpack.c.l.b16 %v4189
        %v4270 = vunpack.c.l.b16 %v4190
        %v4271 = vunpack.c.l.b16 %v4191
        %v4272 = vunpack.c.l.b16 %v4192
        %v4273 = vpack.c.b16 %v4258, %v4257
        %v4274 = vpack.c.b16 %v4260, %v4259
        %v4275 = vpack.c.b16 %v4262, %v4261
        %v4276 = vpack.c.b16 %v4264, %v4263
        %v4277 = vpack.c.b16 %v4266, %v4265
        %v4278 = vpack.c.b16 %v4268, %v4267
        %v4279 = vpack.c.b16 %v4270, %v4269
        %v4280 = vpack.c.b16 %v4272, %v4271
        %4289 = vmatpush.bf16.msra.mxu0 %v4280
        %4290 = vmatpush.bf16.msra.mxu0 %v4279
        %4291 = vmatpush.bf16.msra.mxu0 %v4278
        %4292 = vmatpush.bf16.msra.mxu0 %v4277
        %4293 = vmatpush.bf16.msra.mxu0 %v4276
        %4294 = vmatpush.bf16.msra.mxu0 %v4275
        %4295 = vmatpush.bf16.msra.mxu0 %v4274
        %4296 = vmatpush.bf16.msra.mxu0 %v4273
        %4297 = vmatmul.bf16.gmra.mxu0 %v4225
        %v4298 = vpop.f32.mrf.mxu0
        %v4299 = vadd.f32 %v3967, %v4298
        %v4300 = vpop.f32.mrf.mxu0
        %v4301 = vadd.f32 %v3967, %v4300
        %4302 = vmatmul.bf16.gmra.mxu0 %v4226
        %v4303 = vpop.f32.mrf.mxu0
        %v4304 = vadd.f32 %v3967, %v4303
        %v4305 = vpop.f32.mrf.mxu0
        %v4306 = vadd.f32 %v3967, %v4305
        %4307 = vmatmul.bf16.gmra.mxu0 %v4227
        %v4308 = vpop.f32.mrf.mxu0
        %v4309 = vadd.f32 %v3967, %v4308
        %v4310 = vpop.f32.mrf.mxu0
        %v4311 = vadd.f32 %v3967, %v4310
        %4312 = vmatmul.bf16.gmra.mxu0 %v4228
        %v4313 = vpop.f32.mrf.mxu0
        %v4314 = vadd.f32 %v3967, %v4313
        %v4315 = vpop.f32.mrf.mxu0
        %v4316 = vadd.f32 %v3967, %v4315
        %4317 = vmatmul.bf16.gmra.mxu0 %v4229
        %v4318 = vpop.f32.mrf.mxu0
        %v4319 = vadd.f32 %v3967, %v4318
        %v4320 = vpop.f32.mrf.mxu0
        %v4321 = vadd.f32 %v3967, %v4320
        %4322 = vmatmul.bf16.gmra.mxu0 %v4230
        %v4323 = vpop.f32.mrf.mxu0
        %v4324 = vadd.f32 %v3967, %v4323
        %v4325 = vpop.f32.mrf.mxu0
        %v4326 = vadd.f32 %v3967, %v4325
        %4327 = vmatmul.bf16.gmra.mxu0 %v4231
        %v4328 = vpop.f32.mrf.mxu0
        %v4329 = vadd.f32 %v3967, %v4328
        %v4330 = vpop.f32.mrf.mxu0
        %v4331 = vadd.f32 %v3967, %v4330
        %4332 = vmatmul.bf16.gmra.mxu0 %v4232
        %v4333 = vpop.f32.mrf.mxu0
        %v4334 = vadd.f32 %v3967, %v4333
        %v4335 = vpop.f32.mrf.mxu0
        %v4336 = vadd.f32 %v3967, %v4335
        %4337 = vdwg.mxu0
        %v4338 = vmax.f32 %v4299, 0.0
        %v4339 = vmax.f32 %v4301, 0.0
        %v4340 = vmax.f32 %v4304, 0.0
        %v4341 = vmax.f32 %v4306, 0.0
        %v4342 = vmax.f32 %v4309, 0.0
        %v4343 = vmax.f32 %v4311, 0.0
        %v4344 = vmax.f32 %v4314, 0.0
        %v4345 = vmax.f32 %v4316, 0.0
        %v4346 = vmax.f32 %v4319, 0.0
        %v4347 = vmax.f32 %v4321, 0.0
        %v4348 = vmax.f32 %v4324, 0.0
        %v4349 = vmax.f32 %v4326, 0.0
        %v4350 = vmax.f32 %v4329, 0.0
        %v4351 = vmax.f32 %v4331, 0.0
        %v4352 = vmax.f32 %v4334, 0.0
        %v4353 = vmax.f32 %v4336, 0.0
        %v4354 = vpack.c.bf16 %v4338, %v4338
        %v4355 = vpack.c.bf16 %v4339, %v4339
        %v4356 = vpack.c.bf16 %v4340, %v4340
        %v4357 = vpack.c.bf16 %v4341, %v4341
        %v4358 = vpack.c.bf16 %v4342, %v4342
        %v4359 = vpack.c.bf16 %v4343, %v4343
        %v4360 = vpack.c.bf16 %v4344, %v4344
        %v4361 = vpack.c.bf16 %v4345, %v4345
        %v4362 = vpack.c.bf16 %v4346, %v4346
        %v4363 = vpack.c.bf16 %v4347, %v4347
        %v4364 = vpack.c.bf16 %v4348, %v4348
        %v4365 = vpack.c.bf16 %v4349, %v4349
        %v4366 = vpack.c.bf16 %v4350, %v4350
        %v4367 = vpack.c.bf16 %v4351, %v4351
        %v4368 = vpack.c.bf16 %v4352, %v4352
        %v4369 = vpack.c.bf16 %v4353, %v4353
        %4370 = vst [vmem:[#allocation3 + $0x40] sm:$0xf] %v4354
        %4371 = vst [vmem:[#allocation3 + $0x44] sm:$0xf] %v4355
        %4372 = vst [vmem:[#allocation3 + $0x48] sm:$0xf] %v4356
        %4373 = vst [vmem:[#allocation3 + $0x4c] sm:$0xf] %v4357
        %4374 = vst [vmem:[#allocation3 + $0x50] sm:$0xf] %v4358
        %4375 = vst [vmem:[#allocation3 + $0x54] sm:$0xf] %v4359
        %4376 = vst [vmem:[#allocation3 + $0x58] sm:$0xf] %v4360
        %4377 = vst [vmem:[#allocation3 + $0x5c] sm:$0xf] %v4361
        %4378 = vst [vmem:[#allocation3 + $0x60] sm:$0xf] %v4362
        %4379 = vst [vmem:[#allocation3 + $0x64] sm:$0xf] %v4363
        %4380 = vst [vmem:[#allocation3 + $0x68] sm:$0xf] %v4364
        %4381 = vst [vmem:[#allocation3 + $0x6c] sm:$0xf] %v4365
        %4382 = vst [vmem:[#allocation3 + $0x70] sm:$0xf] %v4366
        %4383 = vst [vmem:[#allocation3 + $0x74] sm:$0xf] %v4367
        %4384 = vst [vmem:[#allocation3 + $0x78] sm:$0xf] %v4368
        %4385 = vst [vmem:[#allocation3 + $0x7c] sm:$0xf] %v4369
        %v4386 = vld [vmem:[%s1380] sm:$0xf]
        %v4387 = vld [vmem:[%s1380 + $0x4] sm:$0xf]
        %v4388 = vld [vmem:[%s1380 + $0x8] sm:$0xf]
        %v4389 = vld [vmem:[%s1380 + $0xc] sm:$0xf]
        %v4390 = vld [vmem:[%s1380 + $0x10] sm:$0xf]
        %v4391 = vld [vmem:[%s1380 + $0x14] sm:$0xf]
        %v4392 = vld [vmem:[%s1380 + $0x18] sm:$0xf]
        %v4393 = vld [vmem:[%s1380 + $0x1c] sm:$0xf]
        %v4394 = vld [vmem:[%s1380 + $0x20] sm:$0xf]
        %v4395 = vld [vmem:[%s1380 + $0x24] sm:$0xf]
        %v4396 = vld [vmem:[%s1380 + $0x28] sm:$0xf]
        %v4397 = vld [vmem:[%s1380 + $0x2c] sm:$0xf]
        %v4398 = vld [vmem:[%s1380 + $0x30] sm:$0xf]
        %v4399 = vld [vmem:[%s1380 + $0x34] sm:$0xf]
        %v4400 = vld [vmem:[%s1380 + $0x38] sm:$0xf]
        %v4401 = vld [vmem:[%s1380 + $0x3c] sm:$0xf]
        %v4402 = vld [vmem:[#allocation2 + $0x80] sm:$0xf]
        %v4403 = vld [vmem:[#allocation2 + $0x84] sm:$0xf]
        %v4404 = vld [vmem:[#allocation2 + $0x88] sm:$0xf]
        %v4405 = vld [vmem:[#allocation2 + $0x8c] sm:$0xf]
        %v4406 = vld [vmem:[#allocation2 + $0x90] sm:$0xf]
        %v4407 = vld [vmem:[#allocation2 + $0x94] sm:$0xf]
        %v4408 = vld [vmem:[#allocation2 + $0x98] sm:$0xf]
        %v4409 = vld [vmem:[#allocation2 + $0x9c] sm:$0xf]
        %v4410 = vld [vmem:[#allocation2 + $0xa0] sm:$0xf]
        %v4411 = vld [vmem:[#allocation2 + $0xa4] sm:$0xf]
        %v4412 = vld [vmem:[#allocation2 + $0xa8] sm:$0xf]
        %v4413 = vld [vmem:[#allocation2 + $0xac] sm:$0xf]
        %v4414 = vld [vmem:[#allocation2 + $0xb0] sm:$0xf]
        %v4415 = vld [vmem:[#allocation2 + $0xb4] sm:$0xf]
        %v4416 = vld [vmem:[#allocation2 + $0xb8] sm:$0xf]
        %v4417 = vld [vmem:[#allocation2 + $0xbc] sm:$0xf]
        %v4434 = vunpack.c.l.b16 %v4386
        %v4435 = vunpack.c.l.b16 %v4387
        %v4436 = vunpack.c.l.b16 %v4388
        %v4437 = vunpack.c.l.b16 %v4389
        %v4438 = vunpack.c.l.b16 %v4390
        %v4439 = vunpack.c.l.b16 %v4391
        %v4440 = vunpack.c.l.b16 %v4392
        %v4441 = vunpack.c.l.b16 %v4393
        %v4442 = vunpack.c.l.b16 %v4394
        %v4443 = vunpack.c.l.b16 %v4395
        %v4444 = vunpack.c.l.b16 %v4396
        %v4445 = vunpack.c.l.b16 %v4397
        %v4446 = vunpack.c.l.b16 %v4398
        %v4447 = vunpack.c.l.b16 %v4399
        %v4448 = vunpack.c.l.b16 %v4400
        %v4449 = vunpack.c.l.b16 %v4401
        %v4450 = vpack.c.b16 %v4435, %v4434
        %v4451 = vpack.c.b16 %v4437, %v4436
        %v4452 = vpack.c.b16 %v4439, %v4438
        %v4453 = vpack.c.b16 %v4441, %v4440
        %v4454 = vpack.c.b16 %v4443, %v4442
        %v4455 = vpack.c.b16 %v4445, %v4444
        %v4456 = vpack.c.b16 %v4447, %v4446
        %v4457 = vpack.c.b16 %v4449, %v4448
        %v4482 = vunpack.c.l.b16 %v4402
        %v4483 = vunpack.c.l.b16 %v4403
        %v4484 = vunpack.c.l.b16 %v4404
        %v4485 = vunpack.c.l.b16 %v4405
        %v4486 = vunpack.c.l.b16 %v4406
        %v4487 = vunpack.c.l.b16 %v4407
        %v4488 = vunpack.c.l.b16 %v4408
        %v4489 = vunpack.c.l.b16 %v4409
        %v4490 = vunpack.c.l.b16 %v4410
        %v4491 = vunpack.c.l.b16 %v4411
        %v4492 = vunpack.c.l.b16 %v4412
        %v4493 = vunpack.c.l.b16 %v4413
        %v4494 = vunpack.c.l.b16 %v4414
        %v4495 = vunpack.c.l.b16 %v4415
        %v4496 = vunpack.c.l.b16 %v4416
        %v4497 = vunpack.c.l.b16 %v4417
        %v4498 = vpack.c.b16 %v4483, %v4482
        %v4499 = vpack.c.b16 %v4485, %v4484
        %v4500 = vpack.c.b16 %v4487, %v4486
        %v4501 = vpack.c.b16 %v4489, %v4488
        %v4502 = vpack.c.b16 %v4491, %v4490
        %v4503 = vpack.c.b16 %v4493, %v4492
        %v4504 = vpack.c.b16 %v4495, %v4494
        %v4505 = vpack.c.b16 %v4497, %v4496
        %4514 = vmatpush.bf16.msra.mxu0 %v4505
        %4515 = vmatpush.bf16.msra.mxu0 %v4504
        %4516 = vmatpush.bf16.msra.mxu0 %v4503
        %4517 = vmatpush.bf16.msra.mxu0 %v4502
        %4518 = vmatpush.bf16.msra.mxu0 %v4501
        %4519 = vmatpush.bf16.msra.mxu0 %v4500
        %4520 = vmatpush.bf16.msra.mxu0 %v4499
        %4521 = vmatpush.bf16.msra.mxu0 %v4498
        %4522 = vmatmul.bf16.gmra.mxu0 %v4450
        %v4523 = vpop.f32.mrf.mxu0
        %v4524 = vadd.f32 %v3967, %v4523
        %v4525 = vpop.f32.mrf.mxu0
        %v4526 = vadd.f32 %v3967, %v4525
        %4527 = vmatmul.bf16.gmra.mxu0 %v4451
        %v4528 = vpop.f32.mrf.mxu0
        %v4529 = vadd.f32 %v3967, %v4528
        %v4530 = vpop.f32.mrf.mxu0
        %v4531 = vadd.f32 %v3967, %v4530
        %4532 = vmatmul.bf16.gmra.mxu0 %v4452
        %v4533 = vpop.f32.mrf.mxu0
        %v4534 = vadd.f32 %v3967, %v4533
        %v4535 = vpop.f32.mrf.mxu0
        %v4536 = vadd.f32 %v3967, %v4535
        %4537 = vmatmul.bf16.gmra.mxu0 %v4453
        %v4538 = vpop.f32.mrf.mxu0
        %v4539 = vadd.f32 %v3967, %v4538
        %v4540 = vpop.f32.mrf.mxu0
        %v4541 = vadd.f32 %v3967, %v4540
        %4542 = vmatmul.bf16.gmra.mxu0 %v4454
        %v4543 = vpop.f32.mrf.mxu0
        %v4544 = vadd.f32 %v3967, %v4543
        %v4545 = vpop.f32.mrf.mxu0
        %v4546 = vadd.f32 %v3967, %v4545
        %4547 = vmatmul.bf16.gmra.mxu0 %v4455
        %v4548 = vpop.f32.mrf.mxu0
        %v4549 = vadd.f32 %v3967, %v4548
        %v4550 = vpop.f32.mrf.mxu0
        %v4551 = vadd.f32 %v3967, %v4550
        %4552 = vmatmul.bf16.gmra.mxu0 %v4456
        %v4553 = vpop.f32.mrf.mxu0
        %v4554 = vadd.f32 %v3967, %v4553
        %v4555 = vpop.f32.mrf.mxu0
        %v4556 = vadd.f32 %v3967, %v4555
        %4557 = vmatmul.bf16.gmra.mxu0 %v4457
        %v4558 = vpop.f32.mrf.mxu0
        %v4559 = vadd.f32 %v3967, %v4558
        %v4560 = vpop.f32.mrf.mxu0
        %v4561 = vadd.f32 %v3967, %v4560
        %4562 = vdwg.mxu0
        %v4563 = vmax.f32 %v4524, 0.0
        %v4564 = vmax.f32 %v4526, 0.0
        %v4565 = vmax.f32 %v4529, 0.0
        %v4566 = vmax.f32 %v4531, 0.0
        %v4567 = vmax.f32 %v4534, 0.0
        %v4568 = vmax.f32 %v4536, 0.0
        %v4569 = vmax.f32 %v4539, 0.0
        %v4570 = vmax.f32 %v4541, 0.0
        %v4571 = vmax.f32 %v4544, 0.0
        %v4572 = vmax.f32 %v4546, 0.0
        %v4573 = vmax.f32 %v4549, 0.0
        %v4574 = vmax.f32 %v4551, 0.0
        %v4575 = vmax.f32 %v4554, 0.0
        %v4576 = vmax.f32 %v4556, 0.0
        %v4577 = vmax.f32 %v4559, 0.0
        %v4578 = vmax.f32 %v4561, 0.0
        %v4579 = vpack.c.bf16 %v4563, %v4563
        %v4580 = vpack.c.bf16 %v4564, %v4564
        %v4581 = vpack.c.bf16 %v4565, %v4565
        %v4582 = vpack.c.bf16 %v4566, %v4566
        %v4583 = vpack.c.bf16 %v4567, %v4567
        %v4584 = vpack.c.bf16 %v4568, %v4568
        %v4585 = vpack.c.bf16 %v4569, %v4569
        %v4586 = vpack.c.bf16 %v4570, %v4570
        %v4587 = vpack.c.bf16 %v4571, %v4571
        %v4588 = vpack.c.bf16 %v4572, %v4572
        %v4589 = vpack.c.bf16 %v4573, %v4573
        %v4590 = vpack.c.bf16 %v4574, %v4574
        %v4591 = vpack.c.bf16 %v4575, %v4575
        %v4592 = vpack.c.bf16 %v4576, %v4576
        %v4593 = vpack.c.bf16 %v4577, %v4577
        %v4594 = vpack.c.bf16 %v4578, %v4578
        %4595 = vst [vmem:[#allocation3 + $0x80] sm:$0xf] %v4579
        %4596 = vst [vmem:[#allocation3 + $0x84] sm:$0xf] %v4580
        %4597 = vst [vmem:[#allocation3 + $0x88] sm:$0xf] %v4581
        %4598 = vst [vmem:[#allocation3 + $0x8c] sm:$0xf] %v4582
        %4599 = vst [vmem:[#allocation3 + $0x90] sm:$0xf] %v4583
        %4600 = vst [vmem:[#allocation3 + $0x94] sm:$0xf] %v4584
        %4601 = vst [vmem:[#allocation3 + $0x98] sm:$0xf] %v4585
        %4602 = vst [vmem:[#allocation3 + $0x9c] sm:$0xf] %v4586
        %4603 = vst [vmem:[#allocation3 + $0xa0] sm:$0xf] %v4587
        %4604 = vst [vmem:[#allocation3 + $0xa4] sm:$0xf] %v4588
        %4605 = vst [vmem:[#allocation3 + $0xa8] sm:$0xf] %v4589
        %4606 = vst [vmem:[#allocation3 + $0xac] sm:$0xf] %v4590
        %4607 = vst [vmem:[#allocation3 + $0xb0] sm:$0xf] %v4591
        %4608 = vst [vmem:[#allocation3 + $0xb4] sm:$0xf] %v4592
        %4609 = vst [vmem:[#allocation3 + $0xb8] sm:$0xf] %v4593
        %4610 = vst [vmem:[#allocation3 + $0xbc] sm:$0xf] %v4594
        %v4611 = vld [vmem:[%s1606] sm:$0xf]
        %v4612 = vld [vmem:[%s1606 + $0x4] sm:$0xf]
        %v4613 = vld [vmem:[%s1606 + $0x8] sm:$0xf]
        %v4614 = vld [vmem:[%s1606 + $0xc] sm:$0xf]
        %v4615 = vld [vmem:[%s1606 + $0x10] sm:$0xf]
        %v4616 = vld [vmem:[%s1606 + $0x14] sm:$0xf]
        %v4617 = vld [vmem:[%s1606 + $0x18] sm:$0xf]
        %v4618 = vld [vmem:[%s1606 + $0x1c] sm:$0xf]
        %v4619 = vld [vmem:[%s1606 + $0x20] sm:$0xf]
        %v4620 = vld [vmem:[%s1606 + $0x24] sm:$0xf]
        %v4621 = vld [vmem:[%s1606 + $0x28] sm:$0xf]
        %v4622 = vld [vmem:[%s1606 + $0x2c] sm:$0xf]
        %v4623 = vld [vmem:[%s1606 + $0x30] sm:$0xf]
        %v4624 = vld [vmem:[%s1606 + $0x34] sm:$0xf]
        %v4625 = vld [vmem:[%s1606 + $0x38] sm:$0xf]
        %v4626 = vld [vmem:[%s1606 + $0x3c] sm:$0xf]
        %v4627 = vld [vmem:[#allocation2 + $0xc0] sm:$0xf]
        %v4628 = vld [vmem:[#allocation2 + $0xc4] sm:$0xf]
        %v4629 = vld [vmem:[#allocation2 + $0xc8] sm:$0xf]
        %v4630 = vld [vmem:[#allocation2 + $0xcc] sm:$0xf]
        %v4631 = vld [vmem:[#allocation2 + $0xd0] sm:$0xf]
        %v4632 = vld [vmem:[#allocation2 + $0xd4] sm:$0xf]
        %v4633 = vld [vmem:[#allocation2 + $0xd8] sm:$0xf]
        %v4634 = vld [vmem:[#allocation2 + $0xdc] sm:$0xf]
        %v4635 = vld [vmem:[#allocation2 + $0xe0] sm:$0xf]
        %v4636 = vld [vmem:[#allocation2 + $0xe4] sm:$0xf]
        %v4637 = vld [vmem:[#allocation2 + $0xe8] sm:$0xf]
        %v4638 = vld [vmem:[#allocation2 + $0xec] sm:$0xf]
        %v4639 = vld [vmem:[#allocation2 + $0xf0] sm:$0xf]
        %v4640 = vld [vmem:[#allocation2 + $0xf4] sm:$0xf]
        %v4641 = vld [vmem:[#allocation2 + $0xf8] sm:$0xf]
        %v4642 = vld [vmem:[#allocation2 + $0xfc] sm:$0xf]
        %v4659 = vunpack.c.l.b16 %v4611
        %v4660 = vunpack.c.l.b16 %v4612
        %v4661 = vunpack.c.l.b16 %v4613
        %v4662 = vunpack.c.l.b16 %v4614
        %v4663 = vunpack.c.l.b16 %v4615
        %v4664 = vunpack.c.l.b16 %v4616
        %v4665 = vunpack.c.l.b16 %v4617
        %v4666 = vunpack.c.l.b16 %v4618
        %v4667 = vunpack.c.l.b16 %v4619
        %v4668 = vunpack.c.l.b16 %v4620
        %v4669 = vunpack.c.l.b16 %v4621
        %v4670 = vunpack.c.l.b16 %v4622
        %v4671 = vunpack.c.l.b16 %v4623
        %v4672 = vunpack.c.l.b16 %v4624
        %v4673 = vunpack.c.l.b16 %v4625
        %v4674 = vunpack.c.l.b16 %v4626
        %v4675 = vpack.c.b16 %v4660, %v4659
        %v4676 = vpack.c.b16 %v4662, %v4661
        %v4677 = vpack.c.b16 %v4664, %v4663
        %v4678 = vpack.c.b16 %v4666, %v4665
        %v4679 = vpack.c.b16 %v4668, %v4667
        %v4680 = vpack.c.b16 %v4670, %v4669
        %v4681 = vpack.c.b16 %v4672, %v4671
        %v4682 = vpack.c.b16 %v4674, %v4673
        %v4707 = vunpack.c.l.b16 %v4627
        %v4708 = vunpack.c.l.b16 %v4628
        %v4709 = vunpack.c.l.b16 %v4629
        %v4710 = vunpack.c.l.b16 %v4630
        %v4711 = vunpack.c.l.b16 %v4631
        %v4712 = vunpack.c.l.b16 %v4632
        %v4713 = vunpack.c.l.b16 %v4633
        %v4714 = vunpack.c.l.b16 %v4634
        %v4715 = vunpack.c.l.b16 %v4635
        %v4716 = vunpack.c.l.b16 %v4636
        %v4717 = vunpack.c.l.b16 %v4637
        %v4718 = vunpack.c.l.b16 %v4638
        %v4719 = vunpack.c.l.b16 %v4639
        %v4720 = vunpack.c.l.b16 %v4640
        %v4721 = vunpack.c.l.b16 %v4641
        %v4722 = vunpack.c.l.b16 %v4642
        %v4723 = vpack.c.b16 %v4708, %v4707
        %v4724 = vpack.c.b16 %v4710, %v4709
        %v4725 = vpack.c.b16 %v4712, %v4711
        %v4726 = vpack.c.b16 %v4714, %v4713
        %v4727 = vpack.c.b16 %v4716, %v4715
        %v4728 = vpack.c.b16 %v4718, %v4717
        %v4729 = vpack.c.b16 %v4720, %v4719
        %v4730 = vpack.c.b16 %v4722, %v4721
        %4739 = vmatpush.bf16.msra.mxu0 %v4730
        %4740 = vmatpush.bf16.msra.mxu0 %v4729
        %4741 = vmatpush.bf16.msra.mxu0 %v4728
        %4742 = vmatpush.bf16.msra.mxu0 %v4727
        %4743 = vmatpush.bf16.msra.mxu0 %v4726
        %4744 = vmatpush.bf16.msra.mxu0 %v4725
        %4745 = vmatpush.bf16.msra.mxu0 %v4724
        %4746 = vmatpush.bf16.msra.mxu0 %v4723
        %4747 = vmatmul.bf16.gmra.mxu0 %v4675
        %v4748 = vpop.f32.mrf.mxu0
        %v4749 = vadd.f32 %v3967, %v4748
        %v4750 = vpop.f32.mrf.mxu0
        %v4751 = vadd.f32 %v3967, %v4750
        %4752 = vmatmul.bf16.gmra.mxu0 %v4676
        %v4753 = vpop.f32.mrf.mxu0
        %v4754 = vadd.f32 %v3967, %v4753
        %v4755 = vpop.f32.mrf.mxu0
        %v4756 = vadd.f32 %v3967, %v4755
        %4757 = vmatmul.bf16.gmra.mxu0 %v4677
        %v4758 = vpop.f32.mrf.mxu0
        %v4759 = vadd.f32 %v3967, %v4758
        %v4760 = vpop.f32.mrf.mxu0
        %v4761 = vadd.f32 %v3967, %v4760
        %4762 = vmatmul.bf16.gmra.mxu0 %v4678
        %v4763 = vpop.f32.mrf.mxu0
        %v4764 = vadd.f32 %v3967, %v4763
        %v4765 = vpop.f32.mrf.mxu0
        %v4766 = vadd.f32 %v3967, %v4765
        %4767 = vmatmul.bf16.gmra.mxu0 %v4679
        %v4768 = vpop.f32.mrf.mxu0
        %v4769 = vadd.f32 %v3967, %v4768
        %v4770 = vpop.f32.mrf.mxu0
        %v4771 = vadd.f32 %v3967, %v4770
        %4772 = vmatmul.bf16.gmra.mxu0 %v4680
        %v4773 = vpop.f32.mrf.mxu0
        %v4774 = vadd.f32 %v3967, %v4773
        %v4775 = vpop.f32.mrf.mxu0
        %v4776 = vadd.f32 %v3967, %v4775
        %4777 = vmatmul.bf16.gmra.mxu0 %v4681
        %v4778 = vpop.f32.mrf.mxu0
        %v4779 = vadd.f32 %v3967, %v4778
        %v4780 = vpop.f32.mrf.mxu0
        %v4781 = vadd.f32 %v3967, %v4780
        %4782 = vmatmul.bf16.gmra.mxu0 %v4682
        %v4783 = vpop.f32.mrf.mxu0
        %v4784 = vadd.f32 %v3967, %v4783
        %v4785 = vpop.f32.mrf.mxu0
        %v4786 = vadd.f32 %v3967, %v4785
        %4787 = vdwg.mxu0
        %v4788 = vmax.f32 %v4749, 0.0
        %v4789 = vmax.f32 %v4751, 0.0
        %v4790 = vmax.f32 %v4754, 0.0
        %v4791 = vmax.f32 %v4756, 0.0
        %v4792 = vmax.f32 %v4759, 0.0
        %v4793 = vmax.f32 %v4761, 0.0
        %v4794 = vmax.f32 %v4764, 0.0
        %v4795 = vmax.f32 %v4766, 0.0
        %v4796 = vmax.f32 %v4769, 0.0
        %v4797 = vmax.f32 %v4771, 0.0
        %v4798 = vmax.f32 %v4774, 0.0
        %v4799 = vmax.f32 %v4776, 0.0
        %v4800 = vmax.f32 %v4779, 0.0
        %v4801 = vmax.f32 %v4781, 0.0
        %v4802 = vmax.f32 %v4784, 0.0
        %v4803 = vmax.f32 %v4786, 0.0
        %v4804 = vpack.c.bf16 %v4788, %v4788
        %v4805 = vpack.c.bf16 %v4789, %v4789
        %v4806 = vpack.c.bf16 %v4790, %v4790
        %v4807 = vpack.c.bf16 %v4791, %v4791
        %v4808 = vpack.c.bf16 %v4792, %v4792
        %v4809 = vpack.c.bf16 %v4793, %v4793
        %v4810 = vpack.c.bf16 %v4794, %v4794
        %v4811 = vpack.c.bf16 %v4795, %v4795
        %v4812 = vpack.c.bf16 %v4796, %v4796
        %v4813 = vpack.c.bf16 %v4797, %v4797
        %v4814 = vpack.c.bf16 %v4798, %v4798
        %v4815 = vpack.c.bf16 %v4799, %v4799
        %v4816 = vpack.c.bf16 %v4800, %v4800
        %v4817 = vpack.c.bf16 %v4801, %v4801
        %v4818 = vpack.c.bf16 %v4802, %v4802
        %v4819 = vpack.c.bf16 %v4803, %v4803
        %4820 = vst [vmem:[#allocation3 + $0xc0] sm:$0xf] %v4804
        %4821 = vst [vmem:[#allocation3 + $0xc4] sm:$0xf] %v4805
        %4822 = vst [vmem:[#allocation3 + $0xc8] sm:$0xf] %v4806
        %4823 = vst [vmem:[#allocation3 + $0xcc] sm:$0xf] %v4807
        %4824 = vst [vmem:[#allocation3 + $0xd0] sm:$0xf] %v4808
        %4825 = vst [vmem:[#allocation3 + $0xd4] sm:$0xf] %v4809
        %4826 = vst [vmem:[#allocation3 + $0xd8] sm:$0xf] %v4810
        %4827 = vst [vmem:[#allocation3 + $0xdc] sm:$0xf] %v4811
        %4828 = vst [vmem:[#allocation3 + $0xe0] sm:$0xf] %v4812
        %4829 = vst [vmem:[#allocation3 + $0xe4] sm:$0xf] %v4813
        %4830 = vst [vmem:[#allocation3 + $0xe8] sm:$0xf] %v4814
        %4831 = vst [vmem:[#allocation3 + $0xec] sm:$0xf] %v4815
        %4832 = vst [vmem:[#allocation3 + $0xf0] sm:$0xf] %v4816
        %4833 = vst [vmem:[#allocation3 + $0xf4] sm:$0xf] %v4817
        %4834 = vst [vmem:[#allocation3 + $0xf8] sm:$0xf] %v4818
        %4835 = vst [vmem:[#allocation3 + $0xfc] sm:$0xf] %v4819
        %v4836 = vld [vmem:[#allocation3] sm:$0xf]
        %v4837 = vld [vmem:[#allocation3 + $0x4] sm:$0xf]
        %v4838 = vld [vmem:[#allocation3 + $0x8] sm:$0xf]
        %v4839 = vld [vmem:[#allocation3 + $0xc] sm:$0xf]
        %v4840 = vld [vmem:[#allocation3 + $0x10] sm:$0xf]
        %v4841 = vld [vmem:[#allocation3 + $0x14] sm:$0xf]
        %v4842 = vld [vmem:[#allocation3 + $0x18] sm:$0xf]
        %v4843 = vld [vmem:[#allocation3 + $0x1c] sm:$0xf]
        %v4844 = vld [vmem:[#allocation3 + $0x20] sm:$0xf]
        %v4845 = vld [vmem:[#allocation3 + $0x24] sm:$0xf]
        %v4846 = vld [vmem:[#allocation3 + $0x28] sm:$0xf]
        %v4847 = vld [vmem:[#allocation3 + $0x2c] sm:$0xf]
        %v4848 = vld [vmem:[#allocation3 + $0x30] sm:$0xf]
        %v4849 = vld [vmem:[#allocation3 + $0x34] sm:$0xf]
        %v4850 = vld [vmem:[#allocation3 + $0x38] sm:$0xf]
        %v4851 = vld [vmem:[#allocation3 + $0x3c] sm:$0xf]
        %v4852 = vld [vmem:[#allocation3 + $0x40] sm:$0xf]
        %v4853 = vld [vmem:[#allocation3 + $0x44] sm:$0xf]
        %v4854 = vld [vmem:[#allocation3 + $0x48] sm:$0xf]
        %v4855 = vld [vmem:[#allocation3 + $0x4c] sm:$0xf]
        %v4856 = vld [vmem:[#allocation3 + $0x50] sm:$0xf]
        %v4857 = vld [vmem:[#allocation3 + $0x54] sm:$0xf]
        %v4858 = vld [vmem:[#allocation3 + $0x58] sm:$0xf]
        %v4859 = vld [vmem:[#allocation3 + $0x5c] sm:$0xf]
        %v4860 = vld [vmem:[#allocation3 + $0x60] sm:$0xf]
        %v4861 = vld [vmem:[#allocation3 + $0x64] sm:$0xf]
        %v4862 = vld [vmem:[#allocation3 + $0x68] sm:$0xf]
        %v4863 = vld [vmem:[#allocation3 + $0x6c] sm:$0xf]
        %v4864 = vld [vmem:[#allocation3 + $0x70] sm:$0xf]
        %v4865 = vld [vmem:[#allocation3 + $0x74] sm:$0xf]
        %v4866 = vld [vmem:[#allocation3 + $0x78] sm:$0xf]
        %v4867 = vld [vmem:[#allocation3 + $0x7c] sm:$0xf]
        %v4868 = vld [vmem:[#allocation3 + $0x80] sm:$0xf]
        %v4869 = vld [vmem:[#allocation3 + $0x84] sm:$0xf]
        %v4870 = vld [vmem:[#allocation3 + $0x88] sm:$0xf]
        %v4871 = vld [vmem:[#allocation3 + $0x8c] sm:$0xf]
        %v4872 = vld [vmem:[#allocation3 + $0x90] sm:$0xf]
        %v4873 = vld [vmem:[#allocation3 + $0x94] sm:$0xf]
        %v4874 = vld [vmem:[#allocation3 + $0x98] sm:$0xf]
        %v4875 = vld [vmem:[#allocation3 + $0x9c] sm:$0xf]
        %v4876 = vld [vmem:[#allocation3 + $0xa0] sm:$0xf]
        %v4877 = vld [vmem:[#allocation3 + $0xa4] sm:$0xf]
        %v4878 = vld [vmem:[#allocation3 + $0xa8] sm:$0xf]
        %v4879 = vld [vmem:[#allocation3 + $0xac] sm:$0xf]
        %v4880 = vld [vmem:[#allocation3 + $0xb0] sm:$0xf]
        %v4881 = vld [vmem:[#allocation3 + $0xb4] sm:$0xf]
        %v4882 = vld [vmem:[#allocation3 + $0xb8] sm:$0xf]
        %v4883 = vld [vmem:[#allocation3 + $0xbc] sm:$0xf]
        %v4884 = vld [vmem:[#allocation3 + $0xc0] sm:$0xf]
        %v4885 = vld [vmem:[#allocation3 + $0xc4] sm:$0xf]
        %v4886 = vld [vmem:[#allocation3 + $0xc8] sm:$0xf]
        %v4887 = vld [vmem:[#allocation3 + $0xcc] sm:$0xf]
        %v4888 = vld [vmem:[#allocation3 + $0xd0] sm:$0xf]
        %v4889 = vld [vmem:[#allocation3 + $0xd4] sm:$0xf]
        %v4890 = vld [vmem:[#allocation3 + $0xd8] sm:$0xf]
        %v4891 = vld [vmem:[#allocation3 + $0xdc] sm:$0xf]
        %v4892 = vld [vmem:[#allocation3 + $0xe0] sm:$0xf]
        %v4893 = vld [vmem:[#allocation3 + $0xe4] sm:$0xf]
        %v4894 = vld [vmem:[#allocation3 + $0xe8] sm:$0xf]
        %v4895 = vld [vmem:[#allocation3 + $0xec] sm:$0xf]
        %v4896 = vld [vmem:[#allocation3 + $0xf0] sm:$0xf]
        %v4897 = vld [vmem:[#allocation3 + $0xf4] sm:$0xf]
        %v4898 = vld [vmem:[#allocation3 + $0xf8] sm:$0xf]
        %v4899 = vld [vmem:[#allocation3 + $0xfc] sm:$0xf]
        %v4900 = vunpack.c.l.bf16 %v4836
        %v4901 = vunpack.c.l.bf16 %v4837
        %v4902 = vunpack.c.l.bf16 %v4838
        %v4903 = vunpack.c.l.bf16 %v4839
        %v4904 = vunpack.c.l.bf16 %v4840
        %v4905 = vunpack.c.l.bf16 %v4841
        %v4906 = vunpack.c.l.bf16 %v4842
        %v4907 = vunpack.c.l.bf16 %v4843
        %v4908 = vunpack.c.l.bf16 %v4844
        %v4909 = vunpack.c.l.bf16 %v4845
        %v4910 = vunpack.c.l.bf16 %v4846
        %v4911 = vunpack.c.l.bf16 %v4847
        %v4912 = vunpack.c.l.bf16 %v4848
        %v4913 = vunpack.c.l.bf16 %v4849
        %v4914 = vunpack.c.l.bf16 %v4850
        %v4915 = vunpack.c.l.bf16 %v4851
        %v4916 = vunpack.c.l.bf16 %v4852
        %v4917 = vunpack.c.l.bf16 %v4853
        %v4918 = vunpack.c.l.bf16 %v4854
        %v4919 = vunpack.c.l.bf16 %v4855
        %v4920 = vunpack.c.l.bf16 %v4856
        %v4921 = vunpack.c.l.bf16 %v4857
        %v4922 = vunpack.c.l.bf16 %v4858
        %v4923 = vunpack.c.l.bf16 %v4859
        %v4924 = vunpack.c.l.bf16 %v4860
        %v4925 = vunpack.c.l.bf16 %v4861
        %v4926 = vunpack.c.l.bf16 %v4862
        %v4927 = vunpack.c.l.bf16 %v4863
        %v4928 = vunpack.c.l.bf16 %v4864
        %v4929 = vunpack.c.l.bf16 %v4865
        %v4930 = vunpack.c.l.bf16 %v4866
        %v4931 = vunpack.c.l.bf16 %v4867
        %v4932 = vunpack.c.l.bf16 %v4868
        %v4933 = vunpack.c.l.bf16 %v4869
        %v4934 = vunpack.c.l.bf16 %v4870
        %v4935 = vunpack.c.l.bf16 %v4871
        %v4936 = vunpack.c.l.bf16 %v4872
        %v4937 = vunpack.c.l.bf16 %v4873
        %v4938 = vunpack.c.l.bf16 %v4874
        %v4939 = vunpack.c.l.bf16 %v4875
        %v4940 = vunpack.c.l.bf16 %v4876
        %v4941 = vunpack.c.l.bf16 %v4877
        %v4942 = vunpack.c.l.bf16 %v4878
        %v4943 = vunpack.c.l.bf16 %v4879
        %v4944 = vunpack.c.l.bf16 %v4880
        %v4945 = vunpack.c.l.bf16 %v4881
        %v4946 = vunpack.c.l.bf16 %v4882
        %v4947 = vunpack.c.l.bf16 %v4883
        %v4948 = vunpack.c.l.bf16 %v4884
        %v4949 = vunpack.c.l.bf16 %v4885
        %v4950 = vunpack.c.l.bf16 %v4886
        %v4951 = vunpack.c.l.bf16 %v4887
        %v4952 = vunpack.c.l.bf16 %v4888
        %v4953 = vunpack.c.l.bf16 %v4889
        %v4954 = vunpack.c.l.bf16 %v4890
        %v4955 = vunpack.c.l.bf16 %v4891
        %v4956 = vunpack.c.l.bf16 %v4892
        %v4957 = vunpack.c.l.bf16 %v4893
        %v4958 = vunpack.c.l.bf16 %v4894
        %v4959 = vunpack.c.l.bf16 %v4895
        %v4960 = vunpack.c.l.bf16 %v4896
        %v4961 = vunpack.c.l.bf16 %v4897
        %v4962 = vunpack.c.l.bf16 %v4898
        %v4963 = vunpack.c.l.bf16 %v4899
        %v4964 = vrot.slane %v4900, 4
        %v4965 = vadd.f32 %v4900, %v4964
        %v4966 = vrot.slane %v4965, 2
        %v4967 = vadd.f32 %v4965, %v4966
        %v4968 = vrot.slane %v4967, 1
        %v4969 = vadd.f32 %v4967, %v4968
        %v4970 = vrot.slane %v4901, 4
        %v4971 = vadd.f32 %v4901, %v4970
        %v4972 = vrot.slane %v4971, 2
        %v4973 = vadd.f32 %v4971, %v4972
        %v4974 = vrot.slane %v4973, 1
        %v4975 = vadd.f32 %v4973, %v4974
        %v4976 = vrot.slane %v4902, 4
        %v4977 = vadd.f32 %v4902, %v4976
        %v4978 = vrot.slane %v4977, 2
        %v4979 = vadd.f32 %v4977, %v4978
        %v4980 = vrot.slane %v4979, 1
        %v4981 = vadd.f32 %v4979, %v4980
        %v4982 = vrot.slane %v4903, 4
        %v4983 = vadd.f32 %v4903, %v4982
        %v4984 = vrot.slane %v4983, 2
        %v4985 = vadd.f32 %v4983, %v4984
        %v4986 = vrot.slane %v4985, 1
        %v4987 = vadd.f32 %v4985, %v4986
        %v4988 = vrot.slane %v4904, 4
        %v4989 = vadd.f32 %v4904, %v4988
        %v4990 = vrot.slane %v4989, 2
        %v4991 = vadd.f32 %v4989, %v4990
        %v4992 = vrot.slane %v4991, 1
        %v4993 = vadd.f32 %v4991, %v4992
        %v4994 = vrot.slane %v4905, 4
        %v4995 = vadd.f32 %v4905, %v4994
        %v4996 = vrot.slane %v4995, 2
        %v4997 = vadd.f32 %v4995, %v4996
        %v4998 = vrot.slane %v4997, 1
        %v4999 = vadd.f32 %v4997, %v4998
        %v5000 = vrot.slane %v4906, 4
        %v5001 = vadd.f32 %v4906, %v5000
        %v5002 = vrot.slane %v5001, 2
        %v5003 = vadd.f32 %v5001, %v5002
        %v5004 = vrot.slane %v5003, 1
        %v5005 = vadd.f32 %v5003, %v5004
        %v5006 = vrot.slane %v4907, 4
        %v5007 = vadd.f32 %v4907, %v5006
        %v5008 = vrot.slane %v5007, 2
        %v5009 = vadd.f32 %v5007, %v5008
        %v5010 = vrot.slane %v5009, 1
        %v5011 = vadd.f32 %v5009, %v5010
        %v5012 = vrot.slane %v4908, 4
        %v5013 = vadd.f32 %v4908, %v5012
        %v5014 = vrot.slane %v5013, 2
        %v5015 = vadd.f32 %v5013, %v5014
        %v5016 = vrot.slane %v5015, 1
        %v5017 = vadd.f32 %v5015, %v5016
        %v5018 = vrot.slane %v4909, 4
        %v5019 = vadd.f32 %v4909, %v5018
        %v5020 = vrot.slane %v5019, 2
        %v5021 = vadd.f32 %v5019, %v5020
        %v5022 = vrot.slane %v5021, 1
        %v5023 = vadd.f32 %v5021, %v5022
        %v5024 = vrot.slane %v4910, 4
        %v5025 = vadd.f32 %v4910, %v5024
        %v5026 = vrot.slane %v5025, 2
        %v5027 = vadd.f32 %v5025, %v5026
        %v5028 = vrot.slane %v5027, 1
        %v5029 = vadd.f32 %v5027, %v5028
        %v5030 = vrot.slane %v4911, 4
        %v5031 = vadd.f32 %v4911, %v5030
        %v5032 = vrot.slane %v5031, 2
        %v5033 = vadd.f32 %v5031, %v5032
        %v5034 = vrot.slane %v5033, 1
        %v5035 = vadd.f32 %v5033, %v5034
        %v5036 = vrot.slane %v4912, 4
        %v5037 = vadd.f32 %v4912, %v5036
        %v5038 = vrot.slane %v5037, 2
        %v5039 = vadd.f32 %v5037, %v5038
        %v5040 = vrot.slane %v5039, 1
        %v5041 = vadd.f32 %v5039, %v5040
        %v5042 = vrot.slane %v4913, 4
        %v5043 = vadd.f32 %v4913, %v5042
        %v5044 = vrot.slane %v5043, 2
        %v5045 = vadd.f32 %v5043, %v5044
        %v5046 = vrot.slane %v5045, 1
        %v5047 = vadd.f32 %v5045, %v5046
        %v5048 = vrot.slane %v4914, 4
        %v5049 = vadd.f32 %v4914, %v5048
        %v5050 = vrot.slane %v5049, 2
        %v5051 = vadd.f32 %v5049, %v5050
        %v5052 = vrot.slane %v5051, 1
        %v5053 = vadd.f32 %v5051, %v5052
        %v5054 = vrot.slane %v4915, 4
        %v5055 = vadd.f32 %v4915, %v5054
        %v5056 = vrot.slane %v5055, 2
        %v5057 = vadd.f32 %v5055, %v5056
        %v5058 = vrot.slane %v5057, 1
        %v5059 = vadd.f32 %v5057, %v5058
        %v5060 = vrot.slane %v4916, 4
        %v5061 = vadd.f32 %v4916, %v5060
        %v5062 = vrot.slane %v5061, 2
        %v5063 = vadd.f32 %v5061, %v5062
        %v5064 = vrot.slane %v5063, 1
        %v5065 = vadd.f32 %v5063, %v5064
        %v5066 = vrot.slane %v4917, 4
        %v5067 = vadd.f32 %v4917, %v5066
        %v5068 = vrot.slane %v5067, 2
        %v5069 = vadd.f32 %v5067, %v5068
        %v5070 = vrot.slane %v5069, 1
        %v5071 = vadd.f32 %v5069, %v5070
        %v5072 = vrot.slane %v4918, 4
        %v5073 = vadd.f32 %v4918, %v5072
        %v5074 = vrot.slane %v5073, 2
        %v5075 = vadd.f32 %v5073, %v5074
        %v5076 = vrot.slane %v5075, 1
        %v5077 = vadd.f32 %v5075, %v5076
        %v5078 = vrot.slane %v4919, 4
        %v5079 = vadd.f32 %v4919, %v5078
        %v5080 = vrot.slane %v5079, 2
        %v5081 = vadd.f32 %v5079, %v5080
        %v5082 = vrot.slane %v5081, 1
        %v5083 = vadd.f32 %v5081, %v5082
        %v5084 = vrot.slane %v4920, 4
        %v5085 = vadd.f32 %v4920, %v5084
        %v5086 = vrot.slane %v5085, 2
        %v5087 = vadd.f32 %v5085, %v5086
        %v5088 = vrot.slane %v5087, 1
        %v5089 = vadd.f32 %v5087, %v5088
        %v5090 = vrot.slane %v4921, 4
        %v5091 = vadd.f32 %v4921, %v5090
        %v5092 = vrot.slane %v5091, 2
        %v5093 = vadd.f32 %v5091, %v5092
        %v5094 = vrot.slane %v5093, 1
        %v5095 = vadd.f32 %v5093, %v5094
        %v5096 = vrot.slane %v4922, 4
        %v5097 = vadd.f32 %v4922, %v5096
        %v5098 = vrot.slane %v5097, 2
        %v5099 = vadd.f32 %v5097, %v5098
        %v5100 = vrot.slane %v5099, 1
        %v5101 = vadd.f32 %v5099, %v5100
        %v5102 = vrot.slane %v4923, 4
        %v5103 = vadd.f32 %v4923, %v5102
        %v5104 = vrot.slane %v5103, 2
        %v5105 = vadd.f32 %v5103, %v5104
        %v5106 = vrot.slane %v5105, 1
        %v5107 = vadd.f32 %v5105, %v5106
        %v5108 = vrot.slane %v4924, 4
        %v5109 = vadd.f32 %v4924, %v5108
        %v5110 = vrot.slane %v5109, 2
        %v5111 = vadd.f32 %v5109, %v5110
        %v5112 = vrot.slane %v5111, 1
        %v5113 = vadd.f32 %v5111, %v5112
        %v5114 = vrot.slane %v4925, 4
        %v5115 = vadd.f32 %v4925, %v5114
        %v5116 = vrot.slane %v5115, 2
        %v5117 = vadd.f32 %v5115, %v5116
        %v5118 = vrot.slane %v5117, 1
        %v5119 = vadd.f32 %v5117, %v5118
        %v5120 = vrot.slane %v4926, 4
        %v5121 = vadd.f32 %v4926, %v5120
        %v5122 = vrot.slane %v5121, 2
        %v5123 = vadd.f32 %v5121, %v5122
        %v5124 = vrot.slane %v5123, 1
        %v5125 = vadd.f32 %v5123, %v5124
        %v5126 = vrot.slane %v4927, 4
        %v5127 = vadd.f32 %v4927, %v5126
        %v5128 = vrot.slane %v5127, 2
        %v5129 = vadd.f32 %v5127, %v5128
        %v5130 = vrot.slane %v5129, 1
        %v5131 = vadd.f32 %v5129, %v5130
        %v5132 = vrot.slane %v4928, 4
        %v5133 = vadd.f32 %v4928, %v5132
        %v5134 = vrot.slane %v5133, 2
        %v5135 = vadd.f32 %v5133, %v5134
        %v5136 = vrot.slane %v5135, 1
        %v5137 = vadd.f32 %v5135, %v5136
        %v5138 = vrot.slane %v4929, 4
        %v5139 = vadd.f32 %v4929, %v5138
        %v5140 = vrot.slane %v5139, 2
        %v5141 = vadd.f32 %v5139, %v5140
        %v5142 = vrot.slane %v5141, 1
        %v5143 = vadd.f32 %v5141, %v5142
        %v5144 = vrot.slane %v4930, 4
        %v5145 = vadd.f32 %v4930, %v5144
        %v5146 = vrot.slane %v5145, 2
        %v5147 = vadd.f32 %v5145, %v5146
        %v5148 = vrot.slane %v5147, 1
        %v5149 = vadd.f32 %v5147, %v5148
        %v5150 = vrot.slane %v4931, 4
        %v5151 = vadd.f32 %v4931, %v5150
        %v5152 = vrot.slane %v5151, 2
        %v5153 = vadd.f32 %v5151, %v5152
        %v5154 = vrot.slane %v5153, 1
        %v5155 = vadd.f32 %v5153, %v5154
        %v5156 = vrot.slane %v4932, 4
        %v5157 = vadd.f32 %v4932, %v5156
        %v5158 = vrot.slane %v5157, 2
        %v5159 = vadd.f32 %v5157, %v5158
        %v5160 = vrot.slane %v5159, 1
        %v5161 = vadd.f32 %v5159, %v5160
        %v5162 = vrot.slane %v4933, 4
        %v5163 = vadd.f32 %v4933, %v5162
        %v5164 = vrot.slane %v5163, 2
        %v5165 = vadd.f32 %v5163, %v5164
        %v5166 = vrot.slane %v5165, 1
        %v5167 = vadd.f32 %v5165, %v5166
        %v5168 = vrot.slane %v4934, 4
        %v5169 = vadd.f32 %v4934, %v5168
        %v5170 = vrot.slane %v5169, 2
        %v5171 = vadd.f32 %v5169, %v5170
        %v5172 = vrot.slane %v5171, 1
        %v5173 = vadd.f32 %v5171, %v5172
        %v5174 = vrot.slane %v4935, 4
        %v5175 = vadd.f32 %v4935, %v5174
        %v5176 = vrot.slane %v5175, 2
        %v5177 = vadd.f32 %v5175, %v5176
        %v5178 = vrot.slane %v5177, 1
        %v5179 = vadd.f32 %v5177, %v5178
        %v5180 = vrot.slane %v4936, 4
        %v5181 = vadd.f32 %v4936, %v5180
        %v5182 = vrot.slane %v5181, 2
        %v5183 = vadd.f32 %v5181, %v5182
        %v5184 = vrot.slane %v5183, 1
        %v5185 = vadd.f32 %v5183, %v5184
        %v5186 = vrot.slane %v4937, 4
        %v5187 = vadd.f32 %v4937, %v5186
        %v5188 = vrot.slane %v5187, 2
        %v5189 = vadd.f32 %v5187, %v5188
        %v5190 = vrot.slane %v5189, 1
        %v5191 = vadd.f32 %v5189, %v5190
        %v5192 = vrot.slane %v4938, 4
        %v5193 = vadd.f32 %v4938, %v5192
        %v5194 = vrot.slane %v5193, 2
        %v5195 = vadd.f32 %v5193, %v5194
        %v5196 = vrot.slane %v5195, 1
        %v5197 = vadd.f32 %v5195, %v5196
        %v5198 = vrot.slane %v4939, 4
        %v5199 = vadd.f32 %v4939, %v5198
        %v5200 = vrot.slane %v5199, 2
        %v5201 = vadd.f32 %v5199, %v5200
        %v5202 = vrot.slane %v5201, 1
        %v5203 = vadd.f32 %v5201, %v5202
        %v5204 = vrot.slane %v4940, 4
        %v5205 = vadd.f32 %v4940, %v5204
        %v5206 = vrot.slane %v5205, 2
        %v5207 = vadd.f32 %v5205, %v5206
        %v5208 = vrot.slane %v5207, 1
        %v5209 = vadd.f32 %v5207, %v5208
        %v5210 = vrot.slane %v4941, 4
        %v5211 = vadd.f32 %v4941, %v5210
        %v5212 = vrot.slane %v5211, 2
        %v5213 = vadd.f32 %v5211, %v5212
        %v5214 = vrot.slane %v5213, 1
        %v5215 = vadd.f32 %v5213, %v5214
        %v5216 = vrot.slane %v4942, 4
        %v5217 = vadd.f32 %v4942, %v5216
        %v5218 = vrot.slane %v5217, 2
        %v5219 = vadd.f32 %v5217, %v5218
        %v5220 = vrot.slane %v5219, 1
        %v5221 = vadd.f32 %v5219, %v5220
        %v5222 = vrot.slane %v4943, 4
        %v5223 = vadd.f32 %v4943, %v5222
        %v5224 = vrot.slane %v5223, 2
        %v5225 = vadd.f32 %v5223, %v5224
        %v5226 = vrot.slane %v5225, 1
        %v5227 = vadd.f32 %v5225, %v5226
        %v5228 = vrot.slane %v4944, 4
        %v5229 = vadd.f32 %v4944, %v5228
        %v5230 = vrot.slane %v5229, 2
        %v5231 = vadd.f32 %v5229, %v5230
        %v5232 = vrot.slane %v5231, 1
        %v5233 = vadd.f32 %v5231, %v5232
        %v5234 = vrot.slane %v4945, 4
        %v5235 = vadd.f32 %v4945, %v5234
        %v5236 = vrot.slane %v5235, 2
        %v5237 = vadd.f32 %v5235, %v5236
        %v5238 = vrot.slane %v5237, 1
        %v5239 = vadd.f32 %v5237, %v5238
        %v5240 = vrot.slane %v4946, 4
        %v5241 = vadd.f32 %v4946, %v5240
        %v5242 = vrot.slane %v5241, 2
        %v5243 = vadd.f32 %v5241, %v5242
        %v5244 = vrot.slane %v5243, 1
        %v5245 = vadd.f32 %v5243, %v5244
        %v5246 = vrot.slane %v4947, 4
        %v5247 = vadd.f32 %v4947, %v5246
        %v5248 = vrot.slane %v5247, 2
        %v5249 = vadd.f32 %v5247, %v5248
        %v5250 = vrot.slane %v5249, 1
        %v5251 = vadd.f32 %v5249, %v5250
        %v5252 = vrot.slane %v4948, 4
        %v5253 = vadd.f32 %v4948, %v5252
        %v5254 = vrot.slane %v5253, 2
        %v5255 = vadd.f32 %v5253, %v5254
        %v5256 = vrot.slane %v5255, 1
        %v5257 = vadd.f32 %v5255, %v5256
        %v5258 = vrot.slane %v4949, 4
        %v5259 = vadd.f32 %v4949, %v5258
        %v5260 = vrot.slane %v5259, 2
        %v5261 = vadd.f32 %v5259, %v5260
        %v5262 = vrot.slane %v5261, 1
        %v5263 = vadd.f32 %v5261, %v5262
        %v5264 = vrot.slane %v4950, 4
        %v5265 = vadd.f32 %v4950, %v5264
        %v5266 = vrot.slane %v5265, 2
        %v5267 = vadd.f32 %v5265, %v5266
        %v5268 = vrot.slane %v5267, 1
        %v5269 = vadd.f32 %v5267, %v5268
        %v5270 = vrot.slane %v4951, 4
        %v5271 = vadd.f32 %v4951, %v5270
        %v5272 = vrot.slane %v5271, 2
        %v5273 = vadd.f32 %v5271, %v5272
        %v5274 = vrot.slane %v5273, 1
        %v5275 = vadd.f32 %v5273, %v5274
        %v5276 = vrot.slane %v4952, 4
        %v5277 = vadd.f32 %v4952, %v5276
        %v5278 = vrot.slane %v5277, 2
        %v5279 = vadd.f32 %v5277, %v5278
        %v5280 = vrot.slane %v5279, 1
        %v5281 = vadd.f32 %v5279, %v5280
        %v5282 = vrot.slane %v4953, 4
        %v5283 = vadd.f32 %v4953, %v5282
        %v5284 = vrot.slane %v5283, 2
        %v5285 = vadd.f32 %v5283, %v5284
        %v5286 = vrot.slane %v5285, 1
        %v5287 = vadd.f32 %v5285, %v5286
        %v5288 = vrot.slane %v4954, 4
        %v5289 = vadd.f32 %v4954, %v5288
        %v5290 = vrot.slane %v5289, 2
        %v5291 = vadd.f32 %v5289, %v5290
        %v5292 = vrot.slane %v5291, 1
        %v5293 = vadd.f32 %v5291, %v5292
        %v5294 = vrot.slane %v4955, 4
        %v5295 = vadd.f32 %v4955, %v5294
        %v5296 = vrot.slane %v5295, 2
        %v5297 = vadd.f32 %v5295, %v5296
        %v5298 = vrot.slane %v5297, 1
        %v5299 = vadd.f32 %v5297, %v5298
        %v5300 = vrot.slane %v4956, 4
        %v5301 = vadd.f32 %v4956, %v5300
        %v5302 = vrot.slane %v5301, 2
        %v5303 = vadd.f32 %v5301, %v5302
        %v5304 = vrot.slane %v5303, 1
        %v5305 = vadd.f32 %v5303, %v5304
        %v5306 = vrot.slane %v4957, 4
        %v5307 = vadd.f32 %v4957, %v5306
        %v5308 = vrot.slane %v5307, 2
        %v5309 = vadd.f32 %v5307, %v5308
        %v5310 = vrot.slane %v5309, 1
        %v5311 = vadd.f32 %v5309, %v5310
        %v5312 = vrot.slane %v4958, 4
        %v5313 = vadd.f32 %v4958, %v5312
        %v5314 = vrot.slane %v5313, 2
        %v5315 = vadd.f32 %v5313, %v5314
        %v5316 = vrot.slane %v5315, 1
        %v5317 = vadd.f32 %v5315, %v5316
        %v5318 = vrot.slane %v4959, 4
        %v5319 = vadd.f32 %v4959, %v5318
        %v5320 = vrot.slane %v5319, 2
        %v5321 = vadd.f32 %v5319, %v5320
        %v5322 = vrot.slane %v5321, 1
        %v5323 = vadd.f32 %v5321, %v5322
        %v5324 = vrot.slane %v4960, 4
        %v5325 = vadd.f32 %v4960, %v5324
        %v5326 = vrot.slane %v5325, 2
        %v5327 = vadd.f32 %v5325, %v5326
        %v5328 = vrot.slane %v5327, 1
        %v5329 = vadd.f32 %v5327, %v5328
        %v5330 = vrot.slane %v4961, 4
        %v5331 = vadd.f32 %v4961, %v5330
        %v5332 = vrot.slane %v5331, 2
        %v5333 = vadd.f32 %v5331, %v5332
        %v5334 = vrot.slane %v5333, 1
        %v5335 = vadd.f32 %v5333, %v5334
        %v5336 = vrot.slane %v4962, 4
        %v5337 = vadd.f32 %v4962, %v5336
        %v5338 = vrot.slane %v5337, 2
        %v5339 = vadd.f32 %v5337, %v5338
        %v5340 = vrot.slane %v5339, 1
        %v5341 = vadd.f32 %v5339, %v5340
        %v5342 = vrot.slane %v4963, 4
        %v5343 = vadd.f32 %v4963, %v5342
        %v5344 = vrot.slane %v5343, 2
        %v5345 = vadd.f32 %v5343, %v5344
        %v5346 = vrot.slane %v5345, 1
        %v5347 = vadd.f32 %v5345, %v5346
        %v5348 = vmul.f32 %v4969, 0.125
        %v5349 = vmul.f32 %v4975, 0.125
        %v5350 = vmul.f32 %v4981, 0.125
        %v5351 = vmul.f32 %v4987, 0.125
        %v5352 = vmul.f32 %v4993, 0.125
        %v5353 = vmul.f32 %v4999, 0.125
        %v5354 = vmul.f32 %v5005, 0.125
        %v5355 = vmul.f32 %v5011, 0.125
        %v5356 = vmul.f32 %v5017, 0.125
        %v5357 = vmul.f32 %v5023, 0.125
        %v5358 = vmul.f32 %v5029, 0.125
        %v5359 = vmul.f32 %v5035, 0.125
        %v5360 = vmul.f32 %v5041, 0.125
        %v5361 = vmul.f32 %v5047, 0.125
        %v5362 = vmul.f32 %v5053, 0.125
        %v5363 = vmul.f32 %v5059, 0.125
        %v5364 = vmul.f32 %v5065, 0.125
        %v5365 = vmul.f32 %v5071, 0.125
        %v5366 = vmul.f32 %v5077, 0.125
        %v5367 = vmul.f32 %v5083, 0.125
        %v5368 = vmul.f32 %v5089, 0.125
        %v5369 = vmul.f32 %v5095, 0.125
        %v5370 = vmul.f32 %v5101, 0.125
        %v5371 = vmul.f32 %v5107, 0.125
        %v5372 = vmul.f32 %v5113, 0.125
        %v5373 = vmul.f32 %v5119, 0.125
        %v5374 = vmul.f32 %v5125, 0.125
        %v5375 = vmul.f32 %v5131, 0.125
        %v5376 = vmul.f32 %v5137, 0.125
        %v5377 = vmul.f32 %v5143, 0.125
        %v5378 = vmul.f32 %v5149, 0.125
        %v5379 = vmul.f32 %v5155, 0.125
        %v5380 = vmul.f32 %v5161, 0.125
        %v5381 = vmul.f32 %v5167, 0.125
        %v5382 = vmul.f32 %v5173, 0.125
        %v5383 = vmul.f32 %v5179, 0.125
        %v5384 = vmul.f32 %v5185, 0.125
        %v5385 = vmul.f32 %v5191, 0.125
        %v5386 = vmul.f32 %v5197, 0.125
        %v5387 = vmul.f32 %v5203, 0.125
        %v5388 = vmul.f32 %v5209, 0.125
        %v5389 = vmul.f32 %v5215, 0.125
        %v5390 = vmul.f32 %v5221, 0.125
        %v5391 = vmul.f32 %v5227, 0.125
        %v5392 = vmul.f32 %v5233, 0.125
        %v5393 = vmul.f32 %v5239, 0.125
        %v5394 = vmul.f32 %v5245, 0.125
        %v5395 = vmul.f32 %v5251, 0.125
        %v5396 = vmul.f32 %v5257, 0.125
        %v5397 = vmul.f32 %v5263, 0.125
        %v5398 = vmul.f32 %v5269, 0.125
        %v5399 = vmul.f32 %v5275, 0.125
        %v5400 = vmul.f32 %v5281, 0.125
        %v5401 = vmul.f32 %v5287, 0.125
        %v5402 = vmul.f32 %v5293, 0.125
        %v5403 = vmul.f32 %v5299, 0.125
        %v5404 = vmul.f32 %v5305, 0.125
        %v5405 = vmul.f32 %v5311, 0.125
        %v5406 = vmul.f32 %v5317, 0.125
        %v5407 = vmul.f32 %v5323, 0.125
        %v5408 = vmul.f32 %v5329, 0.125
        %v5409 = vmul.f32 %v5335, 0.125
        %v5410 = vmul.f32 %v5341, 0.125
        %v5411 = vmul.f32 %v5347, 0.125
        %v5412 = vpack.c.bf16 %v5348, %v5348
        %v5413 = vpack.c.bf16 %v5349, %v5349
        %v5414 = vpack.c.bf16 %v5350, %v5350
        %v5415 = vpack.c.bf16 %v5351, %v5351
        %v5416 = vpack.c.bf16 %v5352, %v5352
        %v5417 = vpack.c.bf16 %v5353, %v5353
        %v5418 = vpack.c.bf16 %v5354, %v5354
        %v5419 = vpack.c.bf16 %v5355, %v5355
        %v5420 = vpack.c.bf16 %v5356, %v5356
        %v5421 = vpack.c.bf16 %v5357, %v5357
        %v5422 = vpack.c.bf16 %v5358, %v5358
        %v5423 = vpack.c.bf16 %v5359, %v5359
        %v5424 = vpack.c.bf16 %v5360, %v5360
        %v5425 = vpack.c.bf16 %v5361, %v5361
        %v5426 = vpack.c.bf16 %v5362, %v5362
        %v5427 = vpack.c.bf16 %v5363, %v5363
        %v5428 = vpack.c.bf16 %v5364, %v5364
        %v5429 = vpack.c.bf16 %v5365, %v5365
        %v5430 = vpack.c.bf16 %v5366, %v5366
        %v5431 = vpack.c.bf16 %v5367, %v5367
        %v5432 = vpack.c.bf16 %v5368, %v5368
        %v5433 = vpack.c.bf16 %v5369, %v5369
        %v5434 = vpack.c.bf16 %v5370, %v5370
        %v5435 = vpack.c.bf16 %v5371, %v5371
        %v5436 = vpack.c.bf16 %v5372, %v5372
        %v5437 = vpack.c.bf16 %v5373, %v5373
        %v5438 = vpack.c.bf16 %v5374, %v5374
        %v5439 = vpack.c.bf16 %v5375, %v5375
        %v5440 = vpack.c.bf16 %v5376, %v5376
        %v5441 = vpack.c.bf16 %v5377, %v5377
        %v5442 = vpack.c.bf16 %v5378, %v5378
        %v5443 = vpack.c.bf16 %v5379, %v5379
        %v5444 = vpack.c.bf16 %v5380, %v5380
        %v5445 = vpack.c.bf16 %v5381, %v5381
        %v5446 = vpack.c.bf16 %v5382, %v5382
        %v5447 = vpack.c.bf16 %v5383, %v5383
        %v5448 = vpack.c.bf16 %v5384, %v5384
        %v5449 = vpack.c.bf16 %v5385, %v5385
        %v5450 = vpack.c.bf16 %v5386, %v5386
        %v5451 = vpack.c.bf16 %v5387, %v5387
        %v5452 = vpack.c.bf16 %v5388, %v5388
        %v5453 = vpack.c.bf16 %v5389, %v5389
        %v5454 = vpack.c.bf16 %v5390, %v5390
        %v5455 = vpack.c.bf16 %v5391, %v5391
        %v5456 = vpack.c.bf16 %v5392, %v5392
        %v5457 = vpack.c.bf16 %v5393, %v5393
        %v5458 = vpack.c.bf16 %v5394, %v5394
        %v5459 = vpack.c.bf16 %v5395, %v5395
        %v5460 = vpack.c.bf16 %v5396, %v5396
        %v5461 = vpack.c.bf16 %v5397, %v5397
        %v5462 = vpack.c.bf16 %v5398, %v5398
        %v5463 = vpack.c.bf16 %v5399, %v5399
        %v5464 = vpack.c.bf16 %v5400, %v5400
        %v5465 = vpack.c.bf16 %v5401, %v5401
        %v5466 = vpack.c.bf16 %v5402, %v5402
        %v5467 = vpack.c.bf16 %v5403, %v5403
        %v5468 = vpack.c.bf16 %v5404, %v5404
        %v5469 = vpack.c.bf16 %v5405, %v5405
        %v5470 = vpack.c.bf16 %v5406, %v5406
        %v5471 = vpack.c.bf16 %v5407, %v5407
        %v5472 = vpack.c.bf16 %v5408, %v5408
        %v5473 = vpack.c.bf16 %v5409, %v5409
        %v5474 = vpack.c.bf16 %v5410, %v5410
        %v5475 = vpack.c.bf16 %v5411, %v5411
        %v5476 = vperm.slane %v297, 0
        %v5541 = vunpack.c.l.b16 %v5412
        %v5542 = vunpack.c.l.b16 %v5413
        %v5543 = vunpack.c.l.b16 %v5414
        %v5544 = vunpack.c.l.b16 %v5415
        %v5545 = vunpack.c.l.b16 %v5416
        %v5546 = vunpack.c.l.b16 %v5417
        %v5547 = vunpack.c.l.b16 %v5418
        %v5548 = vunpack.c.l.b16 %v5419
        %v5549 = vunpack.c.l.b16 %v5420
        %v5550 = vunpack.c.l.b16 %v5421
        %v5551 = vunpack.c.l.b16 %v5422
        %v5552 = vunpack.c.l.b16 %v5423
        %v5553 = vunpack.c.l.b16 %v5424
        %v5554 = vunpack.c.l.b16 %v5425
        %v5555 = vunpack.c.l.b16 %v5426
        %v5556 = vunpack.c.l.b16 %v5427
        %v5557 = vunpack.c.l.b16 %v5428
        %v5558 = vunpack.c.l.b16 %v5429
        %v5559 = vunpack.c.l.b16 %v5430
        %v5560 = vunpack.c.l.b16 %v5431
        %v5561 = vunpack.c.l.b16 %v5432
        %v5562 = vunpack.c.l.b16 %v5433
        %v5563 = vunpack.c.l.b16 %v5434
        %v5564 = vunpack.c.l.b16 %v5435
        %v5565 = vunpack.c.l.b16 %v5436
        %v5566 = vunpack.c.l.b16 %v5437
        %v5567 = vunpack.c.l.b16 %v5438
        %v5568 = vunpack.c.l.b16 %v5439
        %v5569 = vunpack.c.l.b16 %v5440
        %v5570 = vunpack.c.l.b16 %v5441
        %v5571 = vunpack.c.l.b16 %v5442
        %v5572 = vunpack.c.l.b16 %v5443
        %v5573 = vunpack.c.l.b16 %v5444
        %v5574 = vunpack.c.l.b16 %v5445
        %v5575 = vunpack.c.l.b16 %v5446
        %v5576 = vunpack.c.l.b16 %v5447
        %v5577 = vunpack.c.l.b16 %v5448
        %v5578 = vunpack.c.l.b16 %v5449
        %v5579 = vunpack.c.l.b16 %v5450
        %v5580 = vunpack.c.l.b16 %v5451
        %v5581 = vunpack.c.l.b16 %v5452
        %v5582 = vunpack.c.l.b16 %v5453
        %v5583 = vunpack.c.l.b16 %v5454
        %v5584 = vunpack.c.l.b16 %v5455
        %v5585 = vunpack.c.l.b16 %v5456
        %v5586 = vunpack.c.l.b16 %v5457
        %v5587 = vunpack.c.l.b16 %v5458
        %v5588 = vunpack.c.l.b16 %v5459
        %v5589 = vunpack.c.l.b16 %v5460
        %v5590 = vunpack.c.l.b16 %v5461
        %v5591 = vunpack.c.l.b16 %v5462
        %v5592 = vunpack.c.l.b16 %v5463
        %v5593 = vunpack.c.l.b16 %v5464
        %v5594 = vunpack.c.l.b16 %v5465
        %v5595 = vunpack.c.l.b16 %v5466
        %v5596 = vunpack.c.l.b16 %v5467
        %v5597 = vunpack.c.l.b16 %v5468
        %v5598 = vunpack.c.l.b16 %v5469
        %v5599 = vunpack.c.l.b16 %v5470
        %v5600 = vunpack.c.l.b16 %v5471
        %v5601 = vunpack.c.l.b16 %v5472
        %v5602 = vunpack.c.l.b16 %v5473
        %v5603 = vunpack.c.l.b16 %v5474
        %v5604 = vunpack.c.l.b16 %v5475
        %vm5605 = vcmask 1041409
        %v5606 = vsel %vm5605, %v5542, %v5541
        %vm5607 = vcmask 1042434
        %v5608 = vsel %vm5607, %v5543, %v5606
        %vm5609 = vcmask 1043459
        %v5610 = vsel %vm5609, %v5544, %v5608
        %vm5611 = vcmask 1044484
        %v5612 = vsel %vm5611, %v5545, %v5610
        %vm5613 = vcmask 1045509
        %v5614 = vsel %vm5613, %v5546, %v5612
        %vm5615 = vcmask 1046534
        %v5616 = vsel %vm5615, %v5547, %v5614
        %vm5617 = vcmask 1047559
        %v5618 = vsel %vm5617, %v5548, %v5616
        %v5619 = vsel %vm5605, %v5550, %v5549
        %v5620 = vsel %vm5607, %v5551, %v5619
        %v5621 = vsel %vm5609, %v5552, %v5620
        %v5622 = vsel %vm5611, %v5553, %v5621
        %v5623 = vsel %vm5613, %v5554, %v5622
        %v5624 = vsel %vm5615, %v5555, %v5623
        %v5625 = vsel %vm5617, %v5556, %v5624
        %v5626 = vsel %vm5605, %v5558, %v5557
        %v5627 = vsel %vm5607, %v5559, %v5626
        %v5628 = vsel %vm5609, %v5560, %v5627
        %v5629 = vsel %vm5611, %v5561, %v5628
        %v5630 = vsel %vm5613, %v5562, %v5629
        %v5631 = vsel %vm5615, %v5563, %v5630
        %v5632 = vsel %vm5617, %v5564, %v5631
        %v5633 = vsel %vm5605, %v5566, %v5565
        %v5634 = vsel %vm5607, %v5567, %v5633
        %v5635 = vsel %vm5609, %v5568, %v5634
        %v5636 = vsel %vm5611, %v5569, %v5635
        %v5637 = vsel %vm5613, %v5570, %v5636
        %v5638 = vsel %vm5615, %v5571, %v5637
        %v5639 = vsel %vm5617, %v5572, %v5638
        %v5640 = vsel %vm5605, %v5574, %v5573
        %v5641 = vsel %vm5607, %v5575, %v5640
        %v5642 = vsel %vm5609, %v5576, %v5641
        %v5643 = vsel %vm5611, %v5577, %v5642
        %v5644 = vsel %vm5613, %v5578, %v5643
        %v5645 = vsel %vm5615, %v5579, %v5644
        %v5646 = vsel %vm5617, %v5580, %v5645
        %v5647 = vsel %vm5605, %v5582, %v5581
        %v5648 = vsel %vm5607, %v5583, %v5647
        %v5649 = vsel %vm5609, %v5584, %v5648
        %v5650 = vsel %vm5611, %v5585, %v5649
        %v5651 = vsel %vm5613, %v5586, %v5650
        %v5652 = vsel %vm5615, %v5587, %v5651
        %v5653 = vsel %vm5617, %v5588, %v5652
        %v5654 = vsel %vm5605, %v5590, %v5589
        %v5655 = vsel %vm5607, %v5591, %v5654
        %v5656 = vsel %vm5609, %v5592, %v5655
        %v5657 = vsel %vm5611, %v5593, %v5656
        %v5658 = vsel %vm5613, %v5594, %v5657
        %v5659 = vsel %vm5615, %v5595, %v5658
        %v5660 = vsel %vm5617, %v5596, %v5659
        %v5661 = vsel %vm5605, %v5598, %v5597
        %v5662 = vsel %vm5607, %v5599, %v5661
        %v5663 = vsel %vm5609, %v5600, %v5662
        %v5664 = vsel %vm5611, %v5601, %v5663
        %v5665 = vsel %vm5613, %v5602, %v5664
        %v5666 = vsel %vm5615, %v5603, %v5665
        %v5667 = vsel %vm5617, %v5604, %v5666
        %v5668 = vpack.c.b16 %v5625, %v5618
        %v5669 = vpack.c.b16 %v5639, %v5632
        %v5670 = vpack.c.b16 %v5653, %v5646
        %v5671 = vpack.c.b16 %v5667, %v5660
        %v5692 = vunpack.c.l.b16 %v278
        %v5693 = vunpack.c.l.b16 %v279
        %v5694 = vunpack.c.l.b16 %v280
        %v5695 = vunpack.c.l.b16 %v281
        %v5696 = vunpack.c.l.b16 %v282
        %v5697 = vunpack.c.l.b16 %v283
        %v5698 = vunpack.c.l.b16 %v284
        %v5699 = vunpack.c.l.b16 %v285
        %v5700 = vunpack.c.l.b16 %v286
        %v5701 = vunpack.c.l.b16 %v287
        %v5702 = vunpack.c.l.b16 %v288
        %v5703 = vunpack.c.l.b16 %v289
        %v5704 = vunpack.c.l.b16 %v290
        %v5705 = vunpack.c.l.b16 %v291
        %v5706 = vunpack.c.l.b16 %v292
        %v5707 = vunpack.c.l.b16 %v293
        %v5708 = vpack.c.b16 %v5693, %v5692
        %v5709 = vpack.c.b16 %v5695, %v5694
        %v5710 = vpack.c.b16 %v5697, %v5696
        %v5711 = vpack.c.b16 %v5699, %v5698
        %v5712 = vpack.c.b16 %v5701, %v5700
        %v5713 = vpack.c.b16 %v5703, %v5702
        %v5714 = vpack.c.b16 %v5705, %v5704
        %v5715 = vpack.c.b16 %v5707, %v5706
        %5724 = vmatpush.bf16.msra.mxu0 %v5715
        %5725 = vmatpush.bf16.msra.mxu0 %v5714
        %5726 = vmatpush.bf16.msra.mxu0 %v5713
        %5727 = vmatpush.bf16.msra.mxu0 %v5712
        %5728 = vmatpush.bf16.msra.mxu0 %v5711
        %5729 = vmatpush.bf16.msra.mxu0 %v5710
        %5730 = vmatpush.bf16.msra.mxu0 %v5709
        %5731 = vmatpush.bf16.msra.mxu0 %v5708
        %5732 = vmatmul.bf16.gmra.mxu0 %v5668
        %v5733 = vpop.f32.mrf.mxu0
        %v5734 = vadd.f32 %v5476, %v5733
        %v5735 = vpop.f32.mrf.mxu0
        %v5736 = vadd.f32 %v5476, %v5735
        %5737 = vmatmul.bf16.gmra.mxu0 %v5669
        %v5738 = vpop.f32.mrf.mxu0
        %v5739 = vadd.f32 %v5476, %v5738
        %v5740 = vpop.f32.mrf.mxu0
        %v5741 = vadd.f32 %v5476, %v5740
        %5742 = vmatmul.bf16.gmra.mxu0 %v5670
        %v5743 = vpop.f32.mrf.mxu0
        %v5744 = vadd.f32 %v5476, %v5743
        %v5745 = vpop.f32.mrf.mxu0
        %v5746 = vadd.f32 %v5476, %v5745
        %5747 = vmatmul.bf16.gmra.mxu0 %v5671
        %v5748 = vpop.f32.mrf.mxu0
        %v5749 = vadd.f32 %v5476, %v5748
        %v5750 = vpop.f32.mrf.mxu0
        %v5751 = vadd.f32 %v5476, %v5750
        %5752 = vdwg.mxu0
        %v5753 = vpack.c.bf16 %v5734, %v5734
        %v5754 = vpack.c.bf16 %v5736, %v5736
        %v5755 = vpack.c.bf16 %v5739, %v5739
        %v5756 = vpack.c.bf16 %v5741, %v5741
        %v5757 = vpack.c.bf16 %v5744, %v5744
        %v5758 = vpack.c.bf16 %v5746, %v5746
        %v5759 = vpack.c.bf16 %v5749, %v5749
        %v5760 = vpack.c.bf16 %v5751, %v5751
        %5761 = vst [vmem:[%s226] sm:$0xf] %v5753
        %5762 = vst [vmem:[%s226 + $0x4] sm:$0xf] %v5754
        %5763 = vst [vmem:[%s226 + $0x8] sm:$0xf] %v5755
        %5764 = vst [vmem:[%s226 + $0xc] sm:$0xf] %v5756
        %5765 = vst [vmem:[%s226 + $0x10] sm:$0xf] %v5757
        %5766 = vst [vmem:[%s226 + $0x14] sm:$0xf] %v5758
        %5767 = vst [vmem:[%s226 + $0x18] sm:$0xf] %v5759
        %5768 = vst [vmem:[%s226 + $0x1c] sm:$0xf] %v5760
        %s5769 = sand.u32 %s121, 1
        %s5770 = scalar_lea.sflag [#allocation6], %s5769
        %s5771 = sand.u32 %s121, 1
        %s5772 = smul.addr %s5771, 32
        %s5773 = scalar_lea.vmem [#allocation7], %s5772
        // Predicated region
        $region41: #{tpu_custom_call.1} parent=35 // pred_check
          %p5774 = pneg %p131
        $region42: #{tpu_custom_call.1} parent=35 // pred_check_branch
          %5776 = sbr.rel (%p5774) target = $region44
        $region43: #{tpu_custom_call.1} parent=35 // pred_region
          %s5777 = smul.u32 8, %s19
          %5779 = vsyncadd %s5770, 0
          %s5780 = smul.addr %s5777, 4
          %s5781 = scalar_lea.hbm %s4, %s5780
          %s5782 = sshll.u32 %s5773, 4
          %s5783 = int_to_ptr.vmem [resolvable:$true] %s5782
          %s5784 = sshll.u32 %s5781, 4
          %s5785 = int_to_ptr.hbm [resolvable:$true] %s5784
          %5790 = dma.vmem_to_hbm [thread:$0]  %s5783, 512, %s5785, %s5770, 64, 64, 4
        $region44: #{tpu_custom_call.1} parent=35 // pred_fallthru
          _
      $region36: #{tpu_custom_call.1} parent=5 // pred_fallthru
        _
      %p5791 = scmp.le.s32.totalorder 2, %s14
      // Predicated region
      $region45: #{tpu_custom_call.1} parent=5 // pred_check
        %p5792 = pneg %p5791
      $region46: #{tpu_custom_call.1} parent=5 // pred_check_branch
        %5794 = sbr.rel (%p5792) target = $region48
      $region47: #{tpu_custom_call.1} parent=5 // pred_region
        %s5795 = ssub.s32 %s14, 2
        // Predicated region
        $region49: #{tpu_custom_call.1} parent=47 // pred_check
          %p5796 = pneg %p137
        $region50: #{tpu_custom_call.1} parent=47 // pred_check_branch
          %5798 = sbr.rel (%p5796) target = $region52
        $region51: #{tpu_custom_call.1} parent=47 // pred_region
          %s5799 = sand.u32 %s122, 1
          %s5800 = scalar_lea.sflag [#allocation6], %s5799
          %s5801 = sand.u32 %s122, 1
          %s5802 = smul.addr %s5801, 32
          %s5803 = scalar_lea.vmem [#allocation7], %s5802
          %5805 = dma.done %s5800, 512
        $region52: #{tpu_custom_call.1} parent=47 // pred_fallthru
          _
      $region48: #{tpu_custom_call.1} parent=5 // pred_fallthru
        _
    $region6: #{tpu_custom_call.1} parent=1 // loop_footer
      %s18 = sadd.s32 1, %s14
    $region7: #{tpu_custom_call.1} parent=1 // loop_footer_branch
      %13 = sbr.rel target = $region3
    $region8: #{tpu_custom_call.1} parent=1 // loop_exit
      _
    %5806 = vsyncpa [#allocation5], 1
    %s5807 = scalar_lea.sflag [#allocation5], 1
    %5808 = vsyncpa %s5807, 1
    %5809 = vsyncpa [#allocation6], 1
    %s5810 = scalar_lea.sflag [#allocation6], 1
    %5811 = vsyncpa %s5810, 1

</llo_original>
